<compile_context>
chip_gen: v5e
topology: v5e:2x2
jax: 0.10.0
libtpu: 0.0.40
codegen_flags: <defaults>
</compile_context>

<pallas_src>
import jax
import jax.numpy as jnp
from jax.experimental import pallas as pl
from jax.experimental.pallas import tpu as pltpu

# ---- static model / problem configuration (small shapes) --------------------
B = 2            # batch (EEG windows per call; kernel scales to any B via grid)
CHANS = 4        # EEG channels
SAMPLES = 64     # time samples (must be divisible by 32)
NCLASS = 3       # n_classes
KERN = 64        # kernLenght
F1 = 4
D = 2
F2 = 8
F1D = F1 * D
S4 = SAMPLES // 4
S32 = SAMPLES // 32
BN_EPS = 1e-5

NPAD = 128                   # lane-padded logits width (unmasked stores)
K1 = CHANS * SAMPLES         # 256
N1 = F1D * SAMPLES           # 512
N2 = F2 * S4                 # 128
HIGH = jax.lax.Precision.HIGHEST   # only used for trace-time matrix folding


# ---- per-generation tuning ---------------------------------------------------
def _device_kind():
    try:
        return jax.devices()[0].device_kind.lower()
    except Exception:
        return ""


_KIND = _device_kind()
_IS_V5 = "v5" in _KIND                            # 128x128 MXU tiles, no bf16 VPU
_IS_2TC = ("v7" in _KIND) or ("tpu7" in _KIND)    # two TensorCores per chip

TB = 128 if _IS_V5 else 256          # batch rows per grid step (fills MXU LHS)
MIN_STEPS = 2 if _IS_2TC else 1      # >=2 parallel steps to engage both v7x TCs
WGT_DT = jnp.float32 if _IS_V5 else jnp.bfloat16  # folded-weight / activation dtype


# =============================== Pallas kernel ===============================
def _elu(v):
    # Clamp the exp argument so the discarded branch can never produce inf.
    return jnp.where(v > 0, v, jnp.exp(jnp.minimum(v, 0.0)) - 1.0)


def _eegnet_kernel(x_ref, m1_ref, b1_ref, m2_ref, b2_ref, m3_ref, b3_ref,
                   out_ref):
    # block1: temporal conv + BN1 + depthwise chan conv + BN2 (one matmul), ELU
    z = jnp.dot(x_ref[...], m1_ref[...],
                preferred_element_type=jnp.float32) + b1_ref[...]
    z = _elu(z).astype(m2_ref.dtype)          # bf16 feed to MXU (f32 on v5*)
    # block2: AvgPool4 + depthwise temporal conv + 1x1 pointwise + BN3, ELU
    a = jnp.dot(z, m2_ref[...],
                preferred_element_type=jnp.float32) + b2_ref[...]
    a = _elu(a).astype(m3_ref.dtype)
    # AvgPool8 + flatten + Linear classifier (lane-padded to NPAD columns)
    out_ref[...] = jnp.dot(a, m3_ref[...],
                           preferred_element_type=jnp.float32) + b3_ref[...]


# ================================ glue helpers ===============================
def _toeplitz(w, out_len, pad_left):
    """w: (nf, ntaps) -> (nf, out_len, out_len) with T[f][s,t] = w[f, s-t+pad_left]."""
    ntaps = w.shape[1]
    s = jnp.arange(out_len)[:, None]
    t = jnp.arange(out_len)[None, :]
    kk = s - t + pad_left
    valid = (kk >= 0) & (kk < ntaps)
    T = jnp.where(valid[None, :, :], w[:, jnp.clip(kk, 0, ntaps - 1)], 0.0)
    return T.astype(jnp.float32)


def _pool_matrix(n, w):
    r = jnp.arange(n)[:, None]
    c = jnp.arange(n // w)[None, :]
    return ((r // w) == c).astype(jnp.float32) / float(w)


def _fold_bn(gamma, beta, mean, var):
    scale = gamma / jnp.sqrt(var + BN_EPS)
    shift = beta - mean * scale
    return scale.astype(jnp.float32), shift.astype(jnp.float32)


def _build_folded_mats(params):
    """Fold all linear stages between nonlinearities into 3 dense matrices."""
    bn1s, bn1b = _fold_bn(*params["bn1"])
    bn2s, bn2b = _fold_bn(*params["bn2"])
    bn3s, bn3b = _fold_bn(*params["bn3"])
    fmap = jnp.arange(F1D) // D                               # group of each o

    # ---- M1: temporal Toeplitz (BN1-scaled) x depthwise chan mix (BN2-scaled)
    T1 = _toeplitz(params["w1"], SAMPLES, KERN // 2 - 1) * bn1s[:, None, None]
    w2p = params["w2"] * bn2s[:, None]                        # (F1D, CHANS)
    # M1[c*S+s, o*S+t] = w2p[o,c] * T1[f(o)][s,t]
    M1 = jnp.einsum("oc,ost->csot", w2p, T1[fmap]).reshape(K1, N1)
    bias1 = bn1b[fmap] * jnp.sum(w2p, axis=1) + bn2b          # (F1D,)
    b1 = jnp.broadcast_to(bias1[:, None], (F1D, SAMPLES)).reshape(1, N1)

    # ---- M2: AvgPool4 @ depthwise temporal conv(16), then pointwise (BN3-scaled)
    T3 = _toeplitz(params["w3"], S4, 7)                       # (F1D, S4, S4)
    P1 = _pool_matrix(SAMPLES, 4)                             # (SAMPLES, S4)
    Q = jnp.einsum("sv,ovu->osu", P1, T3, precision=HIGH)     # (F1D, SAMPLES, S4)
    w4p = params["w4"] * bn3s[:, None]                        # (F2, F1D)
    # M2[o*S+s, j*S4+u] = w4p[j,o] * Q[o][s,u]
    M2 = jnp.einsum("jo,osu->osju", w4p, Q).reshape(N1, N2)
    b2 = jnp.broadcast_to(bn3b[:, None], (F2, S4)).reshape(1, N2)

    # ---- M3: AvgPool8 @ flatten @ Linear, lane-padded to NPAD
    P2 = _pool_matrix(S4, 8)                                  # (S4, S32)
    wfc3 = params["wfc"].reshape(NCLASS, F2, S32)
    R = jnp.einsum("uw,njw->jun", P2, wfc3, precision=HIGH)   # (F2, S4, NCLASS)
    M3 = jnp.zeros((N2, NPAD), jnp.float32).at[:, :NCLASS].set(
        R.reshape(N2, NCLASS))
    b3 = jnp.zeros((1, NPAD), jnp.float32).at[0, :NCLASS].set(
        params["bfc"].astype(jnp.float32))
    return (M1.astype(jnp.float32), b1.astype(jnp.float32),
            M2.astype(jnp.float32), b2.astype(jnp.float32), M3, b3)


def fold_params(params):
    """Build folded weights once; keep them device-resident across calls.

    Matrices are stored in WGT_DT (bf16 on v6e/v7x) to halve the per-call
    weight DMA; biases stay f32 (added after f32 accumulation).
    """
    M1, b1, M2, b2, M3, b3 = _build_folded_mats(params)
    return (M1.astype(WGT_DT), b1, M2.astype(WGT_DT), b2, M3.astype(WGT_DT), b3)


def eegnet_forward(x, folded):
    """x: (B, CHANS, SAMPLES, 1) -- same input layout as the PyTorch module."""
    M1, b1, M2, b2, M3, b3 = folded
    n = x.shape[0]

    # rows = batch, lanes = (channel, time) flattened -> lane-dense layout
    X = x[..., 0].reshape(n, K1).astype(M1.dtype)
    steps = max(MIN_STEPS, -(-n // TB))       # >=2 steps on 2-TC chips
    Bp = steps * TB
    X = jnp.pad(X, ((0, Bp - n), (0, 0)))

    out = pl.pallas_call(
        _eegnet_kernel,
        out_shape=jax.ShapeDtypeStruct((Bp, NPAD), jnp.float32),
        grid=(steps,),
        in_specs=[
            pl.BlockSpec((TB, K1), lambda i: (i, 0)),    # activations: tiled rows
            pl.BlockSpec((K1, N1), lambda i: (0, 0)),    # folded block1 matrix
            pl.BlockSpec((1, N1), lambda i: (0, 0)),
            pl.BlockSpec((N1, N2), lambda i: (0, 0)),    # folded block2 matrix
            pl.BlockSpec((1, N2), lambda i: (0, 0)),
            pl.BlockSpec((N2, NPAD), lambda i: (0, 0)),  # folded classifier
            pl.BlockSpec((1, NPAD), lambda i: (0, 0)),
        ],
        out_specs=pl.BlockSpec((TB, NPAD), lambda i: (i, 0)),
        compiler_params=pltpu.CompilerParams(
            dimension_semantics=("parallel",)),
    )(X, M1, b1, M2, b2, M3, b3)
    return out[:n, :NCLASS]


# ============================== pure-JAX reference ===========================
def eegnet_reference(x, params):
    bn1s, bn1b = _fold_bn(*params["bn1"])
    bn2s, bn2b = _fold_bn(*params["bn2"])
    bn3s, bn3b = _fold_bn(*params["bn3"])
    w1, w2, w3, w4 = params["w1"], params["w2"], params["w3"], params["w4"]

    v = jnp.transpose(x, (0, 3, 1, 2))[:, 0]                            # (B,C,S)
    vpad = jnp.pad(v, ((0, 0), (0, 0), (KERN // 2 - 1, KERN - KERN // 2)))
    y = jnp.stack([sum(w1[f, k] * vpad[:, :, k:k + SAMPLES] for k in range(KERN))
                   for f in range(F1)], axis=1)                         # (B,F1,C,S)
    y = y * bn1s[None, :, None, None] + bn1b[None, :, None, None]
    z = jnp.stack([sum(w2[o, c] * y[:, o // D, c, :] for c in range(CHANS))
                   for o in range(F1D)], axis=1)                        # (B,F1D,S)
    z = z * bn2s[None, :, None] + bn2b[None, :, None]
    z = jnp.where(z > 0, z, jnp.exp(z) - 1.0)
    z = z.reshape(B, F1D, S4, 4).mean(-1)                               # (B,F1D,S4)
    zp = jnp.pad(z, ((0, 0), (0, 0), (7, 8)))
    c2 = jnp.stack([sum(w3[o, k] * zp[:, o, k:k + S4] for k in range(16))
                    for o in range(F1D)], axis=1)                       # (B,F1D,S4)
    e = jnp.einsum("jo,bot->bjt", w4, c2, precision=HIGH)
    e = e * bn3s[None, :, None] + bn3b[None, :, None]
    e = jnp.where(e > 0, e, jnp.exp(e) - 1.0)
    d = e.reshape(B, F2, S32, 8).mean(-1)                               # (B,F2,S32)
    feat = d.reshape(B, F2 * S32)
    return jnp.dot(feat, params["wfc"].T, precision=HIGH) + params["bfc"][None, :]


# ================================== main =====================================
def init_params(key):
    ks = jax.random.split(key, 9)

    def bn(k, n):
        k1, k2, k3, k4 = jax.random.split(k, 4)
        gamma = (1.0 + 0.1 * jax.random.normal(k1, (n,))).astype(jnp.float32)
        beta = (0.1 * jax.random.normal(k2, (n,))).astype(jnp.float32)
        mean = (0.1 * jax.random.normal(k3, (n,))).astype(jnp.float32)
        var = jax.random.uniform(k4, (n,), minval=0.5, maxval=1.5).astype(jnp.float32)
        return (gamma, beta, mean, var)

    return {
        "w1": (0.1 * jax.random.normal(ks[0], (F1, KERN))).astype(jnp.float32),
        "bn1": bn(ks[1], F1),
        "w2": (0.3 * jax.random.normal(ks[2], (F1D, CHANS))).astype(jnp.float32),
        "bn2": bn(ks[3], F1D),
        "w3": (0.3 * jax.random.normal(ks[4], (F1D, 16))).astype(jnp.float32),
        "w4": (0.3 * jax.random.normal(ks[5], (F2, F1D))).astype(jnp.float32),
        "bn3": bn(ks[6], F2),
        "wfc": (0.3 * jax.random.normal(ks[7], (NCLASS, F2 * S32))).astype(jnp.float32),
        "bfc": (0.1 * jax.random.normal(ks[8], (NCLASS,))).astype(jnp.float32),
    }


if __name__ == "__main__":
    key = jax.random.PRNGKey(0)
    kx, kp = jax.random.split(key)
    x = jax.random.normal(kx, (B, CHANS, SAMPLES, 1), dtype=jnp.float32)
    params = init_params(kp)

    folded = fold_params(params)          # fold once, keep device-resident
    out = eegnet_forward(x, folded)
    out = jax.block_until_ready(out)

    ref = eegnet_reference(x, params)
    assert out.shape == (B, NCLASS)
    assert bool(jnp.all(jnp.isfinite(out)))
    if not bool(jnp.allclose(out, ref, atol=2e-2, rtol=2e-2)):
        raise AssertionError(f"Pallas/reference mismatch:\n{out}\n{ref}")
    print("KERNEL_OK")
</pallas_src>

<mosaic_0001>
module attributes {stable_mosaic.version = 11 : i64} {
  func.func @_eegnet_kernel(%arg0: i32, %arg1: memref<256x256xbf16, #tpu.memory_space<vmem>>, %arg2: memref<256x512xbf16, #tpu.memory_space<vmem>>, %arg3: memref<1x512xf32, #tpu.memory_space<vmem>>, %arg4: memref<512x128xbf16, #tpu.memory_space<vmem>>, %arg5: memref<1x128xf32, #tpu.memory_space<vmem>>, %arg6: memref<128x128xbf16, #tpu.memory_space<vmem>>, %arg7: memref<1x128xf32, #tpu.memory_space<vmem>>, %arg8: memref<256x128xf32, #tpu.memory_space<vmem>>) attributes {dimension_semantics = [#tpu.dimension_semantics<parallel>], iteration_bounds = array<i64: 1>, scalar_prefetch = 0 : i64, scratch_operands = 0 : i64, tpu.core_type = #tpu.core_type<tc>, window_params = [{transform_indices = @transform_0, window_bounds = array<i64: 256, 256>}, {pipeline_mode = #tpu.pipeline_mode<synchronous>, transform_indices = @transform_1, window_bounds = array<i64: 256, 512>}, {pipeline_mode = #tpu.pipeline_mode<synchronous>, transform_indices = @transform_2, window_bounds = array<i64: 1, 512>}, {pipeline_mode = #tpu.pipeline_mode<synchronous>, transform_indices = @transform_3, window_bounds = array<i64: 512, 128>}, {pipeline_mode = #tpu.pipeline_mode<synchronous>, transform_indices = @transform_4, window_bounds = array<i64: 1, 128>}, {pipeline_mode = #tpu.pipeline_mode<synchronous>, transform_indices = @transform_5, window_bounds = array<i64: 128, 128>}, {pipeline_mode = #tpu.pipeline_mode<synchronous>, transform_indices = @transform_6, window_bounds = array<i64: 1, 128>}, {transform_indices = @transform_7, window_bounds = array<i64: 256, 128>}]} {
    %c0 = arith.constant 0 : index
    %c0_0 = arith.constant 0 : index
    %0 = vector.load %arg1[%c0, %c0_0] : memref<256x256xbf16, #tpu.memory_space<vmem>>, vector<256x256xbf16>
    %c0_1 = arith.constant 0 : index
    %c0_2 = arith.constant 0 : index
    %1 = vector.load %arg2[%c0_1, %c0_2] : memref<256x512xbf16, #tpu.memory_space<vmem>>, vector<256x512xbf16>
    %cst = arith.constant dense<0.000000e+00> : vector<256x512xf32>
    %2 = tpu.matmul %0, %1, %cst {dimension_numbers = #tpu.dot_dimension_numbers<[1], [0], [0], [1], [0, 0, 1, 1], [], []>} : vector<256x256xbf16>, vector<256x512xbf16>, vector<256x512xf32> -> vector<256x512xf32>
    %c0_3 = arith.constant 0 : index
    %c0_4 = arith.constant 0 : index
    %3 = vector.load %arg3[%c0_3, %c0_4] : memref<1x512xf32, #tpu.memory_space<vmem>>, vector<1x512xf32>
    %4 = vector.broadcast %3 : vector<1x512xf32> to vector<256x512xf32>
    %5 = arith.addf %2, %4 : vector<256x512xf32>
    %cst_5 = arith.constant 0.000000e+00 : f32
    %6 = vector.broadcast %cst_5 : f32 to vector<256x512xf32>
    %7 = arith.cmpf ogt, %5, %6 : vector<256x512xf32>
    %cst_6 = arith.constant 0.000000e+00 : f32
    %8 = vector.broadcast %cst_6 : f32 to vector<256x512xf32>
    %9 = arith.minimumf %5, %8 : vector<256x512xf32>
    %10 = math.exp %9 : vector<256x512xf32>
    %cst_7 = arith.constant 1.000000e+00 : f32
    %11 = vector.broadcast %cst_7 : f32 to vector<256x512xf32>
    %12 = arith.subf %10, %11 : vector<256x512xf32>
    %13 = arith.select %7, %5, %12 : vector<256x512xi1>, vector<256x512xf32>
    %14 = arith.truncf %13 : vector<256x512xf32> to vector<256x512xbf16>
    %c0_8 = arith.constant 0 : index
    %c0_9 = arith.constant 0 : index
    %15 = vector.load %arg4[%c0_8, %c0_9] : memref<512x128xbf16, #tpu.memory_space<vmem>>, vector<512x128xbf16>
    %cst_10 = arith.constant dense<0.000000e+00> : vector<256x128xf32>
    %16 = tpu.matmul %14, %15, %cst_10 {dimension_numbers = #tpu.dot_dimension_numbers<[1], [0], [0], [1], [0, 0, 1, 1], [], []>} : vector<256x512xbf16>, vector<512x128xbf16>, vector<256x128xf32> -> vector<256x128xf32>
    %c0_11 = arith.constant 0 : index
    %c0_12 = arith.constant 0 : index
    %17 = vector.load %arg5[%c0_11, %c0_12] : memref<1x128xf32, #tpu.memory_space<vmem>>, vector<1x128xf32>
    %18 = vector.broadcast %17 : vector<1x128xf32> to vector<256x128xf32>
    %19 = arith.addf %16, %18 : vector<256x128xf32>
    %cst_13 = arith.constant 0.000000e+00 : f32
    %20 = vector.broadcast %cst_13 : f32 to vector<256x128xf32>
    %21 = arith.cmpf ogt, %19, %20 : vector<256x128xf32>
    %cst_14 = arith.constant 0.000000e+00 : f32
    %22 = vector.broadcast %cst_14 : f32 to vector<256x128xf32>
    %23 = arith.minimumf %19, %22 : vector<256x128xf32>
    %24 = math.exp %23 : vector<256x128xf32>
    %cst_15 = arith.constant 1.000000e+00 : f32
    %25 = vector.broadcast %cst_15 : f32 to vector<256x128xf32>
    %26 = arith.subf %24, %25 : vector<256x128xf32>
    %27 = arith.select %21, %19, %26 : vector<256x128xi1>, vector<256x128xf32>
    %28 = arith.truncf %27 : vector<256x128xf32> to vector<256x128xbf16>
    %c0_16 = arith.constant 0 : index
    %c0_17 = arith.constant 0 : index
    %29 = vector.load %arg6[%c0_16, %c0_17] : memref<128x128xbf16, #tpu.memory_space<vmem>>, vector<128x128xbf16>
    %cst_18 = arith.constant dense<0.000000e+00> : vector<256x128xf32>
    %30 = tpu.matmul %28, %29, %cst_18 {dimension_numbers = #tpu.dot_dimension_numbers<[1], [0], [0], [1], [0, 0, 1, 1], [], []>} : vector<256x128xbf16>, vector<128x128xbf16>, vector<256x128xf32> -> vector<256x128xf32>
    %c0_19 = arith.constant 0 : index
    %c0_20 = arith.constant 0 : index
    %31 = vector.load %arg7[%c0_19, %c0_20] : memref<1x128xf32, #tpu.memory_space<vmem>>, vector<1x128xf32>
    %32 = vector.broadcast %31 : vector<1x128xf32> to vector<256x128xf32>
    %33 = arith.addf %30, %32 : vector<256x128xf32>
    %c0_21 = arith.constant 0 : index
    %c0_22 = arith.constant 0 : index
    %34 = vector.load %arg8[%c0_21, %c0_22] : memref<256x128xf32, #tpu.memory_space<vmem>>, vector<256x128xf32>
    tpu.vector_store %arg8[%c0_21, %c0_22], %33 {strides = array<i32>} : memref<256x128xf32, #tpu.memory_space<vmem>>, vector<256x128xf32>,
    return
  }
  func.func @transform_0(%arg0: i32) -> (i32, i32) {
    %c0_i32 = arith.constant 0 : i32
    %c0_i32_0 = arith.constant 0 : i32
    return %arg0, %c0_i32 : i32, i32
  }
  func.func @transform_1(%arg0: i32) -> (i32, i32) {
    %c0_i32 = arith.constant 0 : i32
    %c0_i32_0 = arith.constant 0 : i32
    %c0_i32_1 = arith.constant 0 : i32
    return %c0_i32, %c0_i32_0 : i32, i32
  }
  func.func @transform_2(%arg0: i32) -> (i32, i32) {
    %c0_i32 = arith.constant 0 : i32
    %c0_i32_0 = arith.constant 0 : i32
    %c0_i32_1 = arith.constant 0 : i32
    return %c0_i32, %c0_i32_0 : i32, i32
  }
  func.func @transform_3(%arg0: i32) -> (i32, i32) {
    %c0_i32 = arith.constant 0 : i32
    %c0_i32_0 = arith.constant 0 : i32
    %c0_i32_1 = arith.constant 0 : i32
    return %c0_i32, %c0_i32_0 : i32, i32
  }
  func.func @transform_4(%arg0: i32) -> (i32, i32) {
    %c0_i32 = arith.constant 0 : i32
    %c0_i32_0 = arith.constant 0 : i32
    %c0_i32_1 = arith.constant 0 : i32
    return %c0_i32, %c0_i32_0 : i32, i32
  }
  func.func @transform_5(%arg0: i32) -> (i32, i32) {
    %c0_i32 = arith.constant 0 : i32
    %c0_i32_0 = arith.constant 0 : i32
    %c0_i32_1 = arith.constant 0 : i32
    return %c0_i32, %c0_i32_0 : i32, i32
  }
  func.func @transform_6(%arg0: i32) -> (i32, i32) {
    %c0_i32 = arith.constant 0 : i32
    %c0_i32_0 = arith.constant 0 : i32
    %c0_i32_1 = arith.constant 0 : i32
    return %c0_i32, %c0_i32_0 : i32, i32
  }
  func.func @transform_7(%arg0: i32) -> (i32, i32) {
    %c0_i32 = arith.constant 0 : i32
    %c0_i32_0 = arith.constant 0 : i32
    return %arg0, %c0_i32 : i32, i32
  }
}

</mosaic_0001>

<llo_original>
// kernel: tpu_custom_call.1
$region0: #{tpu_custom_call.1}
  #allocation0 [shape = 'u32[]', space=smem, size = 0x4, offset = 0x4, fixed_abs, tag = 'smem constant byte address 0x4 - core index']
  #allocation1 [shape = 'u32[72,128]{1,0:T(1,128)}', space=vmem, size = 0x9000, scoped, tag = 'internal scratch']
  %s0 = inlined_call_operand.hbm [shape: bf16[256,256], index: 0, kind: input, shape index: {}]
  %s1 = inlined_call_operand.hbm [shape: bf16[256,512], index: 1, kind: input, shape index: {}]
  %s2 = inlined_call_operand.hbm [shape: f32[1,512], index: 2, kind: input, shape index: {}]
  %s3 = inlined_call_operand.hbm [shape: bf16[512,128], index: 3, kind: input, shape index: {}]
  %s4 = inlined_call_operand.vmem [shape: f32[1,128], index: 4, kind: input, shape index: {}]
  %s5 = inlined_call_operand.hbm [shape: bf16[128,128], index: 5, kind: input, shape index: {}]
  %s6 = inlined_call_operand.vmem [shape: f32[1,128], index: 6, kind: input, shape index: {}]
  %s7 = inlined_call_operand.hbm [shape: f32[256,128], index: 7, kind: output, shape index: {}]
  %s8 = sld [smem:[#allocation0]]
  $region58: #{tpu_custom_call.1} parent=0
    _
  %s10 = ssub.s32 1, %s8
  %s11 = scalar_select 0, %s10, %s8
  $region1: #{tpu_custom_call.1} parent=0
    #allocation2 [shape = 'u8[131072]{0}', space=vmem, size = 0x20000, scoped, tag = 'input window, operand 0, single buffered']
    #allocation3 [shape = 's32[1]{0}', space=sflag, size = 0x4, scoped, tag = 'scoped memory for tpu_custom_call.1']
    #allocation4 [shape = 's32[1]{0}', space=sflag, size = 0x4, scoped, tag = 'scoped memory for tpu_custom_call.1']
    #allocation5 [shape = 'u8[262144]{0}', space=vmem, size = 0x40000, scoped, tag = 'input window, operand 1, single buffered']
    #allocation6 [shape = 's32[1]{0}', space=sflag, size = 0x4, scoped, tag = 'scoped memory for tpu_custom_call.1']
    #allocation7 [shape = 'u8[2048]{0}', space=vmem, size = 0x800, scoped, tag = 'input window, operand 2, single buffered']
    #allocation8 [shape = 'u8[131072]{0}', space=vmem, size = 0x20000, scoped, tag = 'input window, operand 3, single buffered']
    #allocation9 [shape = 's32[1]{0}', space=sflag, size = 0x4, scoped, tag = 'scoped memory for tpu_custom_call.1']
    #allocation10 [shape = 'u8[32768]{0}', space=vmem, size = 0x8000, scoped, tag = 'input window, operand 5, single buffered']
    #allocation11 [shape = 'u8[131072]{0}', space=vmem, size = 0x20000, scoped, tag = 'output window, operand 0, single buffered']
    %12 = vsyncpa [#allocation3], 0
    %13 = vsyncpa [#allocation6], 0
    %14 = vsyncpa [#allocation9], 0
    %15 = vsyncpa [#allocation4], 0
    // Predicated region
    $region2: #{tpu_custom_call.1} parent=1 // pred_check
      _
    $region3: #{tpu_custom_call.1} parent=1 // pred_check_branch
      %17 = sbr.rel (0) target = $region5
    $region4: #{tpu_custom_call.1} parent=1 // pred_region
      %19 = vsyncadd [#allocation3], 0
      %s20 = sshll.u32 %s0, 4
      %s21 = int_to_ptr.hbm [resolvable:$true] %s20
      %s22 = sshll.u32 [#allocation2], 4
      %s23 = int_to_ptr.vmem [resolvable:$true] %s22
      %28 = dma.hbm_to_vmem [thread:$0]  %s21, 4096, %s23, [#allocation3], 128, 128, 8
    $region5: #{tpu_custom_call.1} parent=1 // pred_fallthru
      _
    // Predicated region
    $region6: #{tpu_custom_call.1} parent=1 // pred_check
      _
    $region7: #{tpu_custom_call.1} parent=1 // pred_check_branch
      %30 = sbr.rel (0) target = $region9
    $region8: #{tpu_custom_call.1} parent=1 // pred_region
      %32 = vsyncadd [#allocation6], 0
      %s33 = sshll.u32 %s1, 4
      %s34 = int_to_ptr.hbm [resolvable:$true] %s33
      %s35 = sshll.u32 [#allocation5], 4
      %s36 = int_to_ptr.vmem [resolvable:$true] %s35
      %41 = dma.hbm_to_vmem [thread:$0]  %s34, 8192, %s36, [#allocation6], 256, 256, 16
    $region9: #{tpu_custom_call.1} parent=1 // pred_fallthru
      _
    // Predicated region
    $region10: #{tpu_custom_call.1} parent=1 // pred_check
      _
    $region11: #{tpu_custom_call.1} parent=1 // pred_check_branch
      %43 = sbr.rel (0) target = $region13
    $region12: #{tpu_custom_call.1} parent=1 // pred_region
      %45 = vsyncadd [#allocation6], 0
      %s47 = sshll.u32 %s2, 4
      %s48 = int_to_ptr.hbm [resolvable:$true] %s47
      %s49 = sshll.u32 [#allocation7], 4
      %s50 = int_to_ptr.vmem [resolvable:$true] %s49
      %52 = dma.hbm_to_vmem [thread:$0]  %s48, 64, %s50, [#allocation6]
    $region13: #{tpu_custom_call.1} parent=1 // pred_fallthru
      _
    // Predicated region
    $region14: #{tpu_custom_call.1} parent=1 // pred_check
      _
    $region15: #{tpu_custom_call.1} parent=1 // pred_check_branch
      %54 = sbr.rel (0) target = $region17
    $region16: #{tpu_custom_call.1} parent=1 // pred_region
      %56 = vsyncadd [#allocation9], 0
      %s57 = sshll.u32 %s3, 4
      %s58 = int_to_ptr.hbm [resolvable:$true] %s57
      %s59 = sshll.u32 [#allocation8], 4
      %s60 = int_to_ptr.vmem [resolvable:$true] %s59
      %65 = dma.hbm_to_vmem [thread:$0]  %s58, 4096, %s60, [#allocation9], 64, 64, 4
    $region17: #{tpu_custom_call.1} parent=1 // pred_fallthru
      _
    // Predicated region
    $region18: #{tpu_custom_call.1} parent=1 // pred_check
      _
    $region19: #{tpu_custom_call.1} parent=1 // pred_check_branch
      %67 = sbr.rel (0) target = $region21
    $region20: #{tpu_custom_call.1} parent=1 // pred_region
      _
    $region21: #{tpu_custom_call.1} parent=1 // pred_fallthru
      _
    // Predicated region
    $region22: #{tpu_custom_call.1} parent=1 // pred_check
      _
    $region23: #{tpu_custom_call.1} parent=1 // pred_check_branch
      %69 = sbr.rel (0) target = $region25
    $region24: #{tpu_custom_call.1} parent=1 // pred_region
      %71 = vsyncadd [#allocation9], 0
      %s72 = sshll.u32 %s5, 4
      %s73 = int_to_ptr.hbm [resolvable:$true] %s72
      %s74 = sshll.u32 [#allocation10], 4
      %s75 = int_to_ptr.vmem [resolvable:$true] %s74
      %80 = dma.hbm_to_vmem [thread:$0]  %s73, 1024, %s75, [#allocation9], 64, 64, 4
    $region25: #{tpu_custom_call.1} parent=1 // pred_fallthru
      _
    // Predicated region
    $region26: #{tpu_custom_call.1} parent=1 // pred_check
      _
    $region27: #{tpu_custom_call.1} parent=1 // pred_check_branch
      %82 = sbr.rel (0) target = $region29
    $region28: #{tpu_custom_call.1} parent=1 // pred_region
      _
    $region29: #{tpu_custom_call.1} parent=1 // pred_fallthru
      _
    // Predicated region
    $region30: #{tpu_custom_call.1} parent=1 // pred_check
      _
    $region31: #{tpu_custom_call.1} parent=1 // pred_check_branch
      %84 = sbr.rel (0) target = $region33
    $region32: #{tpu_custom_call.1} parent=1 // pred_region
      %86 = dma.done [#allocation3], 4096
    $region33: #{tpu_custom_call.1} parent=1 // pred_fallthru
      _
    // Predicated region
    $region34: #{tpu_custom_call.1} parent=1 // pred_check
      _
    $region35: #{tpu_custom_call.1} parent=1 // pred_check_branch
      %88 = sbr.rel (0) target = $region37
    $region36: #{tpu_custom_call.1} parent=1 // pred_region
      %90 = dma.done [#allocation6], 8192
    $region37: #{tpu_custom_call.1} parent=1 // pred_fallthru
      _
    // Predicated region
    $region38: #{tpu_custom_call.1} parent=1 // pred_check
      _
    $region39: #{tpu_custom_call.1} parent=1 // pred_check_branch
      %92 = sbr.rel (0) target = $region41
    $region40: #{tpu_custom_call.1} parent=1 // pred_region
      %94 = dma.done [#allocation6], 64
    $region41: #{tpu_custom_call.1} parent=1 // pred_fallthru
      _
    // Predicated region
    $region42: #{tpu_custom_call.1} parent=1 // pred_check
      _
    $region43: #{tpu_custom_call.1} parent=1 // pred_check_branch
      %96 = sbr.rel (0) target = $region45
    $region44: #{tpu_custom_call.1} parent=1 // pred_region
      %98 = dma.done [#allocation9], 4096
    $region45: #{tpu_custom_call.1} parent=1 // pred_fallthru
      _
    // Predicated region
    $region46: #{tpu_custom_call.1} parent=1 // pred_check
      _
    $region47: #{tpu_custom_call.1} parent=1 // pred_check_branch
      %100 = sbr.rel (0) target = $region49
    $region48: #{tpu_custom_call.1} parent=1 // pred_region
      %102 = dma.done [#allocation9], 1024
    $region49: #{tpu_custom_call.1} parent=1 // pred_fallthru
      _
    %v103 = vld [vmem:[#allocation2] sm:$0xff]
    %v104 = vld [vmem:[#allocation2 + $0x8] sm:$0xff]
    %v105 = vld [vmem:[#allocation2 + $0x10] sm:$0xff]
    %v106 = vld [vmem:[#allocation2 + $0x18] sm:$0xff]
    %v107 = vld [vmem:[#allocation2 + $0x20] sm:$0xff]
    %v108 = vld [vmem:[#allocation2 + $0x28] sm:$0xff]
    %v109 = vld [vmem:[#allocation2 + $0x30] sm:$0xff]
    %v110 = vld [vmem:[#allocation2 + $0x38] sm:$0xff]
    %v111 = vld [vmem:[#allocation2 + $0x40] sm:$0xff]
    %v112 = vld [vmem:[#allocation2 + $0x48] sm:$0xff]
    %v113 = vld [vmem:[#allocation2 + $0x50] sm:$0xff]
    %v114 = vld [vmem:[#allocation2 + $0x58] sm:$0xff]
    %v115 = vld [vmem:[#allocation2 + $0x60] sm:$0xff]
    %v116 = vld [vmem:[#allocation2 + $0x68] sm:$0xff]
    %v117 = vld [vmem:[#allocation2 + $0x70] sm:$0xff]
    %v118 = vld [vmem:[#allocation2 + $0x78] sm:$0xff]
    %v119 = vld [vmem:[#allocation2 + $0x80] sm:$0xff]
    %v120 = vld [vmem:[#allocation2 + $0x88] sm:$0xff]
    %v121 = vld [vmem:[#allocation2 + $0x90] sm:$0xff]
    %v122 = vld [vmem:[#allocation2 + $0x98] sm:$0xff]
    %v123 = vld [vmem:[#allocation2 + $0xa0] sm:$0xff]
    %v124 = vld [vmem:[#allocation2 + $0xa8] sm:$0xff]
    %v125 = vld [vmem:[#allocation2 + $0xb0] sm:$0xff]
    %v126 = vld [vmem:[#allocation2 + $0xb8] sm:$0xff]
    %v127 = vld [vmem:[#allocation2 + $0xc0] sm:$0xff]
    %v128 = vld [vmem:[#allocation2 + $0xc8] sm:$0xff]
    %v129 = vld [vmem:[#allocation2 + $0xd0] sm:$0xff]
    %v130 = vld [vmem:[#allocation2 + $0xd8] sm:$0xff]
    %v131 = vld [vmem:[#allocation2 + $0xe0] sm:$0xff]
    %v132 = vld [vmem:[#allocation2 + $0xe8] sm:$0xff]
    %v133 = vld [vmem:[#allocation2 + $0xf0] sm:$0xff]
    %v134 = vld [vmem:[#allocation2 + $0xf8] sm:$0xff]
    %v135 = vld [vmem:[#allocation5] sm:$0xff]
    %v136 = vld [vmem:[#allocation5 + $0x8] sm:$0xff]
    %v137 = vld [vmem:[#allocation5 + $0x10] sm:$0xff]
    %v138 = vld [vmem:[#allocation5 + $0x18] sm:$0xff]
    %v139 = vld [vmem:[#allocation5 + $0x20] sm:$0xff]
    %v140 = vld [vmem:[#allocation5 + $0x28] sm:$0xff]
    %v141 = vld [vmem:[#allocation5 + $0x30] sm:$0xff]
    %v142 = vld [vmem:[#allocation5 + $0x38] sm:$0xff]
    %v143 = vld [vmem:[#allocation5 + $0x40] sm:$0xff]
    %v144 = vld [vmem:[#allocation5 + $0x48] sm:$0xff]
    %v145 = vld [vmem:[#allocation5 + $0x50] sm:$0xff]
    %v146 = vld [vmem:[#allocation5 + $0x58] sm:$0xff]
    %v147 = vld [vmem:[#allocation5 + $0x60] sm:$0xff]
    %v148 = vld [vmem:[#allocation5 + $0x68] sm:$0xff]
    %v149 = vld [vmem:[#allocation5 + $0x70] sm:$0xff]
    %v150 = vld [vmem:[#allocation5 + $0x78] sm:$0xff]
    %v151 = vld [vmem:[#allocation5 + $0x80] sm:$0xff]
    %v152 = vld [vmem:[#allocation5 + $0x88] sm:$0xff]
    %v153 = vld [vmem:[#allocation5 + $0x90] sm:$0xff]
    %v154 = vld [vmem:[#allocation5 + $0x98] sm:$0xff]
    %v155 = vld [vmem:[#allocation5 + $0xa0] sm:$0xff]
    %v156 = vld [vmem:[#allocation5 + $0xa8] sm:$0xff]
    %v157 = vld [vmem:[#allocation5 + $0xb0] sm:$0xff]
    %v158 = vld [vmem:[#allocation5 + $0xb8] sm:$0xff]
    %v159 = vld [vmem:[#allocation5 + $0xc0] sm:$0xff]
    %v160 = vld [vmem:[#allocation5 + $0xc8] sm:$0xff]
    %v161 = vld [vmem:[#allocation5 + $0xd0] sm:$0xff]
    %v162 = vld [vmem:[#allocation5 + $0xd8] sm:$0xff]
    %v163 = vld [vmem:[#allocation5 + $0xe0] sm:$0xff]
    %v164 = vld [vmem:[#allocation5 + $0xe8] sm:$0xff]
    %v165 = vld [vmem:[#allocation5 + $0xf0] sm:$0xff]
    %v166 = vld [vmem:[#allocation5 + $0xf8] sm:$0xff]
    %v167 = vld [vmem:[#allocation5 + $0x100] sm:$0xff]
    %v168 = vld [vmem:[#allocation5 + $0x108] sm:$0xff]
    %v169 = vld [vmem:[#allocation5 + $0x110] sm:$0xff]
    %v170 = vld [vmem:[#allocation5 + $0x118] sm:$0xff]
    %v171 = vld [vmem:[#allocation5 + $0x120] sm:$0xff]
    %v172 = vld [vmem:[#allocation5 + $0x128] sm:$0xff]
    %v173 = vld [vmem:[#allocation5 + $0x130] sm:$0xff]
    %v174 = vld [vmem:[#allocation5 + $0x138] sm:$0xff]
    %v175 = vld [vmem:[#allocation5 + $0x140] sm:$0xff]
    %v176 = vld [vmem:[#allocation5 + $0x148] sm:$0xff]
    %v177 = vld [vmem:[#allocation5 + $0x150] sm:$0xff]
    %v178 = vld [vmem:[#allocation5 + $0x158] sm:$0xff]
    %v179 = vld [vmem:[#allocation5 + $0x160] sm:$0xff]
    %v180 = vld [vmem:[#allocation5 + $0x168] sm:$0xff]
    %v181 = vld [vmem:[#allocation5 + $0x170] sm:$0xff]
    %v182 = vld [vmem:[#allocation5 + $0x178] sm:$0xff]
    %v183 = vld [vmem:[#allocation5 + $0x180] sm:$0xff]
    %v184 = vld [vmem:[#allocation5 + $0x188] sm:$0xff]
    %v185 = vld [vmem:[#allocation5 + $0x190] sm:$0xff]
    %v186 = vld [vmem:[#allocation5 + $0x198] sm:$0xff]
    %v187 = vld [vmem:[#allocation5 + $0x1a0] sm:$0xff]
    %v188 = vld [vmem:[#allocation5 + $0x1a8] sm:$0xff]
    %v189 = vld [vmem:[#allocation5 + $0x1b0] sm:$0xff]
    %v190 = vld [vmem:[#allocation5 + $0x1b8] sm:$0xff]
    %v191 = vld [vmem:[#allocation5 + $0x1c0] sm:$0xff]
    %v192 = vld [vmem:[#allocation5 + $0x1c8] sm:$0xff]
    %v193 = vld [vmem:[#allocation5 + $0x1d0] sm:$0xff]
    %v194 = vld [vmem:[#allocation5 + $0x1d8] sm:$0xff]
    %v195 = vld [vmem:[#allocation5 + $0x1e0] sm:$0xff]
    %v196 = vld [vmem:[#allocation5 + $0x1e8] sm:$0xff]
    %v197 = vld [vmem:[#allocation5 + $0x1f0] sm:$0xff]
    %v198 = vld [vmem:[#allocation5 + $0x1f8] sm:$0xff]
    %v199 = vld [vmem:[#allocation7] sm:$0xf]
    %v201 = vperm.slane %v199, 0
    %v202 = vperm.slane %v199, 1
    %v203 = vperm.slane %v199, 2
    %v204 = vperm.slane %v199, 3
    %v241 = vunpack.c.l.b16 %v103
    %v242 = vunpack.c.h.b16 %v103
    %v243 = vunpack.c.l.b16 %v104
    %v244 = vunpack.c.h.b16 %v104
    %v245 = vunpack.c.l.b16 %v105
    %v246 = vunpack.c.h.b16 %v105
    %v247 = vunpack.c.l.b16 %v106
    %v248 = vunpack.c.h.b16 %v106
    %v249 = vunpack.c.l.b16 %v107
    %v250 = vunpack.c.h.b16 %v107
    %v251 = vunpack.c.l.b16 %v108
    %v252 = vunpack.c.h.b16 %v108
    %v253 = vunpack.c.l.b16 %v109
    %v254 = vunpack.c.h.b16 %v109
    %v255 = vunpack.c.l.b16 %v110
    %v256 = vunpack.c.h.b16 %v110
    %v257 = vunpack.c.l.b16 %v111
    %v258 = vunpack.c.h.b16 %v111
    %v259 = vunpack.c.l.b16 %v112
    %v260 = vunpack.c.h.b16 %v112
    %v261 = vunpack.c.l.b16 %v113
    %v262 = vunpack.c.h.b16 %v113
    %v263 = vunpack.c.l.b16 %v114
    %v264 = vunpack.c.h.b16 %v114
    %v265 = vunpack.c.l.b16 %v115
    %v266 = vunpack.c.h.b16 %v115
    %v267 = vunpack.c.l.b16 %v116
    %v268 = vunpack.c.h.b16 %v116
    %v269 = vunpack.c.l.b16 %v117
    %v270 = vunpack.c.h.b16 %v117
    %v271 = vunpack.c.l.b16 %v118
    %v272 = vunpack.c.h.b16 %v118
    %v273 = vunpack.c.l.b16 %v119
    %v274 = vunpack.c.h.b16 %v119
    %v275 = vunpack.c.l.b16 %v120
    %v276 = vunpack.c.h.b16 %v120
    %v277 = vunpack.c.l.b16 %v121
    %v278 = vunpack.c.h.b16 %v121
    %v279 = vunpack.c.l.b16 %v122
    %v280 = vunpack.c.h.b16 %v122
    %v281 = vunpack.c.l.b16 %v123
    %v282 = vunpack.c.h.b16 %v123
    %v283 = vunpack.c.l.b16 %v124
    %v284 = vunpack.c.h.b16 %v124
    %v285 = vunpack.c.l.b16 %v125
    %v286 = vunpack.c.h.b16 %v125
    %v287 = vunpack.c.l.b16 %v126
    %v288 = vunpack.c.h.b16 %v126
    %v289 = vunpack.c.l.b16 %v127
    %v290 = vunpack.c.h.b16 %v127
    %v291 = vunpack.c.l.b16 %v128
    %v292 = vunpack.c.h.b16 %v128
    %v293 = vunpack.c.l.b16 %v129
    %v294 = vunpack.c.h.b16 %v129
    %v295 = vunpack.c.l.b16 %v130
    %v296 = vunpack.c.h.b16 %v130
    %v297 = vunpack.c.l.b16 %v131
    %v298 = vunpack.c.h.b16 %v131
    %v299 = vunpack.c.l.b16 %v132
    %v300 = vunpack.c.h.b16 %v132
    %v301 = vunpack.c.l.b16 %v133
    %v302 = vunpack.c.h.b16 %v133
    %v303 = vunpack.c.l.b16 %v134
    %v304 = vunpack.c.h.b16 %v134
    %v305 = vpack.c.b16 %v243, %v241
    %v306 = vpack.c.b16 %v244, %v242
    %v307 = vpack.c.b16 %v247, %v245
    %v308 = vpack.c.b16 %v248, %v246
    %v309 = vpack.c.b16 %v251, %v249
    %v310 = vpack.c.b16 %v252, %v250
    %v311 = vpack.c.b16 %v255, %v253
    %v312 = vpack.c.b16 %v256, %v254
    %v313 = vpack.c.b16 %v259, %v257
    %v314 = vpack.c.b16 %v260, %v258
    %v315 = vpack.c.b16 %v263, %v261
    %v316 = vpack.c.b16 %v264, %v262
    %v317 = vpack.c.b16 %v267, %v265
    %v318 = vpack.c.b16 %v268, %v266
    %v319 = vpack.c.b16 %v271, %v269
    %v320 = vpack.c.b16 %v272, %v270
    %v321 = vpack.c.b16 %v275, %v273
    %v322 = vpack.c.b16 %v276, %v274
    %v323 = vpack.c.b16 %v279, %v277
    %v324 = vpack.c.b16 %v280, %v278
    %v325 = vpack.c.b16 %v283, %v281
    %v326 = vpack.c.b16 %v284, %v282
    %v327 = vpack.c.b16 %v287, %v285
    %v328 = vpack.c.b16 %v288, %v286
    %v329 = vpack.c.b16 %v291, %v289
    %v330 = vpack.c.b16 %v292, %v290
    %v331 = vpack.c.b16 %v295, %v293
    %v332 = vpack.c.b16 %v296, %v294
    %v333 = vpack.c.b16 %v299, %v297
    %v334 = vpack.c.b16 %v300, %v298
    %v335 = vpack.c.b16 %v303, %v301
    %v336 = vpack.c.b16 %v304, %v302
    %v433 = vunpack.c.l.b16 %v135
    %v434 = vunpack.c.h.b16 %v135
    %v435 = vunpack.c.l.b16 %v136
    %v436 = vunpack.c.h.b16 %v136
    %v437 = vunpack.c.l.b16 %v137
    %v438 = vunpack.c.h.b16 %v137
    %v439 = vunpack.c.l.b16 %v138
    %v440 = vunpack.c.h.b16 %v138
    %v441 = vunpack.c.l.b16 %v139
    %v442 = vunpack.c.h.b16 %v139
    %v443 = vunpack.c.l.b16 %v140
    %v444 = vunpack.c.h.b16 %v140
    %v445 = vunpack.c.l.b16 %v141
    %v446 = vunpack.c.h.b16 %v141
    %v447 = vunpack.c.l.b16 %v142
    %v448 = vunpack.c.h.b16 %v142
    %v449 = vunpack.c.l.b16 %v143
    %v450 = vunpack.c.h.b16 %v143
    %v451 = vunpack.c.l.b16 %v144
    %v452 = vunpack.c.h.b16 %v144
    %v453 = vunpack.c.l.b16 %v145
    %v454 = vunpack.c.h.b16 %v145
    %v455 = vunpack.c.l.b16 %v146
    %v456 = vunpack.c.h.b16 %v146
    %v457 = vunpack.c.l.b16 %v147
    %v458 = vunpack.c.h.b16 %v147
    %v459 = vunpack.c.l.b16 %v148
    %v460 = vunpack.c.h.b16 %v148
    %v461 = vunpack.c.l.b16 %v149
    %v462 = vunpack.c.h.b16 %v149
    %v463 = vunpack.c.l.b16 %v150
    %v464 = vunpack.c.h.b16 %v150
    %v465 = vunpack.c.l.b16 %v151
    %v466 = vunpack.c.h.b16 %v151
    %v467 = vunpack.c.l.b16 %v152
    %v468 = vunpack.c.h.b16 %v152
    %v469 = vunpack.c.l.b16 %v153
    %v470 = vunpack.c.h.b16 %v153
    %v471 = vunpack.c.l.b16 %v154
    %v472 = vunpack.c.h.b16 %v154
    %v473 = vunpack.c.l.b16 %v155
    %v474 = vunpack.c.h.b16 %v155
    %v475 = vunpack.c.l.b16 %v156
    %v476 = vunpack.c.h.b16 %v156
    %v477 = vunpack.c.l.b16 %v157
    %v478 = vunpack.c.h.b16 %v157
    %v479 = vunpack.c.l.b16 %v158
    %v480 = vunpack.c.h.b16 %v158
    %v481 = vunpack.c.l.b16 %v159
    %v482 = vunpack.c.h.b16 %v159
    %v483 = vunpack.c.l.b16 %v160
    %v484 = vunpack.c.h.b16 %v160
    %v485 = vunpack.c.l.b16 %v161
    %v486 = vunpack.c.h.b16 %v161
    %v487 = vunpack.c.l.b16 %v162
    %v488 = vunpack.c.h.b16 %v162
    %v489 = vunpack.c.l.b16 %v163
    %v490 = vunpack.c.h.b16 %v163
    %v491 = vunpack.c.l.b16 %v164
    %v492 = vunpack.c.h.b16 %v164
    %v493 = vunpack.c.l.b16 %v165
    %v494 = vunpack.c.h.b16 %v165
    %v495 = vunpack.c.l.b16 %v166
    %v496 = vunpack.c.h.b16 %v166
    %v497 = vunpack.c.l.b16 %v167
    %v498 = vunpack.c.h.b16 %v167
    %v499 = vunpack.c.l.b16 %v168
    %v500 = vunpack.c.h.b16 %v168
    %v501 = vunpack.c.l.b16 %v169
    %v502 = vunpack.c.h.b16 %v169
    %v503 = vunpack.c.l.b16 %v170
    %v504 = vunpack.c.h.b16 %v170
    %v505 = vunpack.c.l.b16 %v171
    %v506 = vunpack.c.h.b16 %v171
    %v507 = vunpack.c.l.b16 %v172
    %v508 = vunpack.c.h.b16 %v172
    %v509 = vunpack.c.l.b16 %v173
    %v510 = vunpack.c.h.b16 %v173
    %v511 = vunpack.c.l.b16 %v174
    %v512 = vunpack.c.h.b16 %v174
    %v513 = vunpack.c.l.b16 %v175
    %v514 = vunpack.c.h.b16 %v175
    %v515 = vunpack.c.l.b16 %v176
    %v516 = vunpack.c.h.b16 %v176
    %v517 = vunpack.c.l.b16 %v177
    %v518 = vunpack.c.h.b16 %v177
    %v519 = vunpack.c.l.b16 %v178
    %v520 = vunpack.c.h.b16 %v178
    %v521 = vunpack.c.l.b16 %v179
    %v522 = vunpack.c.h.b16 %v179
    %v523 = vunpack.c.l.b16 %v180
    %v524 = vunpack.c.h.b16 %v180
    %v525 = vunpack.c.l.b16 %v181
    %v526 = vunpack.c.h.b16 %v181
    %v527 = vunpack.c.l.b16 %v182
    %v528 = vunpack.c.h.b16 %v182
    %v529 = vunpack.c.l.b16 %v183
    %v530 = vunpack.c.h.b16 %v183
    %v531 = vunpack.c.l.b16 %v184
    %v532 = vunpack.c.h.b16 %v184
    %v533 = vunpack.c.l.b16 %v185
    %v534 = vunpack.c.h.b16 %v185
    %v535 = vunpack.c.l.b16 %v186
    %v536 = vunpack.c.h.b16 %v186
    %v537 = vunpack.c.l.b16 %v187
    %v538 = vunpack.c.h.b16 %v187
    %v539 = vunpack.c.l.b16 %v188
    %v540 = vunpack.c.h.b16 %v188
    %v541 = vunpack.c.l.b16 %v189
    %v542 = vunpack.c.h.b16 %v189
    %v543 = vunpack.c.l.b16 %v190
    %v544 = vunpack.c.h.b16 %v190
    %v545 = vunpack.c.l.b16 %v191
    %v546 = vunpack.c.h.b16 %v191
    %v547 = vunpack.c.l.b16 %v192
    %v548 = vunpack.c.h.b16 %v192
    %v549 = vunpack.c.l.b16 %v193
    %v550 = vunpack.c.h.b16 %v193
    %v551 = vunpack.c.l.b16 %v194
    %v552 = vunpack.c.h.b16 %v194
    %v553 = vunpack.c.l.b16 %v195
    %v554 = vunpack.c.h.b16 %v195
    %v555 = vunpack.c.l.b16 %v196
    %v556 = vunpack.c.h.b16 %v196
    %v557 = vunpack.c.l.b16 %v197
    %v558 = vunpack.c.h.b16 %v197
    %v559 = vunpack.c.l.b16 %v198
    %v560 = vunpack.c.h.b16 %v198
    %v561 = vpack.c.b16 %v437, %v433
    %v562 = vpack.c.b16 %v438, %v434
    %v563 = vpack.c.b16 %v439, %v435
    %v564 = vpack.c.b16 %v440, %v436
    %v565 = vpack.c.b16 %v445, %v441
    %v566 = vpack.c.b16 %v446, %v442
    %v567 = vpack.c.b16 %v447, %v443
    %v568 = vpack.c.b16 %v448, %v444
    %v569 = vpack.c.b16 %v453, %v449
    %v570 = vpack.c.b16 %v454, %v450
    %v571 = vpack.c.b16 %v455, %v451
    %v572 = vpack.c.b16 %v456, %v452
    %v573 = vpack.c.b16 %v461, %v457
    %v574 = vpack.c.b16 %v462, %v458
    %v575 = vpack.c.b16 %v463, %v459
    %v576 = vpack.c.b16 %v464, %v460
    %v577 = vpack.c.b16 %v469, %v465
    %v578 = vpack.c.b16 %v470, %v466
    %v579 = vpack.c.b16 %v471, %v467
    %v580 = vpack.c.b16 %v472, %v468
    %v581 = vpack.c.b16 %v477, %v473
    %v582 = vpack.c.b16 %v478, %v474
    %v583 = vpack.c.b16 %v479, %v475
    %v584 = vpack.c.b16 %v480, %v476
    %v585 = vpack.c.b16 %v485, %v481
    %v586 = vpack.c.b16 %v486, %v482
    %v587 = vpack.c.b16 %v487, %v483
    %v588 = vpack.c.b16 %v488, %v484
    %v589 = vpack.c.b16 %v493, %v489
    %v590 = vpack.c.b16 %v494, %v490
    %v591 = vpack.c.b16 %v495, %v491
    %v592 = vpack.c.b16 %v496, %v492
    %v593 = vpack.c.b16 %v501, %v497
    %v594 = vpack.c.b16 %v502, %v498
    %v595 = vpack.c.b16 %v503, %v499
    %v596 = vpack.c.b16 %v504, %v500
    %v597 = vpack.c.b16 %v509, %v505
    %v598 = vpack.c.b16 %v510, %v506
    %v599 = vpack.c.b16 %v511, %v507
    %v600 = vpack.c.b16 %v512, %v508
    %v601 = vpack.c.b16 %v517, %v513
    %v602 = vpack.c.b16 %v518, %v514
    %v603 = vpack.c.b16 %v519, %v515
    %v604 = vpack.c.b16 %v520, %v516
    %v605 = vpack.c.b16 %v525, %v521
    %v606 = vpack.c.b16 %v526, %v522
    %v607 = vpack.c.b16 %v527, %v523
    %v608 = vpack.c.b16 %v528, %v524
    %v609 = vpack.c.b16 %v533, %v529
    %v610 = vpack.c.b16 %v534, %v530
    %v611 = vpack.c.b16 %v535, %v531
    %v612 = vpack.c.b16 %v536, %v532
    %v613 = vpack.c.b16 %v541, %v537
    %v614 = vpack.c.b16 %v542, %v538
    %v615 = vpack.c.b16 %v543, %v539
    %v616 = vpack.c.b16 %v544, %v540
    %v617 = vpack.c.b16 %v549, %v545
    %v618 = vpack.c.b16 %v550, %v546
    %v619 = vpack.c.b16 %v551, %v547
    %v620 = vpack.c.b16 %v552, %v548
    %v621 = vpack.c.b16 %v557, %v553
    %v622 = vpack.c.b16 %v558, %v554
    %v623 = vpack.c.b16 %v559, %v555
    %v624 = vpack.c.b16 %v560, %v556
    %689 = vmatpush.bf16.msra.mxu0 %v589
    %690 = vmatpush.bf16.msra.mxu0 %v585
    %691 = vmatpush.bf16.msra.mxu0 %v581
    %692 = vmatpush.bf16.msra.mxu0 %v577
    %693 = vmatpush.bf16.msra.mxu0 %v573
    %694 = vmatpush.bf16.msra.mxu0 %v569
    %695 = vmatpush.bf16.msra.mxu0 %v565
    %696 = vmatpush.bf16.msra.mxu0 %v561
    %697 = vmatmul.bf16.gmra.mxu0 %v305
    %v698 = vpop.f32.mrf.mxu0
    %v699 = vadd.f32 %v201, %v698
    %v700 = vpop.f32.mrf.mxu0
    %v701 = vadd.f32 %v201, %v700
    %702 = vmatmul.bf16.gmra.mxu0 %v307
    %v703 = vpop.f32.mrf.mxu0
    %v704 = vadd.f32 %v201, %v703
    %v705 = vpop.f32.mrf.mxu0
    %v706 = vadd.f32 %v201, %v705
    %707 = vmatmul.bf16.gmra.mxu0 %v309
    %v708 = vpop.f32.mrf.mxu0
    %v709 = vadd.f32 %v201, %v708
    %v710 = vpop.f32.mrf.mxu0
    %v711 = vadd.f32 %v201, %v710
    %712 = vmatmul.bf16.gmra.mxu0 %v311
    %v713 = vpop.f32.mrf.mxu0
    %v714 = vadd.f32 %v201, %v713
    %v715 = vpop.f32.mrf.mxu0
    %v716 = vadd.f32 %v201, %v715
    %717 = vmatmul.bf16.gmra.mxu0 %v313
    %v718 = vpop.f32.mrf.mxu0
    %v719 = vadd.f32 %v201, %v718
    %v720 = vpop.f32.mrf.mxu0
    %v721 = vadd.f32 %v201, %v720
    %722 = vmatmul.bf16.gmra.mxu0 %v315
    %v723 = vpop.f32.mrf.mxu0
    %v724 = vadd.f32 %v201, %v723
    %v725 = vpop.f32.mrf.mxu0
    %v726 = vadd.f32 %v201, %v725
    %727 = vmatmul.bf16.gmra.mxu0 %v317
    %v728 = vpop.f32.mrf.mxu0
    %v729 = vadd.f32 %v201, %v728
    %v730 = vpop.f32.mrf.mxu0
    %v731 = vadd.f32 %v201, %v730
    %732 = vmatmul.bf16.gmra.mxu0 %v319
    %v733 = vpop.f32.mrf.mxu0
    %v734 = vadd.f32 %v201, %v733
    %v735 = vpop.f32.mrf.mxu0
    %v736 = vadd.f32 %v201, %v735
    %737 = vmatmul.bf16.gmra.mxu0 %v321
    %v738 = vpop.f32.mrf.mxu0
    %v739 = vadd.f32 %v201, %v738
    %v740 = vpop.f32.mrf.mxu0
    %v741 = vadd.f32 %v201, %v740
    %742 = vmatmul.bf16.gmra.mxu0 %v323
    %v743 = vpop.f32.mrf.mxu0
    %v744 = vadd.f32 %v201, %v743
    %v745 = vpop.f32.mrf.mxu0
    %v746 = vadd.f32 %v201, %v745
    %747 = vmatmul.bf16.gmra.mxu0 %v325
    %v748 = vpop.f32.mrf.mxu0
    %v749 = vadd.f32 %v201, %v748
    %v750 = vpop.f32.mrf.mxu0
    %v751 = vadd.f32 %v201, %v750
    %752 = vmatmul.bf16.gmra.mxu0 %v327
    %v753 = vpop.f32.mrf.mxu0
    %v754 = vadd.f32 %v201, %v753
    %v755 = vpop.f32.mrf.mxu0
    %v756 = vadd.f32 %v201, %v755
    %757 = vmatmul.bf16.gmra.mxu0 %v329
    %v758 = vpop.f32.mrf.mxu0
    %v759 = vadd.f32 %v201, %v758
    %v760 = vpop.f32.mrf.mxu0
    %v761 = vadd.f32 %v201, %v760
    %762 = vmatmul.bf16.gmra.mxu0 %v331
    %v763 = vpop.f32.mrf.mxu0
    %v764 = vadd.f32 %v201, %v763
    %v765 = vpop.f32.mrf.mxu0
    %v766 = vadd.f32 %v201, %v765
    %767 = vmatmul.bf16.gmra.mxu0 %v333
    %v768 = vpop.f32.mrf.mxu0
    %v769 = vadd.f32 %v201, %v768
    %v770 = vpop.f32.mrf.mxu0
    %v771 = vadd.f32 %v201, %v770
    %772 = vmatmul.bf16.gmra.mxu0 %v335
    %v773 = vpop.f32.mrf.mxu0
    %v774 = vadd.f32 %v201, %v773
    %v775 = vpop.f32.mrf.mxu0
    %v776 = vadd.f32 %v201, %v775
    %777 = vdwg.mxu0
    %778 = vmatpush.bf16.msra.mxu0 %v621
    %779 = vmatpush.bf16.msra.mxu0 %v617
    %780 = vmatpush.bf16.msra.mxu0 %v613
    %781 = vmatpush.bf16.msra.mxu0 %v609
    %782 = vmatpush.bf16.msra.mxu0 %v605
    %783 = vmatpush.bf16.msra.mxu0 %v601
    %784 = vmatpush.bf16.msra.mxu0 %v597
    %785 = vmatpush.bf16.msra.mxu0 %v593
    %786 = vmatmul.bf16.gmra.mxu0 %v306
    %v787 = vpop.f32.mrf.mxu0
    %v788 = vadd.f32 %v699, %v787
    %v789 = vpop.f32.mrf.mxu0
    %v790 = vadd.f32 %v701, %v789
    %791 = vmatmul.bf16.gmra.mxu0 %v308
    %v792 = vpop.f32.mrf.mxu0
    %v793 = vadd.f32 %v704, %v792
    %v794 = vpop.f32.mrf.mxu0
    %v795 = vadd.f32 %v706, %v794
    %796 = vmatmul.bf16.gmra.mxu0 %v310
    %v797 = vpop.f32.mrf.mxu0
    %v798 = vadd.f32 %v709, %v797
    %v799 = vpop.f32.mrf.mxu0
    %v800 = vadd.f32 %v711, %v799
    %801 = vmatmul.bf16.gmra.mxu0 %v312
    %v802 = vpop.f32.mrf.mxu0
    %v803 = vadd.f32 %v714, %v802
    %v804 = vpop.f32.mrf.mxu0
    %v805 = vadd.f32 %v716, %v804
    %806 = vmatmul.bf16.gmra.mxu0 %v314
    %v807 = vpop.f32.mrf.mxu0
    %v808 = vadd.f32 %v719, %v807
    %v809 = vpop.f32.mrf.mxu0
    %v810 = vadd.f32 %v721, %v809
    %811 = vmatmul.bf16.gmra.mxu0 %v316
    %v812 = vpop.f32.mrf.mxu0
    %v813 = vadd.f32 %v724, %v812
    %v814 = vpop.f32.mrf.mxu0
    %v815 = vadd.f32 %v726, %v814
    %816 = vmatmul.bf16.gmra.mxu0 %v318
    %v817 = vpop.f32.mrf.mxu0
    %v818 = vadd.f32 %v729, %v817
    %v819 = vpop.f32.mrf.mxu0
    %v820 = vadd.f32 %v731, %v819
    %821 = vmatmul.bf16.gmra.mxu0 %v320
    %v822 = vpop.f32.mrf.mxu0
    %v823 = vadd.f32 %v734, %v822
    %v824 = vpop.f32.mrf.mxu0
    %v825 = vadd.f32 %v736, %v824
    %826 = vmatmul.bf16.gmra.mxu0 %v322
    %v827 = vpop.f32.mrf.mxu0
    %v828 = vadd.f32 %v739, %v827
    %v829 = vpop.f32.mrf.mxu0
    %v830 = vadd.f32 %v741, %v829
    %831 = vmatmul.bf16.gmra.mxu0 %v324
    %v832 = vpop.f32.mrf.mxu0
    %v833 = vadd.f32 %v744, %v832
    %v834 = vpop.f32.mrf.mxu0
    %v835 = vadd.f32 %v746, %v834
    %836 = vmatmul.bf16.gmra.mxu0 %v326
    %v837 = vpop.f32.mrf.mxu0
    %v838 = vadd.f32 %v749, %v837
    %v839 = vpop.f32.mrf.mxu0
    %v840 = vadd.f32 %v751, %v839
    %841 = vmatmul.bf16.gmra.mxu0 %v328
    %v842 = vpop.f32.mrf.mxu0
    %v843 = vadd.f32 %v754, %v842
    %v844 = vpop.f32.mrf.mxu0
    %v845 = vadd.f32 %v756, %v844
    %846 = vmatmul.bf16.gmra.mxu0 %v330
    %v847 = vpop.f32.mrf.mxu0
    %v848 = vadd.f32 %v759, %v847
    %v849 = vpop.f32.mrf.mxu0
    %v850 = vadd.f32 %v761, %v849
    %851 = vmatmul.bf16.gmra.mxu0 %v332
    %v852 = vpop.f32.mrf.mxu0
    %v853 = vadd.f32 %v764, %v852
    %v854 = vpop.f32.mrf.mxu0
    %v855 = vadd.f32 %v766, %v854
    %856 = vmatmul.bf16.gmra.mxu0 %v334
    %v857 = vpop.f32.mrf.mxu0
    %v858 = vadd.f32 %v769, %v857
    %v859 = vpop.f32.mrf.mxu0
    %v860 = vadd.f32 %v771, %v859
    %861 = vmatmul.bf16.gmra.mxu0 %v336
    %v862 = vpop.f32.mrf.mxu0
    %v863 = vadd.f32 %v774, %v862
    %v864 = vpop.f32.mrf.mxu0
    %v865 = vadd.f32 %v776, %v864
    %866 = vdwg.mxu0
    %867 = vmatpush.bf16.msra.mxu0 %v590
    %868 = vmatpush.bf16.msra.mxu0 %v586
    %869 = vmatpush.bf16.msra.mxu0 %v582
    %870 = vmatpush.bf16.msra.mxu0 %v578
    %871 = vmatpush.bf16.msra.mxu0 %v574
    %872 = vmatpush.bf16.msra.mxu0 %v570
    %873 = vmatpush.bf16.msra.mxu0 %v566
    %874 = vmatpush.bf16.msra.mxu0 %v562
    %875 = vmatmul.bf16.gmra.mxu0 %v305
    %v876 = vpop.f32.mrf.mxu0
    %v877 = vadd.f32 %v202, %v876
    %v878 = vpop.f32.mrf.mxu0
    %v879 = vadd.f32 %v202, %v878
    %880 = vmatmul.bf16.gmra.mxu0 %v307
    %v881 = vpop.f32.mrf.mxu0
    %v882 = vadd.f32 %v202, %v881
    %v883 = vpop.f32.mrf.mxu0
    %v884 = vadd.f32 %v202, %v883
    %885 = vmatmul.bf16.gmra.mxu0 %v309
    %v886 = vpop.f32.mrf.mxu0
    %v887 = vadd.f32 %v202, %v886
    %v888 = vpop.f32.mrf.mxu0
    %v889 = vadd.f32 %v202, %v888
    %890 = vmatmul.bf16.gmra.mxu0 %v311
    %v891 = vpop.f32.mrf.mxu0
    %v892 = vadd.f32 %v202, %v891
    %v893 = vpop.f32.mrf.mxu0
    %v894 = vadd.f32 %v202, %v893
    %895 = vmatmul.bf16.gmra.mxu0 %v313
    %v896 = vpop.f32.mrf.mxu0
    %v897 = vadd.f32 %v202, %v896
    %v898 = vpop.f32.mrf.mxu0
    %v899 = vadd.f32 %v202, %v898
    %900 = vmatmul.bf16.gmra.mxu0 %v315
    %v901 = vpop.f32.mrf.mxu0
    %v902 = vadd.f32 %v202, %v901
    %v903 = vpop.f32.mrf.mxu0
    %v904 = vadd.f32 %v202, %v903
    %905 = vmatmul.bf16.gmra.mxu0 %v317
    %v906 = vpop.f32.mrf.mxu0
    %v907 = vadd.f32 %v202, %v906
    %v908 = vpop.f32.mrf.mxu0
    %v909 = vadd.f32 %v202, %v908
    %910 = vmatmul.bf16.gmra.mxu0 %v319
    %v911 = vpop.f32.mrf.mxu0
    %v912 = vadd.f32 %v202, %v911
    %v913 = vpop.f32.mrf.mxu0
    %v914 = vadd.f32 %v202, %v913
    %915 = vmatmul.bf16.gmra.mxu0 %v321
    %v916 = vpop.f32.mrf.mxu0
    %v917 = vadd.f32 %v202, %v916
    %v918 = vpop.f32.mrf.mxu0
    %v919 = vadd.f32 %v202, %v918
    %920 = vmatmul.bf16.gmra.mxu0 %v323
    %v921 = vpop.f32.mrf.mxu0
    %v922 = vadd.f32 %v202, %v921
    %v923 = vpop.f32.mrf.mxu0
    %v924 = vadd.f32 %v202, %v923
    %925 = vmatmul.bf16.gmra.mxu0 %v325
    %v926 = vpop.f32.mrf.mxu0
    %v927 = vadd.f32 %v202, %v926
    %v928 = vpop.f32.mrf.mxu0
    %v929 = vadd.f32 %v202, %v928
    %930 = vmatmul.bf16.gmra.mxu0 %v327
    %v931 = vpop.f32.mrf.mxu0
    %v932 = vadd.f32 %v202, %v931
    %v933 = vpop.f32.mrf.mxu0
    %v934 = vadd.f32 %v202, %v933
    %935 = vmatmul.bf16.gmra.mxu0 %v329
    %v936 = vpop.f32.mrf.mxu0
    %v937 = vadd.f32 %v202, %v936
    %v938 = vpop.f32.mrf.mxu0
    %v939 = vadd.f32 %v202, %v938
    %940 = vmatmul.bf16.gmra.mxu0 %v331
    %v941 = vpop.f32.mrf.mxu0
    %v942 = vadd.f32 %v202, %v941
    %v943 = vpop.f32.mrf.mxu0
    %v944 = vadd.f32 %v202, %v943
    %945 = vmatmul.bf16.gmra.mxu0 %v333
    %v946 = vpop.f32.mrf.mxu0
    %v947 = vadd.f32 %v202, %v946
    %v948 = vpop.f32.mrf.mxu0
    %v949 = vadd.f32 %v202, %v948
    %950 = vmatmul.bf16.gmra.mxu0 %v335
    %v951 = vpop.f32.mrf.mxu0
    %v952 = vadd.f32 %v202, %v951
    %v953 = vpop.f32.mrf.mxu0
    %v954 = vadd.f32 %v202, %v953
    %955 = vdwg.mxu0
    %956 = vmatpush.bf16.msra.mxu0 %v622
    %957 = vmatpush.bf16.msra.mxu0 %v618
    %958 = vmatpush.bf16.msra.mxu0 %v614
    %959 = vmatpush.bf16.msra.mxu0 %v610
    %960 = vmatpush.bf16.msra.mxu0 %v606
    %961 = vmatpush.bf16.msra.mxu0 %v602
    %962 = vmatpush.bf16.msra.mxu0 %v598
    %963 = vmatpush.bf16.msra.mxu0 %v594
    %964 = vmatmul.bf16.gmra.mxu0 %v306
    %v965 = vpop.f32.mrf.mxu0
    %v966 = vadd.f32 %v877, %v965
    %v967 = vpop.f32.mrf.mxu0
    %v968 = vadd.f32 %v879, %v967
    %969 = vmatmul.bf16.gmra.mxu0 %v308
    %v970 = vpop.f32.mrf.mxu0
    %v971 = vadd.f32 %v882, %v970
    %v972 = vpop.f32.mrf.mxu0
    %v973 = vadd.f32 %v884, %v972
    %974 = vmatmul.bf16.gmra.mxu0 %v310
    %v975 = vpop.f32.mrf.mxu0
    %v976 = vadd.f32 %v887, %v975
    %v977 = vpop.f32.mrf.mxu0
    %v978 = vadd.f32 %v889, %v977
    %979 = vmatmul.bf16.gmra.mxu0 %v312
    %v980 = vpop.f32.mrf.mxu0
    %v981 = vadd.f32 %v892, %v980
    %v982 = vpop.f32.mrf.mxu0
    %v983 = vadd.f32 %v894, %v982
    %984 = vmatmul.bf16.gmra.mxu0 %v314
    %v985 = vpop.f32.mrf.mxu0
    %v986 = vadd.f32 %v897, %v985
    %v987 = vpop.f32.mrf.mxu0
    %v988 = vadd.f32 %v899, %v987
    %989 = vmatmul.bf16.gmra.mxu0 %v316
    %v990 = vpop.f32.mrf.mxu0
    %v991 = vadd.f32 %v902, %v990
    %v992 = vpop.f32.mrf.mxu0
    %v993 = vadd.f32 %v904, %v992
    %994 = vmatmul.bf16.gmra.mxu0 %v318
    %v995 = vpop.f32.mrf.mxu0
    %v996 = vadd.f32 %v907, %v995
    %v997 = vpop.f32.mrf.mxu0
    %v998 = vadd.f32 %v909, %v997
    %999 = vmatmul.bf16.gmra.mxu0 %v320
    %v1000 = vpop.f32.mrf.mxu0
    %v1001 = vadd.f32 %v912, %v1000
    %v1002 = vpop.f32.mrf.mxu0
    %v1003 = vadd.f32 %v914, %v1002
    %1004 = vmatmul.bf16.gmra.mxu0 %v322
    %v1005 = vpop.f32.mrf.mxu0
    %v1006 = vadd.f32 %v917, %v1005
    %v1007 = vpop.f32.mrf.mxu0
    %v1008 = vadd.f32 %v919, %v1007
    %1009 = vmatmul.bf16.gmra.mxu0 %v324
    %v1010 = vpop.f32.mrf.mxu0
    %v1011 = vadd.f32 %v922, %v1010
    %v1012 = vpop.f32.mrf.mxu0
    %v1013 = vadd.f32 %v924, %v1012
    %1014 = vmatmul.bf16.gmra.mxu0 %v326
    %v1015 = vpop.f32.mrf.mxu0
    %v1016 = vadd.f32 %v927, %v1015
    %v1017 = vpop.f32.mrf.mxu0
    %v1018 = vadd.f32 %v929, %v1017
    %1019 = vmatmul.bf16.gmra.mxu0 %v328
    %v1020 = vpop.f32.mrf.mxu0
    %v1021 = vadd.f32 %v932, %v1020
    %v1022 = vpop.f32.mrf.mxu0
    %v1023 = vadd.f32 %v934, %v1022
    %1024 = vmatmul.bf16.gmra.mxu0 %v330
    %v1025 = vpop.f32.mrf.mxu0
    %v1026 = vadd.f32 %v937, %v1025
    %v1027 = vpop.f32.mrf.mxu0
    %v1028 = vadd.f32 %v939, %v1027
    %1029 = vmatmul.bf16.gmra.mxu0 %v332
    %v1030 = vpop.f32.mrf.mxu0
    %v1031 = vadd.f32 %v942, %v1030
    %v1032 = vpop.f32.mrf.mxu0
    %v1033 = vadd.f32 %v944, %v1032
    %1034 = vmatmul.bf16.gmra.mxu0 %v334
    %v1035 = vpop.f32.mrf.mxu0
    %v1036 = vadd.f32 %v947, %v1035
    %v1037 = vpop.f32.mrf.mxu0
    %v1038 = vadd.f32 %v949, %v1037
    %1039 = vmatmul.bf16.gmra.mxu0 %v336
    %v1040 = vpop.f32.mrf.mxu0
    %v1041 = vadd.f32 %v952, %v1040
    %v1042 = vpop.f32.mrf.mxu0
    %v1043 = vadd.f32 %v954, %v1042
    %1044 = vdwg.mxu0
    %1045 = vmatpush.bf16.msra.mxu0 %v591
    %1046 = vmatpush.bf16.msra.mxu0 %v587
    %1047 = vmatpush.bf16.msra.mxu0 %v583
    %1048 = vmatpush.bf16.msra.mxu0 %v579
    %1049 = vmatpush.bf16.msra.mxu0 %v575
    %1050 = vmatpush.bf16.msra.mxu0 %v571
    %1051 = vmatpush.bf16.msra.mxu0 %v567
    %1052 = vmatpush.bf16.msra.mxu0 %v563
    %1053 = vmatmul.bf16.gmra.mxu0 %v305
    %v1054 = vpop.f32.mrf.mxu0
    %v1055 = vadd.f32 %v203, %v1054
    %v1056 = vpop.f32.mrf.mxu0
    %v1057 = vadd.f32 %v203, %v1056
    %1058 = vmatmul.bf16.gmra.mxu0 %v307
    %v1059 = vpop.f32.mrf.mxu0
    %v1060 = vadd.f32 %v203, %v1059
    %v1061 = vpop.f32.mrf.mxu0
    %v1062 = vadd.f32 %v203, %v1061
    %1063 = vmatmul.bf16.gmra.mxu0 %v309
    %v1064 = vpop.f32.mrf.mxu0
    %v1065 = vadd.f32 %v203, %v1064
    %v1066 = vpop.f32.mrf.mxu0
    %v1067 = vadd.f32 %v203, %v1066
    %1068 = vmatmul.bf16.gmra.mxu0 %v311
    %v1069 = vpop.f32.mrf.mxu0
    %v1070 = vadd.f32 %v203, %v1069
    %v1071 = vpop.f32.mrf.mxu0
    %v1072 = vadd.f32 %v203, %v1071
    %1073 = vmatmul.bf16.gmra.mxu0 %v313
    %v1074 = vpop.f32.mrf.mxu0
    %v1075 = vadd.f32 %v203, %v1074
    %v1076 = vpop.f32.mrf.mxu0
    %v1077 = vadd.f32 %v203, %v1076
    %1078 = vmatmul.bf16.gmra.mxu0 %v315
    %v1079 = vpop.f32.mrf.mxu0
    %v1080 = vadd.f32 %v203, %v1079
    %v1081 = vpop.f32.mrf.mxu0
    %v1082 = vadd.f32 %v203, %v1081
    %1083 = vmatmul.bf16.gmra.mxu0 %v317
    %v1084 = vpop.f32.mrf.mxu0
    %v1085 = vadd.f32 %v203, %v1084
    %v1086 = vpop.f32.mrf.mxu0
    %v1087 = vadd.f32 %v203, %v1086
    %1088 = vmatmul.bf16.gmra.mxu0 %v319
    %v1089 = vpop.f32.mrf.mxu0
    %v1090 = vadd.f32 %v203, %v1089
    %v1091 = vpop.f32.mrf.mxu0
    %v1092 = vadd.f32 %v203, %v1091
    %1093 = vmatmul.bf16.gmra.mxu0 %v321
    %v1094 = vpop.f32.mrf.mxu0
    %v1095 = vadd.f32 %v203, %v1094
    %v1096 = vpop.f32.mrf.mxu0
    %v1097 = vadd.f32 %v203, %v1096
    %1098 = vmatmul.bf16.gmra.mxu0 %v323
    %v1099 = vpop.f32.mrf.mxu0
    %v1100 = vadd.f32 %v203, %v1099
    %v1101 = vpop.f32.mrf.mxu0
    %v1102 = vadd.f32 %v203, %v1101
    %1103 = vmatmul.bf16.gmra.mxu0 %v325
    %v1104 = vpop.f32.mrf.mxu0
    %v1105 = vadd.f32 %v203, %v1104
    %v1106 = vpop.f32.mrf.mxu0
    %v1107 = vadd.f32 %v203, %v1106
    %1108 = vmatmul.bf16.gmra.mxu0 %v327
    %v1109 = vpop.f32.mrf.mxu0
    %v1110 = vadd.f32 %v203, %v1109
    %v1111 = vpop.f32.mrf.mxu0
    %v1112 = vadd.f32 %v203, %v1111
    %1113 = vmatmul.bf16.gmra.mxu0 %v329
    %v1114 = vpop.f32.mrf.mxu0
    %v1115 = vadd.f32 %v203, %v1114
    %v1116 = vpop.f32.mrf.mxu0
    %v1117 = vadd.f32 %v203, %v1116
    %1118 = vmatmul.bf16.gmra.mxu0 %v331
    %v1119 = vpop.f32.mrf.mxu0
    %v1120 = vadd.f32 %v203, %v1119
    %v1121 = vpop.f32.mrf.mxu0
    %v1122 = vadd.f32 %v203, %v1121
    %1123 = vmatmul.bf16.gmra.mxu0 %v333
    %v1124 = vpop.f32.mrf.mxu0
    %v1125 = vadd.f32 %v203, %v1124
    %v1126 = vpop.f32.mrf.mxu0
    %v1127 = vadd.f32 %v203, %v1126
    %1128 = vmatmul.bf16.gmra.mxu0 %v335
    %v1129 = vpop.f32.mrf.mxu0
    %v1130 = vadd.f32 %v203, %v1129
    %v1131 = vpop.f32.mrf.mxu0
    %v1132 = vadd.f32 %v203, %v1131
    %1133 = vdwg.mxu0
    %1134 = vmatpush.bf16.msra.mxu0 %v623
    %1135 = vmatpush.bf16.msra.mxu0 %v619
    %1136 = vmatpush.bf16.msra.mxu0 %v615
    %1137 = vmatpush.bf16.msra.mxu0 %v611
    %1138 = vmatpush.bf16.msra.mxu0 %v607
    %1139 = vmatpush.bf16.msra.mxu0 %v603
    %1140 = vmatpush.bf16.msra.mxu0 %v599
    %1141 = vmatpush.bf16.msra.mxu0 %v595
    %1142 = vmatmul.bf16.gmra.mxu0 %v306
    %v1143 = vpop.f32.mrf.mxu0
    %v1144 = vadd.f32 %v1055, %v1143
    %v1145 = vpop.f32.mrf.mxu0
    %v1146 = vadd.f32 %v1057, %v1145
    %1147 = vmatmul.bf16.gmra.mxu0 %v308
    %v1148 = vpop.f32.mrf.mxu0
    %v1149 = vadd.f32 %v1060, %v1148
    %v1150 = vpop.f32.mrf.mxu0
    %v1151 = vadd.f32 %v1062, %v1150
    %1152 = vmatmul.bf16.gmra.mxu0 %v310
    %v1153 = vpop.f32.mrf.mxu0
    %v1154 = vadd.f32 %v1065, %v1153
    %v1155 = vpop.f32.mrf.mxu0
    %v1156 = vadd.f32 %v1067, %v1155
    %1157 = vmatmul.bf16.gmra.mxu0 %v312
    %v1158 = vpop.f32.mrf.mxu0
    %v1159 = vadd.f32 %v1070, %v1158
    %v1160 = vpop.f32.mrf.mxu0
    %v1161 = vadd.f32 %v1072, %v1160
    %1162 = vmatmul.bf16.gmra.mxu0 %v314
    %v1163 = vpop.f32.mrf.mxu0
    %v1164 = vadd.f32 %v1075, %v1163
    %v1165 = vpop.f32.mrf.mxu0
    %v1166 = vadd.f32 %v1077, %v1165
    %1167 = vmatmul.bf16.gmra.mxu0 %v316
    %v1168 = vpop.f32.mrf.mxu0
    %v1169 = vadd.f32 %v1080, %v1168
    %v1170 = vpop.f32.mrf.mxu0
    %v1171 = vadd.f32 %v1082, %v1170
    %1172 = vmatmul.bf16.gmra.mxu0 %v318
    %v1173 = vpop.f32.mrf.mxu0
    %v1174 = vadd.f32 %v1085, %v1173
    %v1175 = vpop.f32.mrf.mxu0
    %v1176 = vadd.f32 %v1087, %v1175
    %1177 = vmatmul.bf16.gmra.mxu0 %v320
    %v1178 = vpop.f32.mrf.mxu0
    %v1179 = vadd.f32 %v1090, %v1178
    %v1180 = vpop.f32.mrf.mxu0
    %v1181 = vadd.f32 %v1092, %v1180
    %1182 = vmatmul.bf16.gmra.mxu0 %v322
    %v1183 = vpop.f32.mrf.mxu0
    %v1184 = vadd.f32 %v1095, %v1183
    %v1185 = vpop.f32.mrf.mxu0
    %v1186 = vadd.f32 %v1097, %v1185
    %1187 = vmatmul.bf16.gmra.mxu0 %v324
    %v1188 = vpop.f32.mrf.mxu0
    %v1189 = vadd.f32 %v1100, %v1188
    %v1190 = vpop.f32.mrf.mxu0
    %v1191 = vadd.f32 %v1102, %v1190
    %1192 = vmatmul.bf16.gmra.mxu0 %v326
    %v1193 = vpop.f32.mrf.mxu0
    %v1194 = vadd.f32 %v1105, %v1193
    %v1195 = vpop.f32.mrf.mxu0
    %v1196 = vadd.f32 %v1107, %v1195
    %1197 = vmatmul.bf16.gmra.mxu0 %v328
    %v1198 = vpop.f32.mrf.mxu0
    %v1199 = vadd.f32 %v1110, %v1198
    %v1200 = vpop.f32.mrf.mxu0
    %v1201 = vadd.f32 %v1112, %v1200
    %1202 = vmatmul.bf16.gmra.mxu0 %v330
    %v1203 = vpop.f32.mrf.mxu0
    %v1204 = vadd.f32 %v1115, %v1203
    %v1205 = vpop.f32.mrf.mxu0
    %v1206 = vadd.f32 %v1117, %v1205
    %1207 = vmatmul.bf16.gmra.mxu0 %v332
    %v1208 = vpop.f32.mrf.mxu0
    %v1209 = vadd.f32 %v1120, %v1208
    %v1210 = vpop.f32.mrf.mxu0
    %v1211 = vadd.f32 %v1122, %v1210
    %1212 = vmatmul.bf16.gmra.mxu0 %v334
    %v1213 = vpop.f32.mrf.mxu0
    %v1214 = vadd.f32 %v1125, %v1213
    %v1215 = vpop.f32.mrf.mxu0
    %v1216 = vadd.f32 %v1127, %v1215
    %1217 = vmatmul.bf16.gmra.mxu0 %v336
    %v1218 = vpop.f32.mrf.mxu0
    %v1219 = vadd.f32 %v1130, %v1218
    %v1220 = vpop.f32.mrf.mxu0
    %v1221 = vadd.f32 %v1132, %v1220
    %1222 = vdwg.mxu0
    %1223 = vmatpush.bf16.msra.mxu0 %v592
    %1224 = vmatpush.bf16.msra.mxu0 %v588
    %1225 = vmatpush.bf16.msra.mxu0 %v584
    %1226 = vmatpush.bf16.msra.mxu0 %v580
    %1227 = vmatpush.bf16.msra.mxu0 %v576
    %1228 = vmatpush.bf16.msra.mxu0 %v572
    %1229 = vmatpush.bf16.msra.mxu0 %v568
    %1230 = vmatpush.bf16.msra.mxu0 %v564
    %1231 = vmatmul.bf16.gmra.mxu0 %v305
    %v1232 = vpop.f32.mrf.mxu0
    %v1233 = vadd.f32 %v204, %v1232
    %v1234 = vpop.f32.mrf.mxu0
    %v1235 = vadd.f32 %v204, %v1234
    %1236 = vmatmul.bf16.gmra.mxu0 %v307
    %v1237 = vpop.f32.mrf.mxu0
    %v1238 = vadd.f32 %v204, %v1237
    %v1239 = vpop.f32.mrf.mxu0
    %v1240 = vadd.f32 %v204, %v1239
    %1241 = vmatmul.bf16.gmra.mxu0 %v309
    %v1242 = vpop.f32.mrf.mxu0
    %v1243 = vadd.f32 %v204, %v1242
    %v1244 = vpop.f32.mrf.mxu0
    %v1245 = vadd.f32 %v204, %v1244
    %1246 = vmatmul.bf16.gmra.mxu0 %v311
    %v1247 = vpop.f32.mrf.mxu0
    %v1248 = vadd.f32 %v204, %v1247
    %v1249 = vpop.f32.mrf.mxu0
    %v1250 = vadd.f32 %v204, %v1249
    %1251 = vmatmul.bf16.gmra.mxu0 %v313
    %v1252 = vpop.f32.mrf.mxu0
    %v1253 = vadd.f32 %v204, %v1252
    %v1254 = vpop.f32.mrf.mxu0
    %v1255 = vadd.f32 %v204, %v1254
    %1256 = vmatmul.bf16.gmra.mxu0 %v315
    %v1257 = vpop.f32.mrf.mxu0
    %v1258 = vadd.f32 %v204, %v1257
    %v1259 = vpop.f32.mrf.mxu0
    %v1260 = vadd.f32 %v204, %v1259
    %1261 = vmatmul.bf16.gmra.mxu0 %v317
    %v1262 = vpop.f32.mrf.mxu0
    %v1263 = vadd.f32 %v204, %v1262
    %v1264 = vpop.f32.mrf.mxu0
    %v1265 = vadd.f32 %v204, %v1264
    %1266 = vmatmul.bf16.gmra.mxu0 %v319
    %v1267 = vpop.f32.mrf.mxu0
    %v1268 = vadd.f32 %v204, %v1267
    %v1269 = vpop.f32.mrf.mxu0
    %v1270 = vadd.f32 %v204, %v1269
    %1271 = vmatmul.bf16.gmra.mxu0 %v321
    %v1272 = vpop.f32.mrf.mxu0
    %v1273 = vadd.f32 %v204, %v1272
    %v1274 = vpop.f32.mrf.mxu0
    %v1275 = vadd.f32 %v204, %v1274
    %1276 = vmatmul.bf16.gmra.mxu0 %v323
    %v1277 = vpop.f32.mrf.mxu0
    %v1278 = vadd.f32 %v204, %v1277
    %v1279 = vpop.f32.mrf.mxu0
    %v1280 = vadd.f32 %v204, %v1279
    %1281 = vmatmul.bf16.gmra.mxu0 %v325
    %v1282 = vpop.f32.mrf.mxu0
    %v1283 = vadd.f32 %v204, %v1282
    %v1284 = vpop.f32.mrf.mxu0
    %v1285 = vadd.f32 %v204, %v1284
    %1286 = vmatmul.bf16.gmra.mxu0 %v327
    %v1287 = vpop.f32.mrf.mxu0
    %v1288 = vadd.f32 %v204, %v1287
    %v1289 = vpop.f32.mrf.mxu0
    %v1290 = vadd.f32 %v204, %v1289
    %1291 = vmatmul.bf16.gmra.mxu0 %v329
    %v1292 = vpop.f32.mrf.mxu0
    %v1293 = vadd.f32 %v204, %v1292
    %v1294 = vpop.f32.mrf.mxu0
    %v1295 = vadd.f32 %v204, %v1294
    %1296 = vmatmul.bf16.gmra.mxu0 %v331
    %v1297 = vpop.f32.mrf.mxu0
    %v1298 = vadd.f32 %v204, %v1297
    %v1299 = vpop.f32.mrf.mxu0
    %v1300 = vadd.f32 %v204, %v1299
    %1301 = vmatmul.bf16.gmra.mxu0 %v333
    %v1302 = vpop.f32.mrf.mxu0
    %v1303 = vadd.f32 %v204, %v1302
    %v1304 = vpop.f32.mrf.mxu0
    %v1305 = vadd.f32 %v204, %v1304
    %1306 = vmatmul.bf16.gmra.mxu0 %v335
    %v1307 = vpop.f32.mrf.mxu0
    %v1308 = vadd.f32 %v204, %v1307
    %v1309 = vpop.f32.mrf.mxu0
    %v1310 = vadd.f32 %v204, %v1309
    %1311 = vdwg.mxu0
    %1312 = vmatpush.bf16.msra.mxu0 %v624
    %1313 = vmatpush.bf16.msra.mxu0 %v620
    %1314 = vmatpush.bf16.msra.mxu0 %v616
    %1315 = vmatpush.bf16.msra.mxu0 %v612
    %1316 = vmatpush.bf16.msra.mxu0 %v608
    %1317 = vmatpush.bf16.msra.mxu0 %v604
    %1318 = vmatpush.bf16.msra.mxu0 %v600
    %1319 = vmatpush.bf16.msra.mxu0 %v596
    %1320 = vmatmul.bf16.gmra.mxu0 %v306
    %v1321 = vpop.f32.mrf.mxu0
    %v1322 = vadd.f32 %v1233, %v1321
    %v1323 = vpop.f32.mrf.mxu0
    %v1324 = vadd.f32 %v1235, %v1323
    %1325 = vmatmul.bf16.gmra.mxu0 %v308
    %v1326 = vpop.f32.mrf.mxu0
    %v1327 = vadd.f32 %v1238, %v1326
    %v1328 = vpop.f32.mrf.mxu0
    %v1329 = vadd.f32 %v1240, %v1328
    %1330 = vmatmul.bf16.gmra.mxu0 %v310
    %v1331 = vpop.f32.mrf.mxu0
    %v1332 = vadd.f32 %v1243, %v1331
    %v1333 = vpop.f32.mrf.mxu0
    %v1334 = vadd.f32 %v1245, %v1333
    %1335 = vmatmul.bf16.gmra.mxu0 %v312
    %v1336 = vpop.f32.mrf.mxu0
    %v1337 = vadd.f32 %v1248, %v1336
    %v1338 = vpop.f32.mrf.mxu0
    %v1339 = vadd.f32 %v1250, %v1338
    %1340 = vmatmul.bf16.gmra.mxu0 %v314
    %v1341 = vpop.f32.mrf.mxu0
    %v1342 = vadd.f32 %v1253, %v1341
    %v1343 = vpop.f32.mrf.mxu0
    %v1344 = vadd.f32 %v1255, %v1343
    %1345 = vmatmul.bf16.gmra.mxu0 %v316
    %v1346 = vpop.f32.mrf.mxu0
    %v1347 = vadd.f32 %v1258, %v1346
    %v1348 = vpop.f32.mrf.mxu0
    %v1349 = vadd.f32 %v1260, %v1348
    %1350 = vmatmul.bf16.gmra.mxu0 %v318
    %v1351 = vpop.f32.mrf.mxu0
    %v1352 = vadd.f32 %v1263, %v1351
    %v1353 = vpop.f32.mrf.mxu0
    %v1354 = vadd.f32 %v1265, %v1353
    %1355 = vmatmul.bf16.gmra.mxu0 %v320
    %v1356 = vpop.f32.mrf.mxu0
    %v1357 = vadd.f32 %v1268, %v1356
    %v1358 = vpop.f32.mrf.mxu0
    %v1359 = vadd.f32 %v1270, %v1358
    %1360 = vmatmul.bf16.gmra.mxu0 %v322
    %v1361 = vpop.f32.mrf.mxu0
    %v1362 = vadd.f32 %v1273, %v1361
    %v1363 = vpop.f32.mrf.mxu0
    %v1364 = vadd.f32 %v1275, %v1363
    %1365 = vmatmul.bf16.gmra.mxu0 %v324
    %v1366 = vpop.f32.mrf.mxu0
    %v1367 = vadd.f32 %v1278, %v1366
    %v1368 = vpop.f32.mrf.mxu0
    %v1369 = vadd.f32 %v1280, %v1368
    %1370 = vmatmul.bf16.gmra.mxu0 %v326
    %v1371 = vpop.f32.mrf.mxu0
    %v1372 = vadd.f32 %v1283, %v1371
    %v1373 = vpop.f32.mrf.mxu0
    %v1374 = vadd.f32 %v1285, %v1373
    %1375 = vmatmul.bf16.gmra.mxu0 %v328
    %v1376 = vpop.f32.mrf.mxu0
    %v1377 = vadd.f32 %v1288, %v1376
    %v1378 = vpop.f32.mrf.mxu0
    %v1379 = vadd.f32 %v1290, %v1378
    %1380 = vmatmul.bf16.gmra.mxu0 %v330
    %v1381 = vpop.f32.mrf.mxu0
    %v1382 = vadd.f32 %v1293, %v1381
    %v1383 = vpop.f32.mrf.mxu0
    %v1384 = vadd.f32 %v1295, %v1383
    %1385 = vmatmul.bf16.gmra.mxu0 %v332
    %v1386 = vpop.f32.mrf.mxu0
    %v1387 = vadd.f32 %v1298, %v1386
    %v1388 = vpop.f32.mrf.mxu0
    %v1389 = vadd.f32 %v1300, %v1388
    %1390 = vmatmul.bf16.gmra.mxu0 %v334
    %v1391 = vpop.f32.mrf.mxu0
    %v1392 = vadd.f32 %v1303, %v1391
    %v1393 = vpop.f32.mrf.mxu0
    %v1394 = vadd.f32 %v1305, %v1393
    %1395 = vmatmul.bf16.gmra.mxu0 %v336
    %v1396 = vpop.f32.mrf.mxu0
    %v1397 = vadd.f32 %v1308, %v1396
    %v1398 = vpop.f32.mrf.mxu0
    %v1399 = vadd.f32 %v1310, %v1398
    %1400 = vdwg.mxu0
    %vm1401 = vcmp.gt.f32.partialorder %v788, 0.0
    %vm1402 = vcmp.gt.f32.partialorder %v966, 0.0
    %vm1403 = vcmp.gt.f32.partialorder %v1144, 0.0
    %vm1404 = vcmp.gt.f32.partialorder %v1322, 0.0
    %vm1405 = vcmp.gt.f32.partialorder %v790, 0.0
    %vm1406 = vcmp.gt.f32.partialorder %v968, 0.0
    %vm1407 = vcmp.gt.f32.partialorder %v1146, 0.0
    %vm1408 = vcmp.gt.f32.partialorder %v1324, 0.0
    %vm1409 = vcmp.gt.f32.partialorder %v793, 0.0
    %vm1410 = vcmp.gt.f32.partialorder %v971, 0.0
    %vm1411 = vcmp.gt.f32.partialorder %v1149, 0.0
    %vm1412 = vcmp.gt.f32.partialorder %v1327, 0.0
    %vm1413 = vcmp.gt.f32.partialorder %v795, 0.0
    %vm1414 = vcmp.gt.f32.partialorder %v973, 0.0
    %vm1415 = vcmp.gt.f32.partialorder %v1151, 0.0
    %vm1416 = vcmp.gt.f32.partialorder %v1329, 0.0
    %vm1417 = vcmp.gt.f32.partialorder %v798, 0.0
    %vm1418 = vcmp.gt.f32.partialorder %v976, 0.0
    %vm1419 = vcmp.gt.f32.partialorder %v1154, 0.0
    %vm1420 = vcmp.gt.f32.partialorder %v1332, 0.0
    %vm1421 = vcmp.gt.f32.partialorder %v800, 0.0
    %vm1422 = vcmp.gt.f32.partialorder %v978, 0.0
    %vm1423 = vcmp.gt.f32.partialorder %v1156, 0.0
    %vm1424 = vcmp.gt.f32.partialorder %v1334, 0.0
    %vm1425 = vcmp.gt.f32.partialorder %v803, 0.0
    %vm1426 = vcmp.gt.f32.partialorder %v981, 0.0
    %vm1427 = vcmp.gt.f32.partialorder %v1159, 0.0
    %vm1428 = vcmp.gt.f32.partialorder %v1337, 0.0
    %vm1429 = vcmp.gt.f32.partialorder %v805, 0.0
    %vm1430 = vcmp.gt.f32.partialorder %v983, 0.0
    %vm1431 = vcmp.gt.f32.partialorder %v1161, 0.0
    %vm1432 = vcmp.gt.f32.partialorder %v1339, 0.0
    %vm1433 = vcmp.gt.f32.partialorder %v808, 0.0
    %vm1434 = vcmp.gt.f32.partialorder %v986, 0.0
    %vm1435 = vcmp.gt.f32.partialorder %v1164, 0.0
    %vm1436 = vcmp.gt.f32.partialorder %v1342, 0.0
    %vm1437 = vcmp.gt.f32.partialorder %v810, 0.0
    %vm1438 = vcmp.gt.f32.partialorder %v988, 0.0
    %vm1439 = vcmp.gt.f32.partialorder %v1166, 0.0
    %vm1440 = vcmp.gt.f32.partialorder %v1344, 0.0
    %vm1441 = vcmp.gt.f32.partialorder %v813, 0.0
    %vm1442 = vcmp.gt.f32.partialorder %v991, 0.0
    %vm1443 = vcmp.gt.f32.partialorder %v1169, 0.0
    %vm1444 = vcmp.gt.f32.partialorder %v1347, 0.0
    %vm1445 = vcmp.gt.f32.partialorder %v815, 0.0
    %vm1446 = vcmp.gt.f32.partialorder %v993, 0.0
    %vm1447 = vcmp.gt.f32.partialorder %v1171, 0.0
    %vm1448 = vcmp.gt.f32.partialorder %v1349, 0.0
    %vm1449 = vcmp.gt.f32.partialorder %v818, 0.0
    %vm1450 = vcmp.gt.f32.partialorder %v996, 0.0
    %vm1451 = vcmp.gt.f32.partialorder %v1174, 0.0
    %vm1452 = vcmp.gt.f32.partialorder %v1352, 0.0
    %vm1453 = vcmp.gt.f32.partialorder %v820, 0.0
    %vm1454 = vcmp.gt.f32.partialorder %v998, 0.0
    %vm1455 = vcmp.gt.f32.partialorder %v1176, 0.0
    %vm1456 = vcmp.gt.f32.partialorder %v1354, 0.0
    %vm1457 = vcmp.gt.f32.partialorder %v823, 0.0
    %vm1458 = vcmp.gt.f32.partialorder %v1001, 0.0
    %vm1459 = vcmp.gt.f32.partialorder %v1179, 0.0
    %vm1460 = vcmp.gt.f32.partialorder %v1357, 0.0
    %vm1461 = vcmp.gt.f32.partialorder %v825, 0.0
    %vm1462 = vcmp.gt.f32.partialorder %v1003, 0.0
    %vm1463 = vcmp.gt.f32.partialorder %v1181, 0.0
    %vm1464 = vcmp.gt.f32.partialorder %v1359, 0.0
    %vm1465 = vcmp.gt.f32.partialorder %v828, 0.0
    %vm1466 = vcmp.gt.f32.partialorder %v1006, 0.0
    %vm1467 = vcmp.gt.f32.partialorder %v1184, 0.0
    %vm1468 = vcmp.gt.f32.partialorder %v1362, 0.0
    %vm1469 = vcmp.gt.f32.partialorder %v830, 0.0
    %vm1470 = vcmp.gt.f32.partialorder %v1008, 0.0
    %vm1471 = vcmp.gt.f32.partialorder %v1186, 0.0
    %vm1472 = vcmp.gt.f32.partialorder %v1364, 0.0
    %vm1473 = vcmp.gt.f32.partialorder %v833, 0.0
    %vm1474 = vcmp.gt.f32.partialorder %v1011, 0.0
    %vm1475 = vcmp.gt.f32.partialorder %v1189, 0.0
    %vm1476 = vcmp.gt.f32.partialorder %v1367, 0.0
    %vm1477 = vcmp.gt.f32.partialorder %v835, 0.0
    %vm1478 = vcmp.gt.f32.partialorder %v1013, 0.0
    %vm1479 = vcmp.gt.f32.partialorder %v1191, 0.0
    %vm1480 = vcmp.gt.f32.partialorder %v1369, 0.0
    %vm1481 = vcmp.gt.f32.partialorder %v838, 0.0
    %vm1482 = vcmp.gt.f32.partialorder %v1016, 0.0
    %vm1483 = vcmp.gt.f32.partialorder %v1194, 0.0
    %vm1484 = vcmp.gt.f32.partialorder %v1372, 0.0
    %vm1485 = vcmp.gt.f32.partialorder %v840, 0.0
    %vm1486 = vcmp.gt.f32.partialorder %v1018, 0.0
    %vm1487 = vcmp.gt.f32.partialorder %v1196, 0.0
    %vm1488 = vcmp.gt.f32.partialorder %v1374, 0.0
    %vm1489 = vcmp.gt.f32.partialorder %v843, 0.0
    %vm1490 = vcmp.gt.f32.partialorder %v1021, 0.0
    %vm1491 = vcmp.gt.f32.partialorder %v1199, 0.0
    %vm1492 = vcmp.gt.f32.partialorder %v1377, 0.0
    %vm1493 = vcmp.gt.f32.partialorder %v845, 0.0
    %vm1494 = vcmp.gt.f32.partialorder %v1023, 0.0
    %vm1495 = vcmp.gt.f32.partialorder %v1201, 0.0
    %vm1496 = vcmp.gt.f32.partialorder %v1379, 0.0
    %vm1497 = vcmp.gt.f32.partialorder %v848, 0.0
    %vm1498 = vcmp.gt.f32.partialorder %v1026, 0.0
    %vm1499 = vcmp.gt.f32.partialorder %v1204, 0.0
    %vm1500 = vcmp.gt.f32.partialorder %v1382, 0.0
    %vm1501 = vcmp.gt.f32.partialorder %v850, 0.0
    %vm1502 = vcmp.gt.f32.partialorder %v1028, 0.0
    %vm1503 = vcmp.gt.f32.partialorder %v1206, 0.0
    %vm1504 = vcmp.gt.f32.partialorder %v1384, 0.0
    %vm1505 = vcmp.gt.f32.partialorder %v853, 0.0
    %vm1506 = vcmp.gt.f32.partialorder %v1031, 0.0
    %vm1507 = vcmp.gt.f32.partialorder %v1209, 0.0
    %vm1508 = vcmp.gt.f32.partialorder %v1387, 0.0
    %vm1509 = vcmp.gt.f32.partialorder %v855, 0.0
    %vm1510 = vcmp.gt.f32.partialorder %v1033, 0.0
    %vm1511 = vcmp.gt.f32.partialorder %v1211, 0.0
    %vm1512 = vcmp.gt.f32.partialorder %v1389, 0.0
    %vm1513 = vcmp.gt.f32.partialorder %v858, 0.0
    %vm1514 = vcmp.gt.f32.partialorder %v1036, 0.0
    %vm1515 = vcmp.gt.f32.partialorder %v1214, 0.0
    %vm1516 = vcmp.gt.f32.partialorder %v1392, 0.0
    %vm1517 = vcmp.gt.f32.partialorder %v860, 0.0
    %vm1518 = vcmp.gt.f32.partialorder %v1038, 0.0
    %vm1519 = vcmp.gt.f32.partialorder %v1216, 0.0
    %vm1520 = vcmp.gt.f32.partialorder %v1394, 0.0
    %vm1521 = vcmp.gt.f32.partialorder %v863, 0.0
    %vm1522 = vcmp.gt.f32.partialorder %v1041, 0.0
    %vm1523 = vcmp.gt.f32.partialorder %v1219, 0.0
    %vm1524 = vcmp.gt.f32.partialorder %v1397, 0.0
    %vm1525 = vcmp.gt.f32.partialorder %v865, 0.0
    %vm1526 = vcmp.gt.f32.partialorder %v1043, 0.0
    %vm1527 = vcmp.gt.f32.partialorder %v1221, 0.0
    %vm1528 = vcmp.gt.f32.partialorder %v1399, 0.0
    %v1529 = vmin.f32 %v788, 0.0
    %v1530 = vmin.f32 %v966, 0.0
    %v1531 = vmin.f32 %v1144, 0.0
    %v1532 = vmin.f32 %v1322, 0.0
    %v1533 = vmin.f32 %v790, 0.0
    %v1534 = vmin.f32 %v968, 0.0
    %v1535 = vmin.f32 %v1146, 0.0
    %v1536 = vmin.f32 %v1324, 0.0
    %v1537 = vmin.f32 %v793, 0.0
    %v1538 = vmin.f32 %v971, 0.0
    %v1539 = vmin.f32 %v1149, 0.0
    %v1540 = vmin.f32 %v1327, 0.0
    %v1541 = vmin.f32 %v795, 0.0
    %v1542 = vmin.f32 %v973, 0.0
    %v1543 = vmin.f32 %v1151, 0.0
    %v1544 = vmin.f32 %v1329, 0.0
    %v1545 = vmin.f32 %v798, 0.0
    %v1546 = vmin.f32 %v976, 0.0
    %v1547 = vmin.f32 %v1154, 0.0
    %v1548 = vmin.f32 %v1332, 0.0
    %v1549 = vmin.f32 %v800, 0.0
    %v1550 = vmin.f32 %v978, 0.0
    %v1551 = vmin.f32 %v1156, 0.0
    %v1552 = vmin.f32 %v1334, 0.0
    %v1553 = vmin.f32 %v803, 0.0
    %v1554 = vmin.f32 %v981, 0.0
    %v1555 = vmin.f32 %v1159, 0.0
    %v1556 = vmin.f32 %v1337, 0.0
    %v1557 = vmin.f32 %v805, 0.0
    %v1558 = vmin.f32 %v983, 0.0
    %v1559 = vmin.f32 %v1161, 0.0
    %v1560 = vmin.f32 %v1339, 0.0
    %v1561 = vmin.f32 %v808, 0.0
    %v1562 = vmin.f32 %v986, 0.0
    %v1563 = vmin.f32 %v1164, 0.0
    %v1564 = vmin.f32 %v1342, 0.0
    %v1565 = vmin.f32 %v810, 0.0
    %v1566 = vmin.f32 %v988, 0.0
    %v1567 = vmin.f32 %v1166, 0.0
    %v1568 = vmin.f32 %v1344, 0.0
    %v1569 = vmin.f32 %v813, 0.0
    %v1570 = vmin.f32 %v991, 0.0
    %v1571 = vmin.f32 %v1169, 0.0
    %v1572 = vmin.f32 %v1347, 0.0
    %v1573 = vmin.f32 %v815, 0.0
    %v1574 = vmin.f32 %v993, 0.0
    %v1575 = vmin.f32 %v1171, 0.0
    %v1576 = vmin.f32 %v1349, 0.0
    %v1577 = vmin.f32 %v818, 0.0
    %v1578 = vmin.f32 %v996, 0.0
    %v1579 = vmin.f32 %v1174, 0.0
    %v1580 = vmin.f32 %v1352, 0.0
    %v1581 = vmin.f32 %v820, 0.0
    %v1582 = vmin.f32 %v998, 0.0
    %v1583 = vmin.f32 %v1176, 0.0
    %v1584 = vmin.f32 %v1354, 0.0
    %v1585 = vmin.f32 %v823, 0.0
    %v1586 = vmin.f32 %v1001, 0.0
    %v1587 = vmin.f32 %v1179, 0.0
    %v1588 = vmin.f32 %v1357, 0.0
    %v1589 = vmin.f32 %v825, 0.0
    %v1590 = vmin.f32 %v1003, 0.0
    %v1591 = vmin.f32 %v1181, 0.0
    %v1592 = vmin.f32 %v1359, 0.0
    %v1593 = vmin.f32 %v828, 0.0
    %v1594 = vmin.f32 %v1006, 0.0
    %v1595 = vmin.f32 %v1184, 0.0
    %v1596 = vmin.f32 %v1362, 0.0
    %v1597 = vmin.f32 %v830, 0.0
    %v1598 = vmin.f32 %v1008, 0.0
    %v1599 = vmin.f32 %v1186, 0.0
    %v1600 = vmin.f32 %v1364, 0.0
    %v1601 = vmin.f32 %v833, 0.0
    %v1602 = vmin.f32 %v1011, 0.0
    %v1603 = vmin.f32 %v1189, 0.0
    %v1604 = vmin.f32 %v1367, 0.0
    %v1605 = vmin.f32 %v835, 0.0
    %v1606 = vmin.f32 %v1013, 0.0
    %v1607 = vmin.f32 %v1191, 0.0
    %v1608 = vmin.f32 %v1369, 0.0
    %v1609 = vmin.f32 %v838, 0.0
    %v1610 = vmin.f32 %v1016, 0.0
    %v1611 = vmin.f32 %v1194, 0.0
    %v1612 = vmin.f32 %v1372, 0.0
    %v1613 = vmin.f32 %v840, 0.0
    %v1614 = vmin.f32 %v1018, 0.0
    %v1615 = vmin.f32 %v1196, 0.0
    %v1616 = vmin.f32 %v1374, 0.0
    %v1617 = vmin.f32 %v843, 0.0
    %v1618 = vmin.f32 %v1021, 0.0
    %v1619 = vmin.f32 %v1199, 0.0
    %v1620 = vmin.f32 %v1377, 0.0
    %v1621 = vmin.f32 %v845, 0.0
    %v1622 = vmin.f32 %v1023, 0.0
    %v1623 = vmin.f32 %v1201, 0.0
    %v1624 = vmin.f32 %v1379, 0.0
    %v1625 = vmin.f32 %v848, 0.0
    %v1626 = vmin.f32 %v1026, 0.0
    %v1627 = vmin.f32 %v1204, 0.0
    %v1628 = vmin.f32 %v1382, 0.0
    %v1629 = vmin.f32 %v850, 0.0
    %v1630 = vmin.f32 %v1028, 0.0
    %v1631 = vmin.f32 %v1206, 0.0
    %v1632 = vmin.f32 %v1384, 0.0
    %v1633 = vmin.f32 %v853, 0.0
    %v1634 = vmin.f32 %v1031, 0.0
    %v1635 = vmin.f32 %v1209, 0.0
    %v1636 = vmin.f32 %v1387, 0.0
    %v1637 = vmin.f32 %v855, 0.0
    %v1638 = vmin.f32 %v1033, 0.0
    %v1639 = vmin.f32 %v1211, 0.0
    %v1640 = vmin.f32 %v1389, 0.0
    %v1641 = vmin.f32 %v858, 0.0
    %v1642 = vmin.f32 %v1036, 0.0
    %v1643 = vmin.f32 %v1214, 0.0
    %v1644 = vmin.f32 %v1392, 0.0
    %v1645 = vmin.f32 %v860, 0.0
    %v1646 = vmin.f32 %v1038, 0.0
    %v1647 = vmin.f32 %v1216, 0.0
    %v1648 = vmin.f32 %v1394, 0.0
    %v1649 = vmin.f32 %v863, 0.0
    %v1650 = vmin.f32 %v1041, 0.0
    %v1651 = vmin.f32 %v1219, 0.0
    %v1652 = vmin.f32 %v1397, 0.0
    %v1653 = vmin.f32 %v865, 0.0
    %v1654 = vmin.f32 %v1043, 0.0
    %v1655 = vmin.f32 %v1221, 0.0
    %v1656 = vmin.f32 %v1399, 0.0
    %v1657 = vmul.f32 %v1529, 1.442695
    %v1658 = vpow.pop %v1657
    %v1659 = vmul.f32 %v1530, 1.442695
    %v1660 = vpow.pop %v1659
    %v1661 = vmul.f32 %v1531, 1.442695
    %v1662 = vpow.pop %v1661
    %v1663 = vmul.f32 %v1532, 1.442695
    %v1664 = vpow.pop %v1663
    %v1665 = vmul.f32 %v1533, 1.442695
    %v1666 = vpow.pop %v1665
    %v1667 = vmul.f32 %v1534, 1.442695
    %v1668 = vpow.pop %v1667
    %v1669 = vmul.f32 %v1535, 1.442695
    %v1670 = vpow.pop %v1669
    %v1671 = vmul.f32 %v1536, 1.442695
    %v1672 = vpow.pop %v1671
    %v1673 = vmul.f32 %v1537, 1.442695
    %v1674 = vpow.pop %v1673
    %v1675 = vmul.f32 %v1538, 1.442695
    %v1676 = vpow.pop %v1675
    %v1677 = vmul.f32 %v1539, 1.442695
    %v1678 = vpow.pop %v1677
    %v1679 = vmul.f32 %v1540, 1.442695
    %v1680 = vpow.pop %v1679
    %v1681 = vmul.f32 %v1541, 1.442695
    %v1682 = vpow.pop %v1681
    %v1683 = vmul.f32 %v1542, 1.442695
    %v1684 = vpow.pop %v1683
    %v1685 = vmul.f32 %v1543, 1.442695
    %v1686 = vpow.pop %v1685
    %v1687 = vmul.f32 %v1544, 1.442695
    %v1688 = vpow.pop %v1687
    %v1689 = vmul.f32 %v1545, 1.442695
    %v1690 = vpow.pop %v1689
    %v1691 = vmul.f32 %v1546, 1.442695
    %v1692 = vpow.pop %v1691
    %v1693 = vmul.f32 %v1547, 1.442695
    %v1694 = vpow.pop %v1693
    %v1695 = vmul.f32 %v1548, 1.442695
    %v1696 = vpow.pop %v1695
    %v1697 = vmul.f32 %v1549, 1.442695
    %v1698 = vpow.pop %v1697
    %v1699 = vmul.f32 %v1550, 1.442695
    %v1700 = vpow.pop %v1699
    %v1701 = vmul.f32 %v1551, 1.442695
    %v1702 = vpow.pop %v1701
    %v1703 = vmul.f32 %v1552, 1.442695
    %v1704 = vpow.pop %v1703
    %v1705 = vmul.f32 %v1553, 1.442695
    %v1706 = vpow.pop %v1705
    %v1707 = vmul.f32 %v1554, 1.442695
    %v1708 = vpow.pop %v1707
    %v1709 = vmul.f32 %v1555, 1.442695
    %v1710 = vpow.pop %v1709
    %v1711 = vmul.f32 %v1556, 1.442695
    %v1712 = vpow.pop %v1711
    %v1713 = vmul.f32 %v1557, 1.442695
    %v1714 = vpow.pop %v1713
    %v1715 = vmul.f32 %v1558, 1.442695
    %v1716 = vpow.pop %v1715
    %v1717 = vmul.f32 %v1559, 1.442695
    %v1718 = vpow.pop %v1717
    %v1719 = vmul.f32 %v1560, 1.442695
    %v1720 = vpow.pop %v1719
    %v1721 = vmul.f32 %v1561, 1.442695
    %v1722 = vpow.pop %v1721
    %v1723 = vmul.f32 %v1562, 1.442695
    %v1724 = vpow.pop %v1723
    %v1725 = vmul.f32 %v1563, 1.442695
    %v1726 = vpow.pop %v1725
    %v1727 = vmul.f32 %v1564, 1.442695
    %v1728 = vpow.pop %v1727
    %v1729 = vmul.f32 %v1565, 1.442695
    %v1730 = vpow.pop %v1729
    %v1731 = vmul.f32 %v1566, 1.442695
    %v1732 = vpow.pop %v1731
    %v1733 = vmul.f32 %v1567, 1.442695
    %v1734 = vpow.pop %v1733
    %v1735 = vmul.f32 %v1568, 1.442695
    %v1736 = vpow.pop %v1735
    %v1737 = vmul.f32 %v1569, 1.442695
    %v1738 = vpow.pop %v1737
    %v1739 = vmul.f32 %v1570, 1.442695
    %v1740 = vpow.pop %v1739
    %v1741 = vmul.f32 %v1571, 1.442695
    %v1742 = vpow.pop %v1741
    %v1743 = vmul.f32 %v1572, 1.442695
    %v1744 = vpow.pop %v1743
    %v1745 = vmul.f32 %v1573, 1.442695
    %v1746 = vpow.pop %v1745
    %v1747 = vmul.f32 %v1574, 1.442695
    %v1748 = vpow.pop %v1747
    %v1749 = vmul.f32 %v1575, 1.442695
    %v1750 = vpow.pop %v1749
    %v1751 = vmul.f32 %v1576, 1.442695
    %v1752 = vpow.pop %v1751
    %v1753 = vmul.f32 %v1577, 1.442695
    %v1754 = vpow.pop %v1753
    %v1755 = vmul.f32 %v1578, 1.442695
    %v1756 = vpow.pop %v1755
    %v1757 = vmul.f32 %v1579, 1.442695
    %v1758 = vpow.pop %v1757
    %v1759 = vmul.f32 %v1580, 1.442695
    %v1760 = vpow.pop %v1759
    %v1761 = vmul.f32 %v1581, 1.442695
    %v1762 = vpow.pop %v1761
    %v1763 = vmul.f32 %v1582, 1.442695
    %v1764 = vpow.pop %v1763
    %v1765 = vmul.f32 %v1583, 1.442695
    %v1766 = vpow.pop %v1765
    %v1767 = vmul.f32 %v1584, 1.442695
    %v1768 = vpow.pop %v1767
    %v1769 = vmul.f32 %v1585, 1.442695
    %v1770 = vpow.pop %v1769
    %v1771 = vmul.f32 %v1586, 1.442695
    %v1772 = vpow.pop %v1771
    %v1773 = vmul.f32 %v1587, 1.442695
    %v1774 = vpow.pop %v1773
    %v1775 = vmul.f32 %v1588, 1.442695
    %v1776 = vpow.pop %v1775
    %v1777 = vmul.f32 %v1589, 1.442695
    %v1778 = vpow.pop %v1777
    %v1779 = vmul.f32 %v1590, 1.442695
    %v1780 = vpow.pop %v1779
    %v1781 = vmul.f32 %v1591, 1.442695
    %v1782 = vpow.pop %v1781
    %v1783 = vmul.f32 %v1592, 1.442695
    %v1784 = vpow.pop %v1783
    %v1785 = vmul.f32 %v1593, 1.442695
    %v1786 = vpow.pop %v1785
    %v1787 = vmul.f32 %v1594, 1.442695
    %v1788 = vpow.pop %v1787
    %v1789 = vmul.f32 %v1595, 1.442695
    %v1790 = vpow.pop %v1789
    %v1791 = vmul.f32 %v1596, 1.442695
    %v1792 = vpow.pop %v1791
    %v1793 = vmul.f32 %v1597, 1.442695
    %v1794 = vpow.pop %v1793
    %v1795 = vmul.f32 %v1598, 1.442695
    %v1796 = vpow.pop %v1795
    %v1797 = vmul.f32 %v1599, 1.442695
    %v1798 = vpow.pop %v1797
    %v1799 = vmul.f32 %v1600, 1.442695
    %v1800 = vpow.pop %v1799
    %v1801 = vmul.f32 %v1601, 1.442695
    %v1802 = vpow.pop %v1801
    %v1803 = vmul.f32 %v1602, 1.442695
    %v1804 = vpow.pop %v1803
    %v1805 = vmul.f32 %v1603, 1.442695
    %v1806 = vpow.pop %v1805
    %v1807 = vmul.f32 %v1604, 1.442695
    %v1808 = vpow.pop %v1807
    %v1809 = vmul.f32 %v1605, 1.442695
    %v1810 = vpow.pop %v1809
    %v1811 = vmul.f32 %v1606, 1.442695
    %v1812 = vpow.pop %v1811
    %v1813 = vmul.f32 %v1607, 1.442695
    %v1814 = vpow.pop %v1813
    %v1815 = vmul.f32 %v1608, 1.442695
    %v1816 = vpow.pop %v1815
    %v1817 = vmul.f32 %v1609, 1.442695
    %v1818 = vpow.pop %v1817
    %v1819 = vmul.f32 %v1610, 1.442695
    %v1820 = vpow.pop %v1819
    %v1821 = vmul.f32 %v1611, 1.442695
    %v1822 = vpow.pop %v1821
    %v1823 = vmul.f32 %v1612, 1.442695
    %v1824 = vpow.pop %v1823
    %v1825 = vmul.f32 %v1613, 1.442695
    %v1826 = vpow.pop %v1825
    %v1827 = vmul.f32 %v1614, 1.442695
    %v1828 = vpow.pop %v1827
    %v1829 = vmul.f32 %v1615, 1.442695
    %v1830 = vpow.pop %v1829
    %v1831 = vmul.f32 %v1616, 1.442695
    %v1832 = vpow.pop %v1831
    %v1833 = vmul.f32 %v1617, 1.442695
    %v1834 = vpow.pop %v1833
    %v1835 = vmul.f32 %v1618, 1.442695
    %v1836 = vpow.pop %v1835
    %v1837 = vmul.f32 %v1619, 1.442695
    %v1838 = vpow.pop %v1837
    %v1839 = vmul.f32 %v1620, 1.442695
    %v1840 = vpow.pop %v1839
    %v1841 = vmul.f32 %v1621, 1.442695
    %v1842 = vpow.pop %v1841
    %v1843 = vmul.f32 %v1622, 1.442695
    %v1844 = vpow.pop %v1843
    %v1845 = vmul.f32 %v1623, 1.442695
    %v1846 = vpow.pop %v1845
    %v1847 = vmul.f32 %v1624, 1.442695
    %v1848 = vpow.pop %v1847
    %v1849 = vmul.f32 %v1625, 1.442695
    %v1850 = vpow.pop %v1849
    %v1851 = vmul.f32 %v1626, 1.442695
    %v1852 = vpow.pop %v1851
    %v1853 = vmul.f32 %v1627, 1.442695
    %v1854 = vpow.pop %v1853
    %v1855 = vmul.f32 %v1628, 1.442695
    %v1856 = vpow.pop %v1855
    %v1857 = vmul.f32 %v1629, 1.442695
    %v1858 = vpow.pop %v1857
    %v1859 = vmul.f32 %v1630, 1.442695
    %v1860 = vpow.pop %v1859
    %v1861 = vmul.f32 %v1631, 1.442695
    %v1862 = vpow.pop %v1861
    %v1863 = vmul.f32 %v1632, 1.442695
    %v1864 = vpow.pop %v1863
    %v1865 = vmul.f32 %v1633, 1.442695
    %v1866 = vpow.pop %v1865
    %v1867 = vmul.f32 %v1634, 1.442695
    %v1868 = vpow.pop %v1867
    %v1869 = vmul.f32 %v1635, 1.442695
    %v1870 = vpow.pop %v1869
    %v1871 = vmul.f32 %v1636, 1.442695
    %v1872 = vpow.pop %v1871
    %v1873 = vmul.f32 %v1637, 1.442695
    %v1874 = vpow.pop %v1873
    %v1875 = vmul.f32 %v1638, 1.442695
    %v1876 = vpow.pop %v1875
    %v1877 = vmul.f32 %v1639, 1.442695
    %v1878 = vpow.pop %v1877
    %v1879 = vmul.f32 %v1640, 1.442695
    %v1880 = vpow.pop %v1879
    %v1881 = vmul.f32 %v1641, 1.442695
    %v1882 = vpow.pop %v1881
    %v1883 = vmul.f32 %v1642, 1.442695
    %v1884 = vpow.pop %v1883
    %v1885 = vmul.f32 %v1643, 1.442695
    %v1886 = vpow.pop %v1885
    %v1887 = vmul.f32 %v1644, 1.442695
    %v1888 = vpow.pop %v1887
    %v1889 = vmul.f32 %v1645, 1.442695
    %v1890 = vpow.pop %v1889
    %v1891 = vmul.f32 %v1646, 1.442695
    %v1892 = vpow.pop %v1891
    %v1893 = vmul.f32 %v1647, 1.442695
    %v1894 = vpow.pop %v1893
    %v1895 = vmul.f32 %v1648, 1.442695
    %v1896 = vpow.pop %v1895
    %v1897 = vmul.f32 %v1649, 1.442695
    %v1898 = vpow.pop %v1897
    %v1899 = vmul.f32 %v1650, 1.442695
    %v1900 = vpow.pop %v1899
    %v1901 = vmul.f32 %v1651, 1.442695
    %v1902 = vpow.pop %v1901
    %v1903 = vmul.f32 %v1652, 1.442695
    %v1904 = vpow.pop %v1903
    %v1905 = vmul.f32 %v1653, 1.442695
    %v1906 = vpow.pop %v1905
    %v1907 = vmul.f32 %v1654, 1.442695
    %v1908 = vpow.pop %v1907
    %v1909 = vmul.f32 %v1655, 1.442695
    %v1910 = vpow.pop %v1909
    %v1911 = vmul.f32 %v1656, 1.442695
    %v1912 = vpow.pop %v1911
    %v1913 = vsub.f32 %v1658, 1.0
    %v1914 = vsub.f32 %v1660, 1.0
    %v1915 = vsub.f32 %v1662, 1.0
    %v1916 = vsub.f32 %v1664, 1.0
    %v1917 = vsub.f32 %v1666, 1.0
    %v1918 = vsub.f32 %v1668, 1.0
    %v1919 = vsub.f32 %v1670, 1.0
    %v1920 = vsub.f32 %v1672, 1.0
    %v1921 = vsub.f32 %v1674, 1.0
    %v1922 = vsub.f32 %v1676, 1.0
    %v1923 = vsub.f32 %v1678, 1.0
    %v1924 = vsub.f32 %v1680, 1.0
    %v1925 = vsub.f32 %v1682, 1.0
    %v1926 = vsub.f32 %v1684, 1.0
    %v1927 = vsub.f32 %v1686, 1.0
    %v1928 = vsub.f32 %v1688, 1.0
    %v1929 = vsub.f32 %v1690, 1.0
    %v1930 = vsub.f32 %v1692, 1.0
    %v1931 = vsub.f32 %v1694, 1.0
    %v1932 = vsub.f32 %v1696, 1.0
    %v1933 = vsub.f32 %v1698, 1.0
    %v1934 = vsub.f32 %v1700, 1.0
    %v1935 = vsub.f32 %v1702, 1.0
    %v1936 = vsub.f32 %v1704, 1.0
    %v1937 = vsub.f32 %v1706, 1.0
    %v1938 = vsub.f32 %v1708, 1.0
    %v1939 = vsub.f32 %v1710, 1.0
    %v1940 = vsub.f32 %v1712, 1.0
    %v1941 = vsub.f32 %v1714, 1.0
    %v1942 = vsub.f32 %v1716, 1.0
    %v1943 = vsub.f32 %v1718, 1.0
    %v1944 = vsub.f32 %v1720, 1.0
    %v1945 = vsub.f32 %v1722, 1.0
    %v1946 = vsub.f32 %v1724, 1.0
    %v1947 = vsub.f32 %v1726, 1.0
    %v1948 = vsub.f32 %v1728, 1.0
    %v1949 = vsub.f32 %v1730, 1.0
    %v1950 = vsub.f32 %v1732, 1.0
    %v1951 = vsub.f32 %v1734, 1.0
    %v1952 = vsub.f32 %v1736, 1.0
    %v1953 = vsub.f32 %v1738, 1.0
    %v1954 = vsub.f32 %v1740, 1.0
    %v1955 = vsub.f32 %v1742, 1.0
    %v1956 = vsub.f32 %v1744, 1.0
    %v1957 = vsub.f32 %v1746, 1.0
    %v1958 = vsub.f32 %v1748, 1.0
    %v1959 = vsub.f32 %v1750, 1.0
    %v1960 = vsub.f32 %v1752, 1.0
    %v1961 = vsub.f32 %v1754, 1.0
    %v1962 = vsub.f32 %v1756, 1.0
    %v1963 = vsub.f32 %v1758, 1.0
    %v1964 = vsub.f32 %v1760, 1.0
    %v1965 = vsub.f32 %v1762, 1.0
    %v1966 = vsub.f32 %v1764, 1.0
    %v1967 = vsub.f32 %v1766, 1.0
    %v1968 = vsub.f32 %v1768, 1.0
    %v1969 = vsub.f32 %v1770, 1.0
    %v1970 = vsub.f32 %v1772, 1.0
    %v1971 = vsub.f32 %v1774, 1.0
    %v1972 = vsub.f32 %v1776, 1.0
    %v1973 = vsub.f32 %v1778, 1.0
    %v1974 = vsub.f32 %v1780, 1.0
    %v1975 = vsub.f32 %v1782, 1.0
    %v1976 = vsub.f32 %v1784, 1.0
    %v1977 = vsub.f32 %v1786, 1.0
    %v1978 = vsub.f32 %v1788, 1.0
    %v1979 = vsub.f32 %v1790, 1.0
    %v1980 = vsub.f32 %v1792, 1.0
    %v1981 = vsub.f32 %v1794, 1.0
    %v1982 = vsub.f32 %v1796, 1.0
    %v1983 = vsub.f32 %v1798, 1.0
    %v1984 = vsub.f32 %v1800, 1.0
    %v1985 = vsub.f32 %v1802, 1.0
    %v1986 = vsub.f32 %v1804, 1.0
    %v1987 = vsub.f32 %v1806, 1.0
    %v1988 = vsub.f32 %v1808, 1.0
    %v1989 = vsub.f32 %v1810, 1.0
    %v1990 = vsub.f32 %v1812, 1.0
    %v1991 = vsub.f32 %v1814, 1.0
    %v1992 = vsub.f32 %v1816, 1.0
    %v1993 = vsub.f32 %v1818, 1.0
    %v1994 = vsub.f32 %v1820, 1.0
    %v1995 = vsub.f32 %v1822, 1.0
    %v1996 = vsub.f32 %v1824, 1.0
    %v1997 = vsub.f32 %v1826, 1.0
    %v1998 = vsub.f32 %v1828, 1.0
    %v1999 = vsub.f32 %v1830, 1.0
    %v2000 = vsub.f32 %v1832, 1.0
    %v2001 = vsub.f32 %v1834, 1.0
    %v2002 = vsub.f32 %v1836, 1.0
    %v2003 = vsub.f32 %v1838, 1.0
    %v2004 = vsub.f32 %v1840, 1.0
    %v2005 = vsub.f32 %v1842, 1.0
    %v2006 = vsub.f32 %v1844, 1.0
    %v2007 = vsub.f32 %v1846, 1.0
    %v2008 = vsub.f32 %v1848, 1.0
    %v2009 = vsub.f32 %v1850, 1.0
    %v2010 = vsub.f32 %v1852, 1.0
    %v2011 = vsub.f32 %v1854, 1.0
    %v2012 = vsub.f32 %v1856, 1.0
    %v2013 = vsub.f32 %v1858, 1.0
    %v2014 = vsub.f32 %v1860, 1.0
    %v2015 = vsub.f32 %v1862, 1.0
    %v2016 = vsub.f32 %v1864, 1.0
    %v2017 = vsub.f32 %v1866, 1.0
    %v2018 = vsub.f32 %v1868, 1.0
    %v2019 = vsub.f32 %v1870, 1.0
    %v2020 = vsub.f32 %v1872, 1.0
    %v2021 = vsub.f32 %v1874, 1.0
    %v2022 = vsub.f32 %v1876, 1.0
    %v2023 = vsub.f32 %v1878, 1.0
    %v2024 = vsub.f32 %v1880, 1.0
    %v2025 = vsub.f32 %v1882, 1.0
    %v2026 = vsub.f32 %v1884, 1.0
    %v2027 = vsub.f32 %v1886, 1.0
    %v2028 = vsub.f32 %v1888, 1.0
    %v2029 = vsub.f32 %v1890, 1.0
    %v2030 = vsub.f32 %v1892, 1.0
    %v2031 = vsub.f32 %v1894, 1.0
    %v2032 = vsub.f32 %v1896, 1.0
    %v2033 = vsub.f32 %v1898, 1.0
    %v2034 = vsub.f32 %v1900, 1.0
    %v2035 = vsub.f32 %v1902, 1.0
    %v2036 = vsub.f32 %v1904, 1.0
    %v2037 = vsub.f32 %v1906, 1.0
    %v2038 = vsub.f32 %v1908, 1.0
    %v2039 = vsub.f32 %v1910, 1.0
    %v2040 = vsub.f32 %v1912, 1.0
    %v2041 = vsel %vm1401, %v788, %v1913
    %v2042 = vsel %vm1402, %v966, %v1914
    %v2043 = vsel %vm1403, %v1144, %v1915
    %v2044 = vsel %vm1404, %v1322, %v1916
    %v2045 = vsel %vm1405, %v790, %v1917
    %v2046 = vsel %vm1406, %v968, %v1918
    %v2047 = vsel %vm1407, %v1146, %v1919
    %v2048 = vsel %vm1408, %v1324, %v1920
    %v2049 = vsel %vm1409, %v793, %v1921
    %v2050 = vsel %vm1410, %v971, %v1922
    %v2051 = vsel %vm1411, %v1149, %v1923
    %v2052 = vsel %vm1412, %v1327, %v1924
    %v2053 = vsel %vm1413, %v795, %v1925
    %v2054 = vsel %vm1414, %v973, %v1926
    %v2055 = vsel %vm1415, %v1151, %v1927
    %v2056 = vsel %vm1416, %v1329, %v1928
    %v2057 = vsel %vm1417, %v798, %v1929
    %v2058 = vsel %vm1418, %v976, %v1930
    %v2059 = vsel %vm1419, %v1154, %v1931
    %v2060 = vsel %vm1420, %v1332, %v1932
    %v2061 = vsel %vm1421, %v800, %v1933
    %v2062 = vsel %vm1422, %v978, %v1934
    %v2063 = vsel %vm1423, %v1156, %v1935
    %v2064 = vsel %vm1424, %v1334, %v1936
    %v2065 = vsel %vm1425, %v803, %v1937
    %v2066 = vsel %vm1426, %v981, %v1938
    %v2067 = vsel %vm1427, %v1159, %v1939
    %v2068 = vsel %vm1428, %v1337, %v1940
    %v2069 = vsel %vm1429, %v805, %v1941
    %v2070 = vsel %vm1430, %v983, %v1942
    %v2071 = vsel %vm1431, %v1161, %v1943
    %v2072 = vsel %vm1432, %v1339, %v1944
    %v2073 = vsel %vm1433, %v808, %v1945
    %v2074 = vsel %vm1434, %v986, %v1946
    %v2075 = vsel %vm1435, %v1164, %v1947
    %v2076 = vsel %vm1436, %v1342, %v1948
    %v2077 = vsel %vm1437, %v810, %v1949
    %v2078 = vsel %vm1438, %v988, %v1950
    %v2079 = vsel %vm1439, %v1166, %v1951
    %v2080 = vsel %vm1440, %v1344, %v1952
    %v2081 = vsel %vm1441, %v813, %v1953
    %v2082 = vsel %vm1442, %v991, %v1954
    %v2083 = vsel %vm1443, %v1169, %v1955
    %v2084 = vsel %vm1444, %v1347, %v1956
    %v2085 = vsel %vm1445, %v815, %v1957
    %v2086 = vsel %vm1446, %v993, %v1958
    %v2087 = vsel %vm1447, %v1171, %v1959
    %v2088 = vsel %vm1448, %v1349, %v1960
    %v2089 = vsel %vm1449, %v818, %v1961
    %v2090 = vsel %vm1450, %v996, %v1962
    %v2091 = vsel %vm1451, %v1174, %v1963
    %v2092 = vsel %vm1452, %v1352, %v1964
    %v2093 = vsel %vm1453, %v820, %v1965
    %v2094 = vsel %vm1454, %v998, %v1966
    %v2095 = vsel %vm1455, %v1176, %v1967
    %v2096 = vsel %vm1456, %v1354, %v1968
    %v2097 = vsel %vm1457, %v823, %v1969
    %v2098 = vsel %vm1458, %v1001, %v1970
    %v2099 = vsel %vm1459, %v1179, %v1971
    %v2100 = vsel %vm1460, %v1357, %v1972
    %v2101 = vsel %vm1461, %v825, %v1973
    %v2102 = vsel %vm1462, %v1003, %v1974
    %v2103 = vsel %vm1463, %v1181, %v1975
    %v2104 = vsel %vm1464, %v1359, %v1976
    %v2105 = vsel %vm1465, %v828, %v1977
    %v2106 = vsel %vm1466, %v1006, %v1978
    %v2107 = vsel %vm1467, %v1184, %v1979
    %v2108 = vsel %vm1468, %v1362, %v1980
    %v2109 = vsel %vm1469, %v830, %v1981
    %v2110 = vsel %vm1470, %v1008, %v1982
    %v2111 = vsel %vm1471, %v1186, %v1983
    %v2112 = vsel %vm1472, %v1364, %v1984
    %v2113 = vsel %vm1473, %v833, %v1985
    %v2114 = vsel %vm1474, %v1011, %v1986
    %v2115 = vsel %vm1475, %v1189, %v1987
    %v2116 = vsel %vm1476, %v1367, %v1988
    %v2117 = vsel %vm1477, %v835, %v1989
    %v2118 = vsel %vm1478, %v1013, %v1990
    %v2119 = vsel %vm1479, %v1191, %v1991
    %v2120 = vsel %vm1480, %v1369, %v1992
    %v2121 = vsel %vm1481, %v838, %v1993
    %v2122 = vsel %vm1482, %v1016, %v1994
    %v2123 = vsel %vm1483, %v1194, %v1995
    %v2124 = vsel %vm1484, %v1372, %v1996
    %v2125 = vsel %vm1485, %v840, %v1997
    %v2126 = vsel %vm1486, %v1018, %v1998
    %v2127 = vsel %vm1487, %v1196, %v1999
    %v2128 = vsel %vm1488, %v1374, %v2000
    %v2129 = vsel %vm1489, %v843, %v2001
    %v2130 = vsel %vm1490, %v1021, %v2002
    %v2131 = vsel %vm1491, %v1199, %v2003
    %v2132 = vsel %vm1492, %v1377, %v2004
    %v2133 = vsel %vm1493, %v845, %v2005
    %v2134 = vsel %vm1494, %v1023, %v2006
    %v2135 = vsel %vm1495, %v1201, %v2007
    %v2136 = vsel %vm1496, %v1379, %v2008
    %v2137 = vsel %vm1497, %v848, %v2009
    %v2138 = vsel %vm1498, %v1026, %v2010
    %v2139 = vsel %vm1499, %v1204, %v2011
    %v2140 = vsel %vm1500, %v1382, %v2012
    %v2141 = vsel %vm1501, %v850, %v2013
    %v2142 = vsel %vm1502, %v1028, %v2014
    %v2143 = vsel %vm1503, %v1206, %v2015
    %v2144 = vsel %vm1504, %v1384, %v2016
    %v2145 = vsel %vm1505, %v853, %v2017
    %v2146 = vsel %vm1506, %v1031, %v2018
    %v2147 = vsel %vm1507, %v1209, %v2019
    %v2148 = vsel %vm1508, %v1387, %v2020
    %v2149 = vsel %vm1509, %v855, %v2021
    %v2150 = vsel %vm1510, %v1033, %v2022
    %v2151 = vsel %vm1511, %v1211, %v2023
    %v2152 = vsel %vm1512, %v1389, %v2024
    %v2153 = vsel %vm1513, %v858, %v2025
    %v2154 = vsel %vm1514, %v1036, %v2026
    %v2155 = vsel %vm1515, %v1214, %v2027
    %v2156 = vsel %vm1516, %v1392, %v2028
    %v2157 = vsel %vm1517, %v860, %v2029
    %v2158 = vsel %vm1518, %v1038, %v2030
    %v2159 = vsel %vm1519, %v1216, %v2031
    %v2160 = vsel %vm1520, %v1394, %v2032
    %v2161 = vsel %vm1521, %v863, %v2033
    %v2162 = vsel %vm1522, %v1041, %v2034
    %v2163 = vsel %vm1523, %v1219, %v2035
    %v2164 = vsel %vm1524, %v1397, %v2036
    %v2165 = vsel %vm1525, %v865, %v2037
    %v2166 = vsel %vm1526, %v1043, %v2038
    %v2167 = vsel %vm1527, %v1221, %v2039
    %v2168 = vsel %vm1528, %v1399, %v2040
    %v2169 = vpack.c.bf16 %v2045, %v2041
    %v2170 = vpack.c.bf16 %v2046, %v2042
    %v2171 = vpack.c.bf16 %v2047, %v2043
    %v2172 = vpack.c.bf16 %v2048, %v2044
    %v2173 = vpack.c.bf16 %v2053, %v2049
    %v2174 = vpack.c.bf16 %v2054, %v2050
    %v2175 = vpack.c.bf16 %v2055, %v2051
    %v2176 = vpack.c.bf16 %v2056, %v2052
    %v2177 = vpack.c.bf16 %v2061, %v2057
    %v2178 = vpack.c.bf16 %v2062, %v2058
    %v2179 = vpack.c.bf16 %v2063, %v2059
    %v2180 = vpack.c.bf16 %v2064, %v2060
    %v2181 = vpack.c.bf16 %v2069, %v2065
    %v2182 = vpack.c.bf16 %v2070, %v2066
    %v2183 = vpack.c.bf16 %v2071, %v2067
    %v2184 = vpack.c.bf16 %v2072, %v2068
    %v2185 = vpack.c.bf16 %v2077, %v2073
    %v2186 = vpack.c.bf16 %v2078, %v2074
    %v2187 = vpack.c.bf16 %v2079, %v2075
    %v2188 = vpack.c.bf16 %v2080, %v2076
    %v2189 = vpack.c.bf16 %v2085, %v2081
    %v2190 = vpack.c.bf16 %v2086, %v2082
    %v2191 = vpack.c.bf16 %v2087, %v2083
    %v2192 = vpack.c.bf16 %v2088, %v2084
    %v2193 = vpack.c.bf16 %v2093, %v2089
    %v2194 = vpack.c.bf16 %v2094, %v2090
    %v2195 = vpack.c.bf16 %v2095, %v2091
    %v2196 = vpack.c.bf16 %v2096, %v2092
    %v2197 = vpack.c.bf16 %v2101, %v2097
    %v2198 = vpack.c.bf16 %v2102, %v2098
    %v2199 = vpack.c.bf16 %v2103, %v2099
    %v2200 = vpack.c.bf16 %v2104, %v2100
    %v2201 = vpack.c.bf16 %v2109, %v2105
    %v2202 = vpack.c.bf16 %v2110, %v2106
    %v2203 = vpack.c.bf16 %v2111, %v2107
    %v2204 = vpack.c.bf16 %v2112, %v2108
    %v2205 = vpack.c.bf16 %v2117, %v2113
    %v2206 = vpack.c.bf16 %v2118, %v2114
    %v2207 = vpack.c.bf16 %v2119, %v2115
    %v2208 = vpack.c.bf16 %v2120, %v2116
    %v2209 = vpack.c.bf16 %v2125, %v2121
    %v2210 = vpack.c.bf16 %v2126, %v2122
    %v2211 = vpack.c.bf16 %v2127, %v2123
    %v2212 = vpack.c.bf16 %v2128, %v2124
    %v2213 = vpack.c.bf16 %v2133, %v2129
    %v2214 = vpack.c.bf16 %v2134, %v2130
    %v2215 = vpack.c.bf16 %v2135, %v2131
    %v2216 = vpack.c.bf16 %v2136, %v2132
    %v2217 = vpack.c.bf16 %v2141, %v2137
    %v2218 = vpack.c.bf16 %v2142, %v2138
    %v2219 = vpack.c.bf16 %v2143, %v2139
    %v2220 = vpack.c.bf16 %v2144, %v2140
    %v2221 = vpack.c.bf16 %v2149, %v2145
    %v2222 = vpack.c.bf16 %v2150, %v2146
    %v2223 = vpack.c.bf16 %v2151, %v2147
    %v2224 = vpack.c.bf16 %v2152, %v2148
    %v2225 = vpack.c.bf16 %v2157, %v2153
    %v2226 = vpack.c.bf16 %v2158, %v2154
    %v2227 = vpack.c.bf16 %v2159, %v2155
    %v2228 = vpack.c.bf16 %v2160, %v2156
    %v2229 = vpack.c.bf16 %v2165, %v2161
    %v2230 = vpack.c.bf16 %v2166, %v2162
    %v2231 = vpack.c.bf16 %v2167, %v2163
    %v2232 = vpack.c.bf16 %v2168, %v2164
    %v2233 = vld [vmem:[#allocation8] sm:$0xf]
    %v2234 = vld [vmem:[#allocation8 + $0x4] sm:$0xf]
    %v2235 = vld [vmem:[#allocation8 + $0x8] sm:$0xf]
    %v2236 = vld [vmem:[#allocation8 + $0xc] sm:$0xf]
    %v2237 = vld [vmem:[#allocation8 + $0x10] sm:$0xf]
    %v2238 = vld [vmem:[#allocation8 + $0x14] sm:$0xf]
    %v2239 = vld [vmem:[#allocation8 + $0x18] sm:$0xf]
    %v2240 = vld [vmem:[#allocation8 + $0x1c] sm:$0xf]
    %v2241 = vld [vmem:[#allocation8 + $0x20] sm:$0xf]
    %v2242 = vld [vmem:[#allocation8 + $0x24] sm:$0xf]
    %v2243 = vld [vmem:[#allocation8 + $0x28] sm:$0xf]
    %v2244 = vld [vmem:[#allocation8 + $0x2c] sm:$0xf]
    %v2245 = vld [vmem:[#allocation8 + $0x30] sm:$0xf]
    %v2246 = vld [vmem:[#allocation8 + $0x34] sm:$0xf]
    %v2247 = vld [vmem:[#allocation8 + $0x38] sm:$0xf]
    %v2248 = vld [vmem:[#allocation8 + $0x3c] sm:$0xf]
    %v2249 = vld [vmem:[#allocation8 + $0x40] sm:$0xf]
    %v2250 = vld [vmem:[#allocation8 + $0x44] sm:$0xf]
    %v2251 = vld [vmem:[#allocation8 + $0x48] sm:$0xf]
    %v2252 = vld [vmem:[#allocation8 + $0x4c] sm:$0xf]
    %v2253 = vld [vmem:[#allocation8 + $0x50] sm:$0xf]
    %v2254 = vld [vmem:[#allocation8 + $0x54] sm:$0xf]
    %v2255 = vld [vmem:[#allocation8 + $0x58] sm:$0xf]
    %v2256 = vld [vmem:[#allocation8 + $0x5c] sm:$0xf]
    %v2257 = vld [vmem:[#allocation8 + $0x60] sm:$0xf]
    %v2258 = vld [vmem:[#allocation8 + $0x64] sm:$0xf]
    %v2259 = vld [vmem:[#allocation8 + $0x68] sm:$0xf]
    %v2260 = vld [vmem:[#allocation8 + $0x6c] sm:$0xf]
    %v2261 = vld [vmem:[#allocation8 + $0x70] sm:$0xf]
    %v2262 = vld [vmem:[#allocation8 + $0x74] sm:$0xf]
    %v2263 = vld [vmem:[#allocation8 + $0x78] sm:$0xf]
    %v2264 = vld [vmem:[#allocation8 + $0x7c] sm:$0xf]
    %v2265 = vld [vmem:[#allocation8 + $0x80] sm:$0xf]
    %v2266 = vld [vmem:[#allocation8 + $0x84] sm:$0xf]
    %v2267 = vld [vmem:[#allocation8 + $0x88] sm:$0xf]
    %v2268 = vld [vmem:[#allocation8 + $0x8c] sm:$0xf]
    %v2269 = vld [vmem:[#allocation8 + $0x90] sm:$0xf]
    %v2270 = vld [vmem:[#allocation8 + $0x94] sm:$0xf]
    %v2271 = vld [vmem:[#allocation8 + $0x98] sm:$0xf]
    %v2272 = vld [vmem:[#allocation8 + $0x9c] sm:$0xf]
    %v2273 = vld [vmem:[#allocation8 + $0xa0] sm:$0xf]
    %v2274 = vld [vmem:[#allocation8 + $0xa4] sm:$0xf]
    %v2275 = vld [vmem:[#allocation8 + $0xa8] sm:$0xf]
    %v2276 = vld [vmem:[#allocation8 + $0xac] sm:$0xf]
    %v2277 = vld [vmem:[#allocation8 + $0xb0] sm:$0xf]
    %v2278 = vld [vmem:[#allocation8 + $0xb4] sm:$0xf]
    %v2279 = vld [vmem:[#allocation8 + $0xb8] sm:$0xf]
    %v2280 = vld [vmem:[#allocation8 + $0xbc] sm:$0xf]
    %v2281 = vld [vmem:[#allocation8 + $0xc0] sm:$0xf]
    %v2282 = vld [vmem:[#allocation8 + $0xc4] sm:$0xf]
    %v2283 = vld [vmem:[#allocation8 + $0xc8] sm:$0xf]
    %v2284 = vld [vmem:[#allocation8 + $0xcc] sm:$0xf]
    %v2285 = vld [vmem:[#allocation8 + $0xd0] sm:$0xf]
    %v2286 = vld [vmem:[#allocation8 + $0xd4] sm:$0xf]
    %v2287 = vld [vmem:[#allocation8 + $0xd8] sm:$0xf]
    %v2288 = vld [vmem:[#allocation8 + $0xdc] sm:$0xf]
    %v2289 = vld [vmem:[#allocation8 + $0xe0] sm:$0xf]
    %v2290 = vld [vmem:[#allocation8 + $0xe4] sm:$0xf]
    %v2291 = vld [vmem:[#allocation8 + $0xe8] sm:$0xf]
    %v2292 = vld [vmem:[#allocation8 + $0xec] sm:$0xf]
    %v2293 = vld [vmem:[#allocation8 + $0xf0] sm:$0xf]
    %v2294 = vld [vmem:[#allocation8 + $0xf4] sm:$0xf]
    %v2295 = vld [vmem:[#allocation8 + $0xf8] sm:$0xf]
    %v2296 = vld [vmem:[#allocation8 + $0xfc] sm:$0xf]
    %v2297 = vld [vmem:[%s4] sm:$0x1]
    %v2299 = vperm.slane %v2297, 0
    %v2365 = vunpack.c.l.b16 %v2233
    %v2366 = vunpack.c.l.b16 %v2234
    %v2367 = vunpack.c.l.b16 %v2235
    %v2368 = vunpack.c.l.b16 %v2236
    %v2369 = vunpack.c.l.b16 %v2237
    %v2370 = vunpack.c.l.b16 %v2238
    %v2371 = vunpack.c.l.b16 %v2239
    %v2372 = vunpack.c.l.b16 %v2240
    %v2373 = vunpack.c.l.b16 %v2241
    %v2374 = vunpack.c.l.b16 %v2242
    %v2375 = vunpack.c.l.b16 %v2243
    %v2376 = vunpack.c.l.b16 %v2244
    %v2377 = vunpack.c.l.b16 %v2245
    %v2378 = vunpack.c.l.b16 %v2246
    %v2379 = vunpack.c.l.b16 %v2247
    %v2380 = vunpack.c.l.b16 %v2248
    %v2381 = vunpack.c.l.b16 %v2249
    %v2382 = vunpack.c.l.b16 %v2250
    %v2383 = vunpack.c.l.b16 %v2251
    %v2384 = vunpack.c.l.b16 %v2252
    %v2385 = vunpack.c.l.b16 %v2253
    %v2386 = vunpack.c.l.b16 %v2254
    %v2387 = vunpack.c.l.b16 %v2255
    %v2388 = vunpack.c.l.b16 %v2256
    %v2389 = vunpack.c.l.b16 %v2257
    %v2390 = vunpack.c.l.b16 %v2258
    %v2391 = vunpack.c.l.b16 %v2259
    %v2392 = vunpack.c.l.b16 %v2260
    %v2393 = vunpack.c.l.b16 %v2261
    %v2394 = vunpack.c.l.b16 %v2262
    %v2395 = vunpack.c.l.b16 %v2263
    %v2396 = vunpack.c.l.b16 %v2264
    %v2397 = vunpack.c.l.b16 %v2265
    %v2398 = vunpack.c.l.b16 %v2266
    %v2399 = vunpack.c.l.b16 %v2267
    %v2400 = vunpack.c.l.b16 %v2268
    %v2401 = vunpack.c.l.b16 %v2269
    %v2402 = vunpack.c.l.b16 %v2270
    %v2403 = vunpack.c.l.b16 %v2271
    %v2404 = vunpack.c.l.b16 %v2272
    %v2405 = vunpack.c.l.b16 %v2273
    %v2406 = vunpack.c.l.b16 %v2274
    %v2407 = vunpack.c.l.b16 %v2275
    %v2408 = vunpack.c.l.b16 %v2276
    %v2409 = vunpack.c.l.b16 %v2277
    %v2410 = vunpack.c.l.b16 %v2278
    %v2411 = vunpack.c.l.b16 %v2279
    %v2412 = vunpack.c.l.b16 %v2280
    %v2413 = vunpack.c.l.b16 %v2281
    %v2414 = vunpack.c.l.b16 %v2282
    %v2415 = vunpack.c.l.b16 %v2283
    %v2416 = vunpack.c.l.b16 %v2284
    %v2417 = vunpack.c.l.b16 %v2285
    %v2418 = vunpack.c.l.b16 %v2286
    %v2419 = vunpack.c.l.b16 %v2287
    %v2420 = vunpack.c.l.b16 %v2288
    %v2421 = vunpack.c.l.b16 %v2289
    %v2422 = vunpack.c.l.b16 %v2290
    %v2423 = vunpack.c.l.b16 %v2291
    %v2424 = vunpack.c.l.b16 %v2292
    %v2425 = vunpack.c.l.b16 %v2293
    %v2426 = vunpack.c.l.b16 %v2294
    %v2427 = vunpack.c.l.b16 %v2295
    %v2428 = vunpack.c.l.b16 %v2296
    %v2429 = vpack.c.b16 %v2366, %v2365
    %v2430 = vpack.c.b16 %v2368, %v2367
    %v2431 = vpack.c.b16 %v2370, %v2369
    %v2432 = vpack.c.b16 %v2372, %v2371
    %v2433 = vpack.c.b16 %v2374, %v2373
    %v2434 = vpack.c.b16 %v2376, %v2375
    %v2435 = vpack.c.b16 %v2378, %v2377
    %v2436 = vpack.c.b16 %v2380, %v2379
    %v2437 = vpack.c.b16 %v2382, %v2381
    %v2438 = vpack.c.b16 %v2384, %v2383
    %v2439 = vpack.c.b16 %v2386, %v2385
    %v2440 = vpack.c.b16 %v2388, %v2387
    %v2441 = vpack.c.b16 %v2390, %v2389
    %v2442 = vpack.c.b16 %v2392, %v2391
    %v2443 = vpack.c.b16 %v2394, %v2393
    %v2444 = vpack.c.b16 %v2396, %v2395
    %v2445 = vpack.c.b16 %v2398, %v2397
    %v2446 = vpack.c.b16 %v2400, %v2399
    %v2447 = vpack.c.b16 %v2402, %v2401
    %v2448 = vpack.c.b16 %v2404, %v2403
    %v2449 = vpack.c.b16 %v2406, %v2405
    %v2450 = vpack.c.b16 %v2408, %v2407
    %v2451 = vpack.c.b16 %v2410, %v2409
    %v2452 = vpack.c.b16 %v2412, %v2411
    %v2453 = vpack.c.b16 %v2414, %v2413
    %v2454 = vpack.c.b16 %v2416, %v2415
    %v2455 = vpack.c.b16 %v2418, %v2417
    %v2456 = vpack.c.b16 %v2420, %v2419
    %v2457 = vpack.c.b16 %v2422, %v2421
    %v2458 = vpack.c.b16 %v2424, %v2423
    %v2459 = vpack.c.b16 %v2426, %v2425
    %v2460 = vpack.c.b16 %v2428, %v2427
    %2493 = vmatpush.bf16.msra.mxu0 %v2436
    %2494 = vmatpush.bf16.msra.mxu0 %v2435
    %2495 = vmatpush.bf16.msra.mxu0 %v2434
    %2496 = vmatpush.bf16.msra.mxu0 %v2433
    %2497 = vmatpush.bf16.msra.mxu0 %v2432
    %2498 = vmatpush.bf16.msra.mxu0 %v2431
    %2499 = vmatpush.bf16.msra.mxu0 %v2430
    %2500 = vmatpush.bf16.msra.mxu0 %v2429
    %2501 = vmatmul.bf16.gmra.mxu0 %v2169
    %v2502 = vpop.f32.mrf.mxu0
    %v2503 = vadd.f32 %v2299, %v2502
    %v2504 = vpop.f32.mrf.mxu0
    %v2505 = vadd.f32 %v2299, %v2504
    %2506 = vmatmul.bf16.gmra.mxu0 %v2173
    %v2507 = vpop.f32.mrf.mxu0
    %v2508 = vadd.f32 %v2299, %v2507
    %v2509 = vpop.f32.mrf.mxu0
    %v2510 = vadd.f32 %v2299, %v2509
    %2511 = vmatmul.bf16.gmra.mxu0 %v2177
    %v2512 = vpop.f32.mrf.mxu0
    %v2513 = vadd.f32 %v2299, %v2512
    %v2514 = vpop.f32.mrf.mxu0
    %v2515 = vadd.f32 %v2299, %v2514
    %2516 = vmatmul.bf16.gmra.mxu0 %v2181
    %v2517 = vpop.f32.mrf.mxu0
    %v2518 = vadd.f32 %v2299, %v2517
    %v2519 = vpop.f32.mrf.mxu0
    %v2520 = vadd.f32 %v2299, %v2519
    %2521 = vmatmul.bf16.gmra.mxu0 %v2185
    %v2522 = vpop.f32.mrf.mxu0
    %v2523 = vadd.f32 %v2299, %v2522
    %v2524 = vpop.f32.mrf.mxu0
    %v2525 = vadd.f32 %v2299, %v2524
    %2526 = vmatmul.bf16.gmra.mxu0 %v2189
    %v2527 = vpop.f32.mrf.mxu0
    %v2528 = vadd.f32 %v2299, %v2527
    %v2529 = vpop.f32.mrf.mxu0
    %v2530 = vadd.f32 %v2299, %v2529
    %2531 = vmatmul.bf16.gmra.mxu0 %v2193
    %v2532 = vpop.f32.mrf.mxu0
    %v2533 = vadd.f32 %v2299, %v2532
    %v2534 = vpop.f32.mrf.mxu0
    %v2535 = vadd.f32 %v2299, %v2534
    %2536 = vmatmul.bf16.gmra.mxu0 %v2197
    %v2537 = vpop.f32.mrf.mxu0
    %v2538 = vadd.f32 %v2299, %v2537
    %v2539 = vpop.f32.mrf.mxu0
    %v2540 = vadd.f32 %v2299, %v2539
    %2541 = vmatmul.bf16.gmra.mxu0 %v2201
    %v2542 = vpop.f32.mrf.mxu0
    %v2543 = vadd.f32 %v2299, %v2542
    %v2544 = vpop.f32.mrf.mxu0
    %v2545 = vadd.f32 %v2299, %v2544
    %2546 = vmatmul.bf16.gmra.mxu0 %v2205
    %v2547 = vpop.f32.mrf.mxu0
    %v2548 = vadd.f32 %v2299, %v2547
    %v2549 = vpop.f32.mrf.mxu0
    %v2550 = vadd.f32 %v2299, %v2549
    %2551 = vmatmul.bf16.gmra.mxu0 %v2209
    %v2552 = vpop.f32.mrf.mxu0
    %v2553 = vadd.f32 %v2299, %v2552
    %v2554 = vpop.f32.mrf.mxu0
    %v2555 = vadd.f32 %v2299, %v2554
    %2556 = vmatmul.bf16.gmra.mxu0 %v2213
    %v2557 = vpop.f32.mrf.mxu0
    %v2558 = vadd.f32 %v2299, %v2557
    %v2559 = vpop.f32.mrf.mxu0
    %v2560 = vadd.f32 %v2299, %v2559
    %2561 = vmatmul.bf16.gmra.mxu0 %v2217
    %v2562 = vpop.f32.mrf.mxu0
    %v2563 = vadd.f32 %v2299, %v2562
    %v2564 = vpop.f32.mrf.mxu0
    %v2565 = vadd.f32 %v2299, %v2564
    %2566 = vmatmul.bf16.gmra.mxu0 %v2221
    %v2567 = vpop.f32.mrf.mxu0
    %v2568 = vadd.f32 %v2299, %v2567
    %v2569 = vpop.f32.mrf.mxu0
    %v2570 = vadd.f32 %v2299, %v2569
    %2571 = vmatmul.bf16.gmra.mxu0 %v2225
    %v2572 = vpop.f32.mrf.mxu0
    %v2573 = vadd.f32 %v2299, %v2572
    %v2574 = vpop.f32.mrf.mxu0
    %v2575 = vadd.f32 %v2299, %v2574
    %2576 = vmatmul.bf16.gmra.mxu0 %v2229
    %v2577 = vpop.f32.mrf.mxu0
    %v2578 = vadd.f32 %v2299, %v2577
    %v2579 = vpop.f32.mrf.mxu0
    %v2580 = vadd.f32 %v2299, %v2579
    %2581 = vdwg.mxu0
    %2582 = vmatpush.bf16.msra.mxu0 %v2444
    %2583 = vmatpush.bf16.msra.mxu0 %v2443
    %2584 = vmatpush.bf16.msra.mxu0 %v2442
    %2585 = vmatpush.bf16.msra.mxu0 %v2441
    %2586 = vmatpush.bf16.msra.mxu0 %v2440
    %2587 = vmatpush.bf16.msra.mxu0 %v2439
    %2588 = vmatpush.bf16.msra.mxu0 %v2438
    %2589 = vmatpush.bf16.msra.mxu0 %v2437
    %2590 = vmatmul.bf16.gmra.mxu0 %v2170
    %v2591 = vpop.f32.mrf.mxu0
    %v2592 = vadd.f32 %v2503, %v2591
    %v2593 = vpop.f32.mrf.mxu0
    %v2594 = vadd.f32 %v2505, %v2593
    %2595 = vmatmul.bf16.gmra.mxu0 %v2174
    %v2596 = vpop.f32.mrf.mxu0
    %v2597 = vadd.f32 %v2508, %v2596
    %v2598 = vpop.f32.mrf.mxu0
    %v2599 = vadd.f32 %v2510, %v2598
    %2600 = vmatmul.bf16.gmra.mxu0 %v2178
    %v2601 = vpop.f32.mrf.mxu0
    %v2602 = vadd.f32 %v2513, %v2601
    %v2603 = vpop.f32.mrf.mxu0
    %v2604 = vadd.f32 %v2515, %v2603
    %2605 = vmatmul.bf16.gmra.mxu0 %v2182
    %v2606 = vpop.f32.mrf.mxu0
    %v2607 = vadd.f32 %v2518, %v2606
    %v2608 = vpop.f32.mrf.mxu0
    %v2609 = vadd.f32 %v2520, %v2608
    %2610 = vmatmul.bf16.gmra.mxu0 %v2186
    %v2611 = vpop.f32.mrf.mxu0
    %v2612 = vadd.f32 %v2523, %v2611
    %v2613 = vpop.f32.mrf.mxu0
    %v2614 = vadd.f32 %v2525, %v2613
    %2615 = vmatmul.bf16.gmra.mxu0 %v2190
    %v2616 = vpop.f32.mrf.mxu0
    %v2617 = vadd.f32 %v2528, %v2616
    %v2618 = vpop.f32.mrf.mxu0
    %v2619 = vadd.f32 %v2530, %v2618
    %2620 = vmatmul.bf16.gmra.mxu0 %v2194
    %v2621 = vpop.f32.mrf.mxu0
    %v2622 = vadd.f32 %v2533, %v2621
    %v2623 = vpop.f32.mrf.mxu0
    %v2624 = vadd.f32 %v2535, %v2623
    %2625 = vmatmul.bf16.gmra.mxu0 %v2198
    %v2626 = vpop.f32.mrf.mxu0
    %v2627 = vadd.f32 %v2538, %v2626
    %v2628 = vpop.f32.mrf.mxu0
    %v2629 = vadd.f32 %v2540, %v2628
    %2630 = vmatmul.bf16.gmra.mxu0 %v2202
    %v2631 = vpop.f32.mrf.mxu0
    %v2632 = vadd.f32 %v2543, %v2631
    %v2633 = vpop.f32.mrf.mxu0
    %v2634 = vadd.f32 %v2545, %v2633
    %2635 = vmatmul.bf16.gmra.mxu0 %v2206
    %v2636 = vpop.f32.mrf.mxu0
    %v2637 = vadd.f32 %v2548, %v2636
    %v2638 = vpop.f32.mrf.mxu0
    %v2639 = vadd.f32 %v2550, %v2638
    %2640 = vmatmul.bf16.gmra.mxu0 %v2210
    %v2641 = vpop.f32.mrf.mxu0
    %v2642 = vadd.f32 %v2553, %v2641
    %v2643 = vpop.f32.mrf.mxu0
    %v2644 = vadd.f32 %v2555, %v2643
    %2645 = vmatmul.bf16.gmra.mxu0 %v2214
    %v2646 = vpop.f32.mrf.mxu0
    %v2647 = vadd.f32 %v2558, %v2646
    %v2648 = vpop.f32.mrf.mxu0
    %v2649 = vadd.f32 %v2560, %v2648
    %2650 = vmatmul.bf16.gmra.mxu0 %v2218
    %v2651 = vpop.f32.mrf.mxu0
    %v2652 = vadd.f32 %v2563, %v2651
    %v2653 = vpop.f32.mrf.mxu0
    %v2654 = vadd.f32 %v2565, %v2653
    %2655 = vmatmul.bf16.gmra.mxu0 %v2222
    %v2656 = vpop.f32.mrf.mxu0
    %v2657 = vadd.f32 %v2568, %v2656
    %v2658 = vpop.f32.mrf.mxu0
    %v2659 = vadd.f32 %v2570, %v2658
    %2660 = vmatmul.bf16.gmra.mxu0 %v2226
    %v2661 = vpop.f32.mrf.mxu0
    %v2662 = vadd.f32 %v2573, %v2661
    %v2663 = vpop.f32.mrf.mxu0
    %v2664 = vadd.f32 %v2575, %v2663
    %2665 = vmatmul.bf16.gmra.mxu0 %v2230
    %v2666 = vpop.f32.mrf.mxu0
    %v2667 = vadd.f32 %v2578, %v2666
    %v2668 = vpop.f32.mrf.mxu0
    %v2669 = vadd.f32 %v2580, %v2668
    %2670 = vdwg.mxu0
    %2671 = vmatpush.bf16.msra.mxu0 %v2452
    %2672 = vmatpush.bf16.msra.mxu0 %v2451
    %2673 = vmatpush.bf16.msra.mxu0 %v2450
    %2674 = vmatpush.bf16.msra.mxu0 %v2449
    %2675 = vmatpush.bf16.msra.mxu0 %v2448
    %2676 = vmatpush.bf16.msra.mxu0 %v2447
    %2677 = vmatpush.bf16.msra.mxu0 %v2446
    %2678 = vmatpush.bf16.msra.mxu0 %v2445
    %2679 = vmatmul.bf16.gmra.mxu0 %v2171
    %v2680 = vpop.f32.mrf.mxu0
    %v2681 = vadd.f32 %v2592, %v2680
    %v2682 = vpop.f32.mrf.mxu0
    %v2683 = vadd.f32 %v2594, %v2682
    %2684 = vmatmul.bf16.gmra.mxu0 %v2175
    %v2685 = vpop.f32.mrf.mxu0
    %v2686 = vadd.f32 %v2597, %v2685
    %v2687 = vpop.f32.mrf.mxu0
    %v2688 = vadd.f32 %v2599, %v2687
    %2689 = vmatmul.bf16.gmra.mxu0 %v2179
    %v2690 = vpop.f32.mrf.mxu0
    %v2691 = vadd.f32 %v2602, %v2690
    %v2692 = vpop.f32.mrf.mxu0
    %v2693 = vadd.f32 %v2604, %v2692
    %2694 = vmatmul.bf16.gmra.mxu0 %v2183
    %v2695 = vpop.f32.mrf.mxu0
    %v2696 = vadd.f32 %v2607, %v2695
    %v2697 = vpop.f32.mrf.mxu0
    %v2698 = vadd.f32 %v2609, %v2697
    %2699 = vmatmul.bf16.gmra.mxu0 %v2187
    %v2700 = vpop.f32.mrf.mxu0
    %v2701 = vadd.f32 %v2612, %v2700
    %v2702 = vpop.f32.mrf.mxu0
    %v2703 = vadd.f32 %v2614, %v2702
    %2704 = vmatmul.bf16.gmra.mxu0 %v2191
    %v2705 = vpop.f32.mrf.mxu0
    %v2706 = vadd.f32 %v2617, %v2705
    %v2707 = vpop.f32.mrf.mxu0
    %v2708 = vadd.f32 %v2619, %v2707
    %2709 = vmatmul.bf16.gmra.mxu0 %v2195
    %v2710 = vpop.f32.mrf.mxu0
    %v2711 = vadd.f32 %v2622, %v2710
    %v2712 = vpop.f32.mrf.mxu0
    %v2713 = vadd.f32 %v2624, %v2712
    %2714 = vmatmul.bf16.gmra.mxu0 %v2199
    %v2715 = vpop.f32.mrf.mxu0
    %v2716 = vadd.f32 %v2627, %v2715
    %v2717 = vpop.f32.mrf.mxu0
    %v2718 = vadd.f32 %v2629, %v2717
    %2719 = vmatmul.bf16.gmra.mxu0 %v2203
    %v2720 = vpop.f32.mrf.mxu0
    %v2721 = vadd.f32 %v2632, %v2720
    %v2722 = vpop.f32.mrf.mxu0
    %v2723 = vadd.f32 %v2634, %v2722
    %2724 = vmatmul.bf16.gmra.mxu0 %v2207
    %v2725 = vpop.f32.mrf.mxu0
    %v2726 = vadd.f32 %v2637, %v2725
    %v2727 = vpop.f32.mrf.mxu0
    %v2728 = vadd.f32 %v2639, %v2727
    %2729 = vmatmul.bf16.gmra.mxu0 %v2211
    %v2730 = vpop.f32.mrf.mxu0
    %v2731 = vadd.f32 %v2642, %v2730
    %v2732 = vpop.f32.mrf.mxu0
    %v2733 = vadd.f32 %v2644, %v2732
    %2734 = vmatmul.bf16.gmra.mxu0 %v2215
    %v2735 = vpop.f32.mrf.mxu0
    %v2736 = vadd.f32 %v2647, %v2735
    %v2737 = vpop.f32.mrf.mxu0
    %v2738 = vadd.f32 %v2649, %v2737
    %2739 = vmatmul.bf16.gmra.mxu0 %v2219
    %v2740 = vpop.f32.mrf.mxu0
    %v2741 = vadd.f32 %v2652, %v2740
    %v2742 = vpop.f32.mrf.mxu0
    %v2743 = vadd.f32 %v2654, %v2742
    %2744 = vmatmul.bf16.gmra.mxu0 %v2223
    %v2745 = vpop.f32.mrf.mxu0
    %v2746 = vadd.f32 %v2657, %v2745
    %v2747 = vpop.f32.mrf.mxu0
    %v2748 = vadd.f32 %v2659, %v2747
    %2749 = vmatmul.bf16.gmra.mxu0 %v2227
    %v2750 = vpop.f32.mrf.mxu0
    %v2751 = vadd.f32 %v2662, %v2750
    %v2752 = vpop.f32.mrf.mxu0
    %v2753 = vadd.f32 %v2664, %v2752
    %2754 = vmatmul.bf16.gmra.mxu0 %v2231
    %v2755 = vpop.f32.mrf.mxu0
    %v2756 = vadd.f32 %v2667, %v2755
    %v2757 = vpop.f32.mrf.mxu0
    %v2758 = vadd.f32 %v2669, %v2757
    %2759 = vdwg.mxu0
    %2760 = vmatpush.bf16.msra.mxu0 %v2460
    %2761 = vmatpush.bf16.msra.mxu0 %v2459
    %2762 = vmatpush.bf16.msra.mxu0 %v2458
    %2763 = vmatpush.bf16.msra.mxu0 %v2457
    %2764 = vmatpush.bf16.msra.mxu0 %v2456
    %2765 = vmatpush.bf16.msra.mxu0 %v2455
    %2766 = vmatpush.bf16.msra.mxu0 %v2454
    %2767 = vmatpush.bf16.msra.mxu0 %v2453
    %2768 = vmatmul.bf16.gmra.mxu0 %v2172
    %v2769 = vpop.f32.mrf.mxu0
    %v2770 = vadd.f32 %v2681, %v2769
    %v2771 = vpop.f32.mrf.mxu0
    %v2772 = vadd.f32 %v2683, %v2771
    %2773 = vmatmul.bf16.gmra.mxu0 %v2176
    %v2774 = vpop.f32.mrf.mxu0
    %v2775 = vadd.f32 %v2686, %v2774
    %v2776 = vpop.f32.mrf.mxu0
    %v2777 = vadd.f32 %v2688, %v2776
    %2778 = vmatmul.bf16.gmra.mxu0 %v2180
    %v2779 = vpop.f32.mrf.mxu0
    %v2780 = vadd.f32 %v2691, %v2779
    %v2781 = vpop.f32.mrf.mxu0
    %v2782 = vadd.f32 %v2693, %v2781
    %2783 = vmatmul.bf16.gmra.mxu0 %v2184
    %v2784 = vpop.f32.mrf.mxu0
    %v2785 = vadd.f32 %v2696, %v2784
    %v2786 = vpop.f32.mrf.mxu0
    %v2787 = vadd.f32 %v2698, %v2786
    %2788 = vmatmul.bf16.gmra.mxu0 %v2188
    %v2789 = vpop.f32.mrf.mxu0
    %v2790 = vadd.f32 %v2701, %v2789
    %v2791 = vpop.f32.mrf.mxu0
    %v2792 = vadd.f32 %v2703, %v2791
    %2793 = vmatmul.bf16.gmra.mxu0 %v2192
    %v2794 = vpop.f32.mrf.mxu0
    %v2795 = vadd.f32 %v2706, %v2794
    %v2796 = vpop.f32.mrf.mxu0
    %v2797 = vadd.f32 %v2708, %v2796
    %2798 = vmatmul.bf16.gmra.mxu0 %v2196
    %v2799 = vpop.f32.mrf.mxu0
    %v2800 = vadd.f32 %v2711, %v2799
    %v2801 = vpop.f32.mrf.mxu0
    %v2802 = vadd.f32 %v2713, %v2801
    %2803 = vmatmul.bf16.gmra.mxu0 %v2200
    %v2804 = vpop.f32.mrf.mxu0
    %v2805 = vadd.f32 %v2716, %v2804
    %v2806 = vpop.f32.mrf.mxu0
    %v2807 = vadd.f32 %v2718, %v2806
    %2808 = vmatmul.bf16.gmra.mxu0 %v2204
    %v2809 = vpop.f32.mrf.mxu0
    %v2810 = vadd.f32 %v2721, %v2809
    %v2811 = vpop.f32.mrf.mxu0
    %v2812 = vadd.f32 %v2723, %v2811
    %2813 = vmatmul.bf16.gmra.mxu0 %v2208
    %v2814 = vpop.f32.mrf.mxu0
    %v2815 = vadd.f32 %v2726, %v2814
    %v2816 = vpop.f32.mrf.mxu0
    %v2817 = vadd.f32 %v2728, %v2816
    %2818 = vmatmul.bf16.gmra.mxu0 %v2212
    %v2819 = vpop.f32.mrf.mxu0
    %v2820 = vadd.f32 %v2731, %v2819
    %v2821 = vpop.f32.mrf.mxu0
    %v2822 = vadd.f32 %v2733, %v2821
    %2823 = vmatmul.bf16.gmra.mxu0 %v2216
    %v2824 = vpop.f32.mrf.mxu0
    %v2825 = vadd.f32 %v2736, %v2824
    %v2826 = vpop.f32.mrf.mxu0
    %v2827 = vadd.f32 %v2738, %v2826
    %2828 = vmatmul.bf16.gmra.mxu0 %v2220
    %v2829 = vpop.f32.mrf.mxu0
    %v2830 = vadd.f32 %v2741, %v2829
    %v2831 = vpop.f32.mrf.mxu0
    %v2832 = vadd.f32 %v2743, %v2831
    %2833 = vmatmul.bf16.gmra.mxu0 %v2224
    %v2834 = vpop.f32.mrf.mxu0
    %v2835 = vadd.f32 %v2746, %v2834
    %v2836 = vpop.f32.mrf.mxu0
    %v2837 = vadd.f32 %v2748, %v2836
    %2838 = vmatmul.bf16.gmra.mxu0 %v2228
    %v2839 = vpop.f32.mrf.mxu0
    %v2840 = vadd.f32 %v2751, %v2839
    %v2841 = vpop.f32.mrf.mxu0
    %v2842 = vadd.f32 %v2753, %v2841
    %2843 = vmatmul.bf16.gmra.mxu0 %v2232
    %v2844 = vpop.f32.mrf.mxu0
    %v2845 = vadd.f32 %v2756, %v2844
    %v2846 = vpop.f32.mrf.mxu0
    %v2847 = vadd.f32 %v2758, %v2846
    %2848 = vdwg.mxu0
    %vm2849 = vcmp.gt.f32.partialorder %v2770, 0.0
    %vm2850 = vcmp.gt.f32.partialorder %v2772, 0.0
    %vm2851 = vcmp.gt.f32.partialorder %v2775, 0.0
    %vm2852 = vcmp.gt.f32.partialorder %v2777, 0.0
    %vm2853 = vcmp.gt.f32.partialorder %v2780, 0.0
    %vm2854 = vcmp.gt.f32.partialorder %v2782, 0.0
    %vm2855 = vcmp.gt.f32.partialorder %v2785, 0.0
    %vm2856 = vcmp.gt.f32.partialorder %v2787, 0.0
    %vm2857 = vcmp.gt.f32.partialorder %v2790, 0.0
    %vm2858 = vcmp.gt.f32.partialorder %v2792, 0.0
    %vm2859 = vcmp.gt.f32.partialorder %v2795, 0.0
    %vm2860 = vcmp.gt.f32.partialorder %v2797, 0.0
    %vm2861 = vcmp.gt.f32.partialorder %v2800, 0.0
    %vm2862 = vcmp.gt.f32.partialorder %v2802, 0.0
    %vm2863 = vcmp.gt.f32.partialorder %v2805, 0.0
    %vm2864 = vcmp.gt.f32.partialorder %v2807, 0.0
    %vm2865 = vcmp.gt.f32.partialorder %v2810, 0.0
    %vm2866 = vcmp.gt.f32.partialorder %v2812, 0.0
    %vm2867 = vcmp.gt.f32.partialorder %v2815, 0.0
    %vm2868 = vcmp.gt.f32.partialorder %v2817, 0.0
    %vm2869 = vcmp.gt.f32.partialorder %v2820, 0.0
    %vm2870 = vcmp.gt.f32.partialorder %v2822, 0.0
    %vm2871 = vcmp.gt.f32.partialorder %v2825, 0.0
    %vm2872 = vcmp.gt.f32.partialorder %v2827, 0.0
    %vm2873 = vcmp.gt.f32.partialorder %v2830, 0.0
    %vm2874 = vcmp.gt.f32.partialorder %v2832, 0.0
    %vm2875 = vcmp.gt.f32.partialorder %v2835, 0.0
    %vm2876 = vcmp.gt.f32.partialorder %v2837, 0.0
    %vm2877 = vcmp.gt.f32.partialorder %v2840, 0.0
    %vm2878 = vcmp.gt.f32.partialorder %v2842, 0.0
    %vm2879 = vcmp.gt.f32.partialorder %v2845, 0.0
    %vm2880 = vcmp.gt.f32.partialorder %v2847, 0.0
    %v2881 = vmin.f32 %v2770, 0.0
    %v2882 = vmin.f32 %v2772, 0.0
    %v2883 = vmin.f32 %v2775, 0.0
    %v2884 = vmin.f32 %v2777, 0.0
    %v2885 = vmin.f32 %v2780, 0.0
    %v2886 = vmin.f32 %v2782, 0.0
    %v2887 = vmin.f32 %v2785, 0.0
    %v2888 = vmin.f32 %v2787, 0.0
    %v2889 = vmin.f32 %v2790, 0.0
    %v2890 = vmin.f32 %v2792, 0.0
    %v2891 = vmin.f32 %v2795, 0.0
    %v2892 = vmin.f32 %v2797, 0.0
    %v2893 = vmin.f32 %v2800, 0.0
    %v2894 = vmin.f32 %v2802, 0.0
    %v2895 = vmin.f32 %v2805, 0.0
    %v2896 = vmin.f32 %v2807, 0.0
    %v2897 = vmin.f32 %v2810, 0.0
    %v2898 = vmin.f32 %v2812, 0.0
    %v2899 = vmin.f32 %v2815, 0.0
    %v2900 = vmin.f32 %v2817, 0.0
    %v2901 = vmin.f32 %v2820, 0.0
    %v2902 = vmin.f32 %v2822, 0.0
    %v2903 = vmin.f32 %v2825, 0.0
    %v2904 = vmin.f32 %v2827, 0.0
    %v2905 = vmin.f32 %v2830, 0.0
    %v2906 = vmin.f32 %v2832, 0.0
    %v2907 = vmin.f32 %v2835, 0.0
    %v2908 = vmin.f32 %v2837, 0.0
    %v2909 = vmin.f32 %v2840, 0.0
    %v2910 = vmin.f32 %v2842, 0.0
    %v2911 = vmin.f32 %v2845, 0.0
    %v2912 = vmin.f32 %v2847, 0.0
    %v2913 = vmul.f32 %v2881, 1.442695
    %v2914 = vpow.pop %v2913
    %v2915 = vmul.f32 %v2882, 1.442695
    %v2916 = vpow.pop %v2915
    %v2917 = vmul.f32 %v2883, 1.442695
    %v2918 = vpow.pop %v2917
    %v2919 = vmul.f32 %v2884, 1.442695
    %v2920 = vpow.pop %v2919
    %v2921 = vmul.f32 %v2885, 1.442695
    %v2922 = vpow.pop %v2921
    %v2923 = vmul.f32 %v2886, 1.442695
    %v2924 = vpow.pop %v2923
    %v2925 = vmul.f32 %v2887, 1.442695
    %v2926 = vpow.pop %v2925
    %v2927 = vmul.f32 %v2888, 1.442695
    %v2928 = vpow.pop %v2927
    %v2929 = vmul.f32 %v2889, 1.442695
    %v2930 = vpow.pop %v2929
    %v2931 = vmul.f32 %v2890, 1.442695
    %v2932 = vpow.pop %v2931
    %v2933 = vmul.f32 %v2891, 1.442695
    %v2934 = vpow.pop %v2933
    %v2935 = vmul.f32 %v2892, 1.442695
    %v2936 = vpow.pop %v2935
    %v2937 = vmul.f32 %v2893, 1.442695
    %v2938 = vpow.pop %v2937
    %v2939 = vmul.f32 %v2894, 1.442695
    %v2940 = vpow.pop %v2939
    %v2941 = vmul.f32 %v2895, 1.442695
    %v2942 = vpow.pop %v2941
    %v2943 = vmul.f32 %v2896, 1.442695
    %v2944 = vpow.pop %v2943
    %v2945 = vmul.f32 %v2897, 1.442695
    %v2946 = vpow.pop %v2945
    %v2947 = vmul.f32 %v2898, 1.442695
    %v2948 = vpow.pop %v2947
    %v2949 = vmul.f32 %v2899, 1.442695
    %v2950 = vpow.pop %v2949
    %v2951 = vmul.f32 %v2900, 1.442695
    %v2952 = vpow.pop %v2951
    %v2953 = vmul.f32 %v2901, 1.442695
    %v2954 = vpow.pop %v2953
    %v2955 = vmul.f32 %v2902, 1.442695
    %v2956 = vpow.pop %v2955
    %v2957 = vmul.f32 %v2903, 1.442695
    %v2958 = vpow.pop %v2957
    %v2959 = vmul.f32 %v2904, 1.442695
    %v2960 = vpow.pop %v2959
    %v2961 = vmul.f32 %v2905, 1.442695
    %v2962 = vpow.pop %v2961
    %v2963 = vmul.f32 %v2906, 1.442695
    %v2964 = vpow.pop %v2963
    %v2965 = vmul.f32 %v2907, 1.442695
    %v2966 = vpow.pop %v2965
    %v2967 = vmul.f32 %v2908, 1.442695
    %v2968 = vpow.pop %v2967
    %v2969 = vmul.f32 %v2909, 1.442695
    %v2970 = vpow.pop %v2969
    %v2971 = vmul.f32 %v2910, 1.442695
    %v2972 = vpow.pop %v2971
    %v2973 = vmul.f32 %v2911, 1.442695
    %v2974 = vpow.pop %v2973
    %v2975 = vmul.f32 %v2912, 1.442695
    %v2976 = vpow.pop %v2975
    %v2977 = vsub.f32 %v2914, 1.0
    %v2978 = vsub.f32 %v2916, 1.0
    %v2979 = vsub.f32 %v2918, 1.0
    %v2980 = vsub.f32 %v2920, 1.0
    %v2981 = vsub.f32 %v2922, 1.0
    %v2982 = vsub.f32 %v2924, 1.0
    %v2983 = vsub.f32 %v2926, 1.0
    %v2984 = vsub.f32 %v2928, 1.0
    %v2985 = vsub.f32 %v2930, 1.0
    %v2986 = vsub.f32 %v2932, 1.0
    %v2987 = vsub.f32 %v2934, 1.0
    %v2988 = vsub.f32 %v2936, 1.0
    %v2989 = vsub.f32 %v2938, 1.0
    %v2990 = vsub.f32 %v2940, 1.0
    %v2991 = vsub.f32 %v2942, 1.0
    %v2992 = vsub.f32 %v2944, 1.0
    %v2993 = vsub.f32 %v2946, 1.0
    %v2994 = vsub.f32 %v2948, 1.0
    %v2995 = vsub.f32 %v2950, 1.0
    %v2996 = vsub.f32 %v2952, 1.0
    %v2997 = vsub.f32 %v2954, 1.0
    %v2998 = vsub.f32 %v2956, 1.0
    %v2999 = vsub.f32 %v2958, 1.0
    %v3000 = vsub.f32 %v2960, 1.0
    %v3001 = vsub.f32 %v2962, 1.0
    %v3002 = vsub.f32 %v2964, 1.0
    %v3003 = vsub.f32 %v2966, 1.0
    %v3004 = vsub.f32 %v2968, 1.0
    %v3005 = vsub.f32 %v2970, 1.0
    %v3006 = vsub.f32 %v2972, 1.0
    %v3007 = vsub.f32 %v2974, 1.0
    %v3008 = vsub.f32 %v2976, 1.0
    %v3009 = vsel %vm2849, %v2770, %v2977
    %v3010 = vsel %vm2850, %v2772, %v2978
    %v3011 = vsel %vm2851, %v2775, %v2979
    %v3012 = vsel %vm2852, %v2777, %v2980
    %v3013 = vsel %vm2853, %v2780, %v2981
    %v3014 = vsel %vm2854, %v2782, %v2982
    %v3015 = vsel %vm2855, %v2785, %v2983
    %v3016 = vsel %vm2856, %v2787, %v2984
    %v3017 = vsel %vm2857, %v2790, %v2985
    %v3018 = vsel %vm2858, %v2792, %v2986
    %v3019 = vsel %vm2859, %v2795, %v2987
    %v3020 = vsel %vm2860, %v2797, %v2988
    %v3021 = vsel %vm2861, %v2800, %v2989
    %v3022 = vsel %vm2862, %v2802, %v2990
    %v3023 = vsel %vm2863, %v2805, %v2991
    %v3024 = vsel %vm2864, %v2807, %v2992
    %v3025 = vsel %vm2865, %v2810, %v2993
    %v3026 = vsel %vm2866, %v2812, %v2994
    %v3027 = vsel %vm2867, %v2815, %v2995
    %v3028 = vsel %vm2868, %v2817, %v2996
    %v3029 = vsel %vm2869, %v2820, %v2997
    %v3030 = vsel %vm2870, %v2822, %v2998
    %v3031 = vsel %vm2871, %v2825, %v2999
    %v3032 = vsel %vm2872, %v2827, %v3000
    %v3033 = vsel %vm2873, %v2830, %v3001
    %v3034 = vsel %vm2874, %v2832, %v3002
    %v3035 = vsel %vm2875, %v2835, %v3003
    %v3036 = vsel %vm2876, %v2837, %v3004
    %v3037 = vsel %vm2877, %v2840, %v3005
    %v3038 = vsel %vm2878, %v2842, %v3006
    %v3039 = vsel %vm2879, %v2845, %v3007
    %v3040 = vsel %vm2880, %v2847, %v3008
    %v3041 = vpack.c.bf16 %v3010, %v3009
    %v3042 = vpack.c.bf16 %v3012, %v3011
    %v3043 = vpack.c.bf16 %v3014, %v3013
    %v3044 = vpack.c.bf16 %v3016, %v3015
    %v3045 = vpack.c.bf16 %v3018, %v3017
    %v3046 = vpack.c.bf16 %v3020, %v3019
    %v3047 = vpack.c.bf16 %v3022, %v3021
    %v3048 = vpack.c.bf16 %v3024, %v3023
    %v3049 = vpack.c.bf16 %v3026, %v3025
    %v3050 = vpack.c.bf16 %v3028, %v3027
    %v3051 = vpack.c.bf16 %v3030, %v3029
    %v3052 = vpack.c.bf16 %v3032, %v3031
    %v3053 = vpack.c.bf16 %v3034, %v3033
    %v3054 = vpack.c.bf16 %v3036, %v3035
    %v3055 = vpack.c.bf16 %v3038, %v3037
    %v3056 = vpack.c.bf16 %v3040, %v3039
    %v3057 = vld [vmem:[#allocation10] sm:$0xf]
    %v3058 = vld [vmem:[#allocation10 + $0x4] sm:$0xf]
    %v3059 = vld [vmem:[#allocation10 + $0x8] sm:$0xf]
    %v3060 = vld [vmem:[#allocation10 + $0xc] sm:$0xf]
    %v3061 = vld [vmem:[#allocation10 + $0x10] sm:$0xf]
    %v3062 = vld [vmem:[#allocation10 + $0x14] sm:$0xf]
    %v3063 = vld [vmem:[#allocation10 + $0x18] sm:$0xf]
    %v3064 = vld [vmem:[#allocation10 + $0x1c] sm:$0xf]
    %v3065 = vld [vmem:[#allocation10 + $0x20] sm:$0xf]
    %v3066 = vld [vmem:[#allocation10 + $0x24] sm:$0xf]
    %v3067 = vld [vmem:[#allocation10 + $0x28] sm:$0xf]
    %v3068 = vld [vmem:[#allocation10 + $0x2c] sm:$0xf]
    %v3069 = vld [vmem:[#allocation10 + $0x30] sm:$0xf]
    %v3070 = vld [vmem:[#allocation10 + $0x34] sm:$0xf]
    %v3071 = vld [vmem:[#allocation10 + $0x38] sm:$0xf]
    %v3072 = vld [vmem:[#allocation10 + $0x3c] sm:$0xf]
    %v3073 = vld [vmem:[%s6] sm:$0x1]
    %v3075 = vperm.slane %v3073, 0
    %v3093 = vunpack.c.l.b16 %v3057
    %v3094 = vunpack.c.l.b16 %v3058
    %v3095 = vunpack.c.l.b16 %v3059
    %v3096 = vunpack.c.l.b16 %v3060
    %v3097 = vunpack.c.l.b16 %v3061
    %v3098 = vunpack.c.l.b16 %v3062
    %v3099 = vunpack.c.l.b16 %v3063
    %v3100 = vunpack.c.l.b16 %v3064
    %v3101 = vunpack.c.l.b16 %v3065
    %v3102 = vunpack.c.l.b16 %v3066
    %v3103 = vunpack.c.l.b16 %v3067
    %v3104 = vunpack.c.l.b16 %v3068
    %v3105 = vunpack.c.l.b16 %v3069
    %v3106 = vunpack.c.l.b16 %v3070
    %v3107 = vunpack.c.l.b16 %v3071
    %v3108 = vunpack.c.l.b16 %v3072
    %v3109 = vpack.c.b16 %v3094, %v3093
    %v3110 = vpack.c.b16 %v3096, %v3095
    %v3111 = vpack.c.b16 %v3098, %v3097
    %v3112 = vpack.c.b16 %v3100, %v3099
    %v3113 = vpack.c.b16 %v3102, %v3101
    %v3114 = vpack.c.b16 %v3104, %v3103
    %v3115 = vpack.c.b16 %v3106, %v3105
    %v3116 = vpack.c.b16 %v3108, %v3107
    %3125 = vmatpush.bf16.msra.mxu0 %v3116
    %3126 = vmatpush.bf16.msra.mxu0 %v3115
    %3127 = vmatpush.bf16.msra.mxu0 %v3114
    %3128 = vmatpush.bf16.msra.mxu0 %v3113
    %3129 = vmatpush.bf16.msra.mxu0 %v3112
    %3130 = vmatpush.bf16.msra.mxu0 %v3111
    %3131 = vmatpush.bf16.msra.mxu0 %v3110
    %3132 = vmatpush.bf16.msra.mxu0 %v3109
    %3133 = vmatmul.bf16.gmra.mxu0 %v3041
    %v3134 = vpop.f32.mrf.mxu0
    %v3135 = vadd.f32 %v3075, %v3134
    %v3136 = vpop.f32.mrf.mxu0
    %v3137 = vadd.f32 %v3075, %v3136
    %3138 = vmatmul.bf16.gmra.mxu0 %v3042
    %v3139 = vpop.f32.mrf.mxu0
    %v3140 = vadd.f32 %v3075, %v3139
    %v3141 = vpop.f32.mrf.mxu0
    %v3142 = vadd.f32 %v3075, %v3141
    %3143 = vmatmul.bf16.gmra.mxu0 %v3043
    %v3144 = vpop.f32.mrf.mxu0
    %v3145 = vadd.f32 %v3075, %v3144
    %v3146 = vpop.f32.mrf.mxu0
    %v3147 = vadd.f32 %v3075, %v3146
    %3148 = vmatmul.bf16.gmra.mxu0 %v3044
    %v3149 = vpop.f32.mrf.mxu0
    %v3150 = vadd.f32 %v3075, %v3149
    %v3151 = vpop.f32.mrf.mxu0
    %v3152 = vadd.f32 %v3075, %v3151
    %3153 = vmatmul.bf16.gmra.mxu0 %v3045
    %v3154 = vpop.f32.mrf.mxu0
    %v3155 = vadd.f32 %v3075, %v3154
    %v3156 = vpop.f32.mrf.mxu0
    %v3157 = vadd.f32 %v3075, %v3156
    %3158 = vmatmul.bf16.gmra.mxu0 %v3046
    %v3159 = vpop.f32.mrf.mxu0
    %v3160 = vadd.f32 %v3075, %v3159
    %v3161 = vpop.f32.mrf.mxu0
    %v3162 = vadd.f32 %v3075, %v3161
    %3163 = vmatmul.bf16.gmra.mxu0 %v3047
    %v3164 = vpop.f32.mrf.mxu0
    %v3165 = vadd.f32 %v3075, %v3164
    %v3166 = vpop.f32.mrf.mxu0
    %v3167 = vadd.f32 %v3075, %v3166
    %3168 = vmatmul.bf16.gmra.mxu0 %v3048
    %v3169 = vpop.f32.mrf.mxu0
    %v3170 = vadd.f32 %v3075, %v3169
    %v3171 = vpop.f32.mrf.mxu0
    %v3172 = vadd.f32 %v3075, %v3171
    %3173 = vmatmul.bf16.gmra.mxu0 %v3049
    %v3174 = vpop.f32.mrf.mxu0
    %v3175 = vadd.f32 %v3075, %v3174
    %v3176 = vpop.f32.mrf.mxu0
    %v3177 = vadd.f32 %v3075, %v3176
    %3178 = vmatmul.bf16.gmra.mxu0 %v3050
    %v3179 = vpop.f32.mrf.mxu0
    %v3180 = vadd.f32 %v3075, %v3179
    %v3181 = vpop.f32.mrf.mxu0
    %v3182 = vadd.f32 %v3075, %v3181
    %3183 = vmatmul.bf16.gmra.mxu0 %v3051
    %v3184 = vpop.f32.mrf.mxu0
    %v3185 = vadd.f32 %v3075, %v3184
    %v3186 = vpop.f32.mrf.mxu0
    %v3187 = vadd.f32 %v3075, %v3186
    %3188 = vmatmul.bf16.gmra.mxu0 %v3052
    %v3189 = vpop.f32.mrf.mxu0
    %v3190 = vadd.f32 %v3075, %v3189
    %v3191 = vpop.f32.mrf.mxu0
    %v3192 = vadd.f32 %v3075, %v3191
    %3193 = vmatmul.bf16.gmra.mxu0 %v3053
    %v3194 = vpop.f32.mrf.mxu0
    %v3195 = vadd.f32 %v3075, %v3194
    %v3196 = vpop.f32.mrf.mxu0
    %v3197 = vadd.f32 %v3075, %v3196
    %3198 = vmatmul.bf16.gmra.mxu0 %v3054
    %v3199 = vpop.f32.mrf.mxu0
    %v3200 = vadd.f32 %v3075, %v3199
    %v3201 = vpop.f32.mrf.mxu0
    %v3202 = vadd.f32 %v3075, %v3201
    %3203 = vmatmul.bf16.gmra.mxu0 %v3055
    %v3204 = vpop.f32.mrf.mxu0
    %v3205 = vadd.f32 %v3075, %v3204
    %v3206 = vpop.f32.mrf.mxu0
    %v3207 = vadd.f32 %v3075, %v3206
    %3208 = vmatmul.bf16.gmra.mxu0 %v3056
    %v3209 = vpop.f32.mrf.mxu0
    %v3210 = vadd.f32 %v3075, %v3209
    %v3211 = vpop.f32.mrf.mxu0
    %v3212 = vadd.f32 %v3075, %v3211
    %3213 = vdwg.mxu0
    %3214 = vst [vmem:[#allocation11] sm:$0xff] %v3135
    %3215 = vst [vmem:[#allocation11 + $0x8] sm:$0xff] %v3137
    %3216 = vst [vmem:[#allocation11 + $0x10] sm:$0xff] %v3140
    %3217 = vst [vmem:[#allocation11 + $0x18] sm:$0xff] %v3142
    %3218 = vst [vmem:[#allocation11 + $0x20] sm:$0xff] %v3145
    %3219 = vst [vmem:[#allocation11 + $0x28] sm:$0xff] %v3147
    %3220 = vst [vmem:[#allocation11 + $0x30] sm:$0xff] %v3150
    %3221 = vst [vmem:[#allocation11 + $0x38] sm:$0xff] %v3152
    %3222 = vst [vmem:[#allocation11 + $0x40] sm:$0xff] %v3155
    %3223 = vst [vmem:[#allocation11 + $0x48] sm:$0xff] %v3157
    %3224 = vst [vmem:[#allocation11 + $0x50] sm:$0xff] %v3160
    %3225 = vst [vmem:[#allocation11 + $0x58] sm:$0xff] %v3162
    %3226 = vst [vmem:[#allocation11 + $0x60] sm:$0xff] %v3165
    %3227 = vst [vmem:[#allocation11 + $0x68] sm:$0xff] %v3167
    %3228 = vst [vmem:[#allocation11 + $0x70] sm:$0xff] %v3170
    %3229 = vst [vmem:[#allocation11 + $0x78] sm:$0xff] %v3172
    %3230 = vst [vmem:[#allocation11 + $0x80] sm:$0xff] %v3175
    %3231 = vst [vmem:[#allocation11 + $0x88] sm:$0xff] %v3177
    %3232 = vst [vmem:[#allocation11 + $0x90] sm:$0xff] %v3180
    %3233 = vst [vmem:[#allocation11 + $0x98] sm:$0xff] %v3182
    %3234 = vst [vmem:[#allocation11 + $0xa0] sm:$0xff] %v3185
    %3235 = vst [vmem:[#allocation11 + $0xa8] sm:$0xff] %v3187
    %3236 = vst [vmem:[#allocation11 + $0xb0] sm:$0xff] %v3190
    %3237 = vst [vmem:[#allocation11 + $0xb8] sm:$0xff] %v3192
    %3238 = vst [vmem:[#allocation11 + $0xc0] sm:$0xff] %v3195
    %3239 = vst [vmem:[#allocation11 + $0xc8] sm:$0xff] %v3197
    %3240 = vst [vmem:[#allocation11 + $0xd0] sm:$0xff] %v3200
    %3241 = vst [vmem:[#allocation11 + $0xd8] sm:$0xff] %v3202
    %3242 = vst [vmem:[#allocation11 + $0xe0] sm:$0xff] %v3205
    %3243 = vst [vmem:[#allocation11 + $0xe8] sm:$0xff] %v3207
    %3244 = vst [vmem:[#allocation11 + $0xf0] sm:$0xff] %v3210
    %3245 = vst [vmem:[#allocation11 + $0xf8] sm:$0xff] %v3212
    // Predicated region
    $region50: #{tpu_custom_call.1} parent=1 // pred_check
      _
    $region51: #{tpu_custom_call.1} parent=1 // pred_check_branch
      %3247 = sbr.rel (0) target = $region53
    $region52: #{tpu_custom_call.1} parent=1 // pred_region
      %3249 = vsyncadd [#allocation4], 0
      %s3250 = sshll.u32 [#allocation11], 4
      %s3251 = int_to_ptr.vmem [resolvable:$true] %s3250
      %s3252 = sshll.u32 %s7, 4
      %s3253 = int_to_ptr.hbm [resolvable:$true] %s3252
      %3258 = dma.vmem_to_hbm [thread:$0]  %s3251, 4096, %s3253, [#allocation4], 128, 128, 8
    $region53: #{tpu_custom_call.1} parent=1 // pred_fallthru
      _
    // Predicated region
    $region54: #{tpu_custom_call.1} parent=1 // pred_check
      _
    $region55: #{tpu_custom_call.1} parent=1 // pred_check_branch
      %3260 = sbr.rel (0) target = $region57
    $region56: #{tpu_custom_call.1} parent=1 // pred_region
      %3262 = dma.done [#allocation4], 4096
    $region57: #{tpu_custom_call.1} parent=1 // pred_fallthru
      _
    %3263 = vsyncpa [#allocation3], 1
    %3264 = vsyncpa [#allocation6], 1
    %3265 = vsyncpa [#allocation9], 1
    %3266 = vsyncpa [#allocation4], 1

</llo_original>
